<compile_context>
chip_gen: v6e
topology: v6e:2x2x1
jax: 0.10.0
libtpu: 0.0.40
codegen_flags: <defaults>
</compile_context>

<pallas_src>
import math
from functools import partial

import jax
import jax.numpy as jnp
from jax.experimental import pallas as pl
from jax.experimental.pallas import tpu as pltpu


# --------------------------------------------------------------------------- kernel
def _periodic_embeddings_kernel(x_ref, w2pi_ref, wcos_ref, wsin_ref, bias_ref, o_ref, *,
                                use_bf16):
    # x_ref   : (TF, TB, 1)  x^T tile (feature-major)            -- streamed
    # w2pi_ref: (TF, 1, K)   2*pi*W_per tile                     -- streamed (tiny)
    # wcos_ref: (TF, K, D)   cos half of W_lin                   -- streamed, reused over batch
    # wsin_ref: (TF, K, D)   sin half of W_lin                   -- streamed, reused over batch
    # bias_ref: (TB, D)      bias block (torch quirk: indexed by batch position)
    # o_ref   : (TF, TB, D)
    phase = x_ref[...] * w2pi_ref[...]          # size-1 broadcasts -> (TF, TB, K); f32 on VPU
    cosp = jnp.cos(phase)                       # EUP
    sinp = jnp.sin(phase)                       # EUP
    wcos = wcos_ref[...]
    wsin = wsin_ref[...]
    if use_bf16:                                # opt-in: halves MXU operand bytes on v6e/v7x;
        cosp = cosp.astype(jnp.bfloat16)        # small accuracy tradeoff vs f32 reference
        sinp = sinp.astype(jnp.bfloat16)
        wcos = wcos.astype(jnp.bfloat16)
        wsin = wsin.astype(jnp.bfloat16)
    # Two batched MXU matmuls (feature tile = batch dim), f32 accumulate. No concat relayout.
    y = jnp.einsum("tbk,tkd->tbd", cosp, wcos, preferred_element_type=jnp.float32)
    y = y + jnp.einsum("tbk,tkd->tbd", sinp, wsin, preferred_element_type=jnp.float32)
    y = y + bias_ref[...]                       # (TF,TB,D) + (TB,D): torch broadcast quirk
    o_ref[...] = jnp.maximum(y, 0.0).astype(o_ref.dtype)


# --------------------------------------------------------------------------- helpers
def _round_up(v, m):
    return -(-v // m) * m


def _vmem_block_bytes(shape, itemsize=4):
    # VMEM tiles pad the last dim to 128 lanes and the second-to-last to 8 sublanes.
    s = list(shape)
    s[-1] = _round_up(s[-1], 128)
    if len(s) >= 2:
        s[-2] = _round_up(s[-2], 8)
    n = 1
    for d in s:
        n *= d
    return n * itemsize


def _vmem_need_bytes(tf, tb, k, d):
    # Pallas double-buffers EVERY BlockSpec operand (including constant-index ones).
    blocks = (_vmem_block_bytes((tf, tb, 1))        # x tile
              + _vmem_block_bytes((tf, 1, k))       # 2*pi*W_per tile
              + 2 * _vmem_block_bytes((tf, k, d))   # cos / sin halves of W_lin
              + _vmem_block_bytes((tb, d))          # bias
              + _vmem_block_bytes((tf, tb, d)))     # output tile
    temps = 4 * _vmem_block_bytes((tf, tb, k)) + 2 * _vmem_block_bytes((tf, tb, d))
    return 2 * blocks + temps


def _tpu_vmem_and_cores():
    """Best-effort (VMEM capacity, TensorCores/chip); safe fallback = v7x-like (64 MiB, 2 TC)."""
    vmem_cap = 64 << 20
    try:
        info = pltpu.get_tpu_info()
        cap = getattr(info, "vmem_capacity_bytes", None)
        if cap:
            vmem_cap = int(cap)
    except Exception:
        pass
    n_cores = 1 if vmem_cap >= (96 << 20) else 2   # 128 MiB VMEM chips (v5e/v6e) = 1 TC
    return vmem_cap, n_cores


def _pick_tiles(F, B, K, D, vmem_budget, n_cores):
    # Batch tile: largest divisor of B <= 256 compatible with the (8,128) layout rule
    # (TB % 128 == 0 or TB == B, so 2-D bias and 3-D x/out blocks are legal).
    tb_cands = [t for t in range(1, B + 1) if B % t == 0 and (t % 128 == 0 or t == B)]
    tb_ok = [t for t in tb_cands if t <= 256]
    TB = max(tb_ok) if tb_ok else min(tb_cands)

    # Feature tile: LARGEST divisor of F whose working set fits the VMEM budget
    # (G == 1 on single-TC v5e/v6e); keep >= n_cores grid steps on multi-TC chips (v7x).
    tf_cands = [t for t in range(1, F + 1) if F % t == 0 and (t % 8 == 0 or t == F)]
    fits = [t for t in tf_cands if _vmem_need_bytes(t, TB, K, D) <= vmem_budget]
    if not fits:
        fits = [min(tf_cands)]
    TF = max(fits)
    if n_cores >= 2 and (F // TF) * (B // TB) < n_cores:
        multi = [t for t in fits if (F // t) * (B // TB) >= n_cores]
        if multi:
            TF = max(multi)
    return TF, TB


# --------------------------------------------------------------------------- wrapper
def prepare_periodic_params(w_per, w_lin, b_lin):
    """One-time parameter preprocessing (hoisted out of the per-forward path)."""
    f32 = jnp.float32
    F, K = w_per.shape
    assert w_lin.shape[:2] == (F, 2 * K) and b_lin.shape[0] == F
    w2pi = ((2.0 * math.pi) * w_per.astype(f32)).reshape(F, 1, K)   # (F, 1, K)
    wcos = w_lin[:, :K, :].astype(f32)                              # (F, K, D)
    wsin = w_lin[:, K:, :].astype(f32)                              # (F, K, D)
    bias = b_lin.astype(f32)                                        # (F, D)
    return w2pi, wcos, wsin, bias


def periodic_embeddings(x, params, *, feature_tile=None, batch_tile=None,
                        use_bf16_matmul=False):
    """x: (B, F); params from prepare_periodic_params -> (F, B, D), matching the module."""
    w2pi, wcos, wsin, bias = params
    F, _, K = w2pi.shape
    D = wcos.shape[-1]
    B = x.shape[0]
    assert x.shape == (B, F)
    assert wcos.shape == (F, K, D) and wsin.shape == (F, K, D) and bias.shape == (F, D)
    # Literal torch broadcast of (F,B,D) + (F,D): bias indexed by batch position, needs B == F.
    # TODO(synk): if a per-feature bias was intended (rtdl library behaviour), index the bias
    # by the feature tile (block (TF, D), index_map lambda fi, bi: (fi, 0)) and drop this assert.
    assert B == F, "reference _NLinear bias broadcast requires batch == n_features"

    f32 = jnp.float32
    x3 = x.astype(f32).T.reshape(F, B, 1)       # tiny layout plumbing (no K-fold repeat)

    vmem_cap, n_cores = _tpu_vmem_and_cores()
    budget = (96 << 20) if vmem_cap >= (96 << 20) else (40 << 20)

    tf_auto, tb_auto = _pick_tiles(F, B, K, D, budget, n_cores)
    TF = feature_tile if feature_tile is not None else tf_auto
    TB = batch_tile if batch_tile is not None else tb_auto
    assert F % TF == 0 and (TF % 8 == 0 or TF == F)
    assert B % TB == 0 and (TB % 128 == 0 or TB == B)
    GF, GB = F // TF, B // TB

    need = _vmem_need_bytes(TF, TB, K, D)
    vmem_limit = int(min(budget, max(need + (4 << 20), 16 << 20)))

    cost = pl.CostEstimate(
        flops=2 * 2 * F * B * K * D,
        transcendentals=2 * F * B * K,
        bytes_accessed=4 * (x3.size + w2pi.size + wcos.size + wsin.size
                            + bias.size + F * B * D),
    )

    out = pl.pallas_call(
        partial(_periodic_embeddings_kernel, use_bf16=use_bf16_matmul),
        out_shape=jax.ShapeDtypeStruct((F, B, D), f32),
        grid_spec=pltpu.PrefetchScalarGridSpec(
            num_scalar_prefetch=0,
            grid=(GF, GB),                                            # batch innermost: weight
            in_specs=[                                                # blocks reused across it
                pl.BlockSpec((TF, TB, 1), lambda fi, bi: (fi, bi, 0)),  # x^T tile
                pl.BlockSpec((TF, 1, K),  lambda fi, bi: (fi, 0, 0)),   # 2*pi*W_per tile
                pl.BlockSpec((TF, K, D),  lambda fi, bi: (fi, 0, 0)),   # W_lin cos half
                pl.BlockSpec((TF, K, D),  lambda fi, bi: (fi, 0, 0)),   # W_lin sin half
                pl.BlockSpec((TB, D),     lambda fi, bi: (bi, 0)),      # bias (batch-indexed)
            ],
            out_specs=pl.BlockSpec((TF, TB, D), lambda fi, bi: (fi, bi, 0)),
        ),
        compiler_params=pltpu.CompilerParams(
            dimension_semantics=("parallel", "parallel"),
            vmem_limit_bytes=vmem_limit,
        ),
        cost_estimate=cost,
    )(x3, w2pi, wcos, wsin, bias)
    return out                                   # (F, B, D): the module's output layout


# --------------------------------------------------------------------------- reference
def periodic_embeddings_ref(x, w_per, w_lin, b_lin):
    """Pure-JAX reference mirroring the PyTorch code line by line."""
    phase = 2.0 * math.pi * w_per * x[..., None]                   # (B, F, K)
    pe = jnp.concatenate([jnp.cos(phase), jnp.sin(phase)], -1)     # (B, F, 2K)
    y = jnp.swapaxes(pe, 0, 1)                                     # (F, B, 2K)
    y = jnp.einsum("fbj,fjd->fbd", y, w_lin)                       # (F, B, D)
    y = y + b_lin                                                  # torch-style broadcast
    return jnp.maximum(y, 0.0)


if __name__ == "__main__":
    n_features = 16
    batch = 16                  # must equal n_features (bias broadcast quirk of the module)
    n_frequencies = 16
    d_embedding = 24
    frequency_init_scale = 0.01

    key = jax.random.PRNGKey(0)
    k_per, k_w, k_b, k_x = jax.random.split(key, 4)

    # _Periodic.reset_parameters: trunc_normal(0, sigma, +-3*sigma)
    w_per = frequency_init_scale * jax.random.truncated_normal(
        k_per, -3.0, 3.0, (n_features, n_frequencies), jnp.float32)

    # _NLinear.reset_parameters: uniform(+-(2K)^-0.5)
    d_in = 2 * n_frequencies
    bound = d_in ** (-0.5)
    w_lin = jax.random.uniform(
        k_w, (n_features, d_in, d_embedding), jnp.float32, -bound, bound)
    b_lin = jax.random.uniform(
        k_b, (n_features, d_embedding), jnp.float32, -bound, bound)

    x = jax.random.normal(k_x, (batch, n_features), jnp.float32)

    # Parameter prep done once ("at init"), not per forward.
    params = prepare_periodic_params(w_per, w_lin, b_lin)

    ref = jax.block_until_ready(periodic_embeddings_ref(x, w_per, w_lin, b_lin))

    # Default (auto-picked) tiles.
    out = jax.block_until_ready(periodic_embeddings(x, params))
    assert out.shape == (n_features, batch, d_embedding)
    assert jnp.allclose(out, ref, atol=1e-4, rtol=1e-4), "mismatch vs JAX reference"

    # Also exercise the multi-step feature grid (GF = 2) explicitly.
    out2 = jax.block_until_ready(periodic_embeddings(x, params, feature_tile=8))
    assert jnp.allclose(out2, ref, atol=1e-4, rtol=1e-4), "mismatch (feature_tile=8)"

    print("KERNEL_OK")
</pallas_src>

<mosaic_0001>
module attributes {stable_mosaic.version = 11 : i64} {
  func.func @_periodic_embeddings_kernel(%arg0: i32, %arg1: i32, %arg2: memref<8x16x1xf32, #tpu.memory_space<vmem>>, %arg3: memref<8x1x16xf32, #tpu.memory_space<vmem>>, %arg4: memref<8x16x24xf32, #tpu.memory_space<vmem>>, %arg5: memref<8x16x24xf32, #tpu.memory_space<vmem>>, %arg6: memref<16x24xf32, #tpu.memory_space<vmem>>, %arg7: memref<8x16x24xf32, #tpu.memory_space<vmem>>) attributes {dimension_semantics = [#tpu.dimension_semantics<parallel>, #tpu.dimension_semantics<parallel>], iteration_bounds = array<i64: 2, 1>, scalar_prefetch = 0 : i64, scratch_operands = 0 : i64, tpu.core_type = #tpu.core_type<tc>, window_params = [{transform_indices = @transform_0, window_bounds = array<i64: 8, 16, 1>}, {transform_indices = @transform_1, window_bounds = array<i64: 8, 1, 16>}, {transform_indices = @transform_2, window_bounds = array<i64: 8, 16, 24>}, {transform_indices = @transform_3, window_bounds = array<i64: 8, 16, 24>}, {transform_indices = @transform_4, window_bounds = array<i64: 16, 24>}, {transform_indices = @transform_5, window_bounds = array<i64: 8, 16, 24>}]} {
    %c0 = arith.constant 0 : index
    %c0_0 = arith.constant 0 : index
    %c0_1 = arith.constant 0 : index
    %0 = vector.load %arg2[%c0, %c0_0, %c0_1] : memref<8x16x1xf32, #tpu.memory_space<vmem>>, vector<8x16x1xf32>
    %c0_2 = arith.constant 0 : index
    %c0_3 = arith.constant 0 : index
    %c0_4 = arith.constant 0 : index
    %1 = vector.load %arg3[%c0_2, %c0_3, %c0_4] : memref<8x1x16xf32, #tpu.memory_space<vmem>>, vector<8x1x16xf32>
    %2 = vector.broadcast %0 : vector<8x16x1xf32> to vector<8x16x16xf32>
    %3 = vector.broadcast %1 : vector<8x1x16xf32> to vector<8x16x16xf32>
    %4 = arith.mulf %2, %3 : vector<8x16x16xf32>
    %5 = math.cos %4 : vector<8x16x16xf32>
    %6 = math.sin %4 : vector<8x16x16xf32>
    %c0_5 = arith.constant 0 : index
    %c0_6 = arith.constant 0 : index
    %c0_7 = arith.constant 0 : index
    %7 = vector.load %arg4[%c0_5, %c0_6, %c0_7] : memref<8x16x24xf32, #tpu.memory_space<vmem>>, vector<8x16x24xf32>
    %c0_8 = arith.constant 0 : index
    %c0_9 = arith.constant 0 : index
    %c0_10 = arith.constant 0 : index
    %8 = vector.load %arg5[%c0_8, %c0_9, %c0_10] : memref<8x16x24xf32, #tpu.memory_space<vmem>>, vector<8x16x24xf32>
    "tpu.trace_start"() <{level = 10 : i32, message = "tbk,tkd->tbd"}> : () -> ()
    %cst = arith.constant dense<0.000000e+00> : vector<8x16x24xf32>
    %9 = tpu.matmul %5, %7, %cst {dimension_numbers = #tpu.dot_dimension_numbers<[2], [1], [1], [2], [0, 0, 0, 1, 1, 2], [0], [0]>} : vector<8x16x16xf32>, vector<8x16x24xf32>, vector<8x16x24xf32> -> vector<8x16x24xf32>
    %cst_11 = arith.constant dense<0.000000e+00> : vector<8x16x24xf32>
    %10 = tpu.matmul %6, %8, %cst_11 {dimension_numbers = #tpu.dot_dimension_numbers<[2], [1], [1], [2], [0, 0, 0, 1, 1, 2], [0], [0]>} : vector<8x16x16xf32>, vector<8x16x24xf32>, vector<8x16x24xf32> -> vector<8x16x24xf32>
    "tpu.trace_stop"() : () -> ()
    %11 = arith.addf %9, %10 : vector<8x16x24xf32>
    %c0_12 = arith.constant 0 : index
    %c0_13 = arith.constant 0 : index
    %12 = vector.load %arg6[%c0_12, %c0_13] : memref<16x24xf32, #tpu.memory_space<vmem>>, vector<16x24xf32>
    %13 = vector.shape_cast %12 : vector<16x24xf32> to vector<1x16x24xf32>
    %14 = vector.broadcast %13 : vector<1x16x24xf32> to vector<8x16x24xf32>
    %15 = arith.addf %11, %14 : vector<8x16x24xf32>
    %cst_14 = arith.constant 0.000000e+00 : f32
    %16 = vector.broadcast %cst_14 : f32 to vector<8x16x24xf32>
    %17 = arith.maximumf %15, %16 : vector<8x16x24xf32>
    %c0_15 = arith.constant 0 : index
    %c0_16 = arith.constant 0 : index
    %c0_17 = arith.constant 0 : index
    %18 = vector.load %arg7[%c0_15, %c0_16, %c0_17] : memref<8x16x24xf32, #tpu.memory_space<vmem>>, vector<8x16x24xf32>
    tpu.vector_store %arg7[%c0_15, %c0_16, %c0_17], %17 {strides = array<i32>} : memref<8x16x24xf32, #tpu.memory_space<vmem>>, vector<8x16x24xf32>,
    return
  }
  func.func @transform_0(%arg0: i32, %arg1: i32) -> (i32, i32, i32) {
    %c0_i32 = arith.constant 0 : i32
    %c0_i32_0 = arith.constant 0 : i32
    return %arg0, %arg1, %c0_i32 : i32, i32, i32
  }
  func.func @transform_1(%arg0: i32, %arg1: i32) -> (i32, i32, i32) {
    %c0_i32 = arith.constant 0 : i32
    %c0_i32_0 = arith.constant 0 : i32
    %c0_i32_1 = arith.constant 0 : i32
    return %arg0, %c0_i32, %c0_i32_0 : i32, i32, i32
  }
  func.func @transform_2(%arg0: i32, %arg1: i32) -> (i32, i32, i32) {
    %c0_i32 = arith.constant 0 : i32
    %c0_i32_0 = arith.constant 0 : i32
    %c0_i32_1 = arith.constant 0 : i32
    return %arg0, %c0_i32, %c0_i32_0 : i32, i32, i32
  }
  func.func @transform_3(%arg0: i32, %arg1: i32) -> (i32, i32, i32) {
    %c0_i32 = arith.constant 0 : i32
    %c0_i32_0 = arith.constant 0 : i32
    %c0_i32_1 = arith.constant 0 : i32
    return %arg0, %c0_i32, %c0_i32_0 : i32, i32, i32
  }
  func.func @transform_4(%arg0: i32, %arg1: i32) -> (i32, i32) {
    %c0_i32 = arith.constant 0 : i32
    %c0_i32_0 = arith.constant 0 : i32
    return %arg1, %c0_i32 : i32, i32
  }
  func.func @transform_5(%arg0: i32, %arg1: i32) -> (i32, i32, i32) {
    %c0_i32 = arith.constant 0 : i32
    %c0_i32_0 = arith.constant 0 : i32
    return %arg0, %arg1, %c0_i32 : i32, i32, i32
  }
}

</mosaic_0001>

<llo_original>
// kernel: tpu_custom_call.1
$region0: #{tpu_custom_call.1}
  #allocation0 [shape = 'u32[]', space=smem, size = 0x4, offset = 0x4, fixed_abs, tag = 'smem constant byte address 0x4 - core index']
  #allocation1 [shape = 'u32[144,128]{1,0:T(1,128)}', space=vmem, size = 0x12000, scoped, tag = 'internal scratch']
  %s0 = inlined_call_operand.vmem [shape: f32[16,16,1], index: 0, kind: input, shape index: {}]
  %s1 = inlined_call_operand.vmem [shape: f32[16,1,16], index: 1, kind: input, shape index: {}]
  %s2 = inlined_call_operand.vmem [shape: f32[16,16,24], index: 2, kind: input, shape index: {}]
  %s3 = inlined_call_operand.hbm [shape: f32[16,16,24], index: 3, kind: input, shape index: {}]
  %s4 = inlined_call_operand.hbm [shape: f32[16,24], index: 4, kind: input, shape index: {}]
  %s5 = inlined_call_operand.hbm [shape: f32[16,16,24], index: 5, kind: output, shape index: {}]
  %s6 = sld [smem:[#allocation0]]
  $region61: #{tpu_custom_call.1} parent=0
    _
  %s8 = ssub.s32 1, %s6
  %s9 = scalar_select 0, %s8, %s6
  $region1: #{tpu_custom_call.1} parent=0
    #allocation2 [shape = 'u8[131072]{0}', space=vmem, size = 0x20000, scoped, tag = 'input window, operand 3']
    #allocation3 [shape = 's32[2]{0}', space=sflag, size = 0x8, scoped, tag = 'scoped memory for tpu_custom_call.1']
    #allocation4 [shape = 's32[2]{0}', space=sflag, size = 0x8, scoped, tag = 'scoped memory for tpu_custom_call.1']
    #allocation5 [shape = 'u8[8192]{0}', space=vmem, size = 0x2000, scoped, tag = 'input window, operand 4, single buffered']
    #allocation6 [shape = 's32[1]{0}', space=sflag, size = 0x4, scoped, tag = 'scoped memory for tpu_custom_call.1']
    #allocation7 [shape = 'u8[131072]{0}', space=vmem, size = 0x20000, scoped, tag = 'output window, operand 0']
    %10 = vsyncpa [#allocation3], 0
    %s11 = scalar_lea.sflag [#allocation3], 1
    %12 = vsyncpa %s11, 0
    %13 = vsyncpa [#allocation6], 0
    %14 = vsyncpa [#allocation4], 0
    %s15 = scalar_lea.sflag [#allocation4], 1
    %16 = vsyncpa %s15, 0
    loop: start=0, step=1, limit=4
    $region2: #{tpu_custom_call.1} parent=1 // loop_pre_header
      _
    $region3: #{tpu_custom_call.1} parent=1 // loop_header
      %s18 = sphi 0, %s22
      %p19 = scmp.ge.s32.totalorder %s18, 4
      %s25 = sphi 0, %s37
      %s26 = sphi 0, %s33
      %s27 = sphi 0, %s25
      %s28 = sphi 0, %s26
      %s29 = sphi 0, %s27
      %s30 = sphi 0, %s28
      %s42 = sphi 0, %s44
      %s45 = sphi 0, %s42
      %s46 = sphi 0, %s45
      %s62 = sphi 0, %s46
      %s68 = sphi 0, %s70
      %s71 = sphi 0, %s68
      %s72 = sphi 0, %s71
      %s88 = sphi 0, %s72
      %s94 = sphi 0, %s96
      %s97 = sphi 0, %s94
      %s98 = sphi 0, %s97
      %s114 = sphi 0, %s98
      %s120 = sphi 0, %s122
      %s123 = sphi 0, %s120
      %s124 = sphi 0, %s123
      %s140 = sphi 0, %s124
      %s146 = sphi 0, %s148
      %s149 = sphi 0, %s146
      %s150 = sphi 0, %s149
      %s166 = sphi 0, %s150
      %s174 = sphi 0, %s176
      %s177 = sphi 0, %s174
      %s178 = sphi 0, %s177
      %s194 = sphi 0, %s178
    $region4: #{tpu_custom_call.1} parent=1 // loop_header_branch
      %21 = sbr.rel (%p19) target = $region8
    $region5: #{tpu_custom_call.1} parent=1 // loop_body
      %s23 = ssub.s32 %s18, 1
      %s24 = ssub.s32 %s18, 2
      %s31 = sadd.s32 1, %s26
      %p32 = scmp.ge.s32.totalorder %s31, 1
      %s33 = scalar_select %p32, 0, %s31
      %s34 = sadd.s32 1, %s25
      %s35 = scalar_select %p32, %s34, %s25
      %p36 = scmp.ge.s32.totalorder %s35, 2
      %s37 = scalar_select %p36, 0, %s35
      %s38 = ssub.s32 %s25, %s37
      %s39 = ssub.s32 %s26, %s33
      %s40 = sor.u32 %s38, %s39
      %p41 = scmp.eq.s32.totalorder %s40, 0
      %s43 = sadd.s32 %s42, 1
      %s44 = scalar_select %p41, %s42, %s43
      %p47 = pneg %p41
      %p48 = scmp.eq.s32.totalorder %s18, 1
      %p49 = por %p47, %p48
      %p50 = scmp.ne.s32.totalorder %s42, %s45
      %p51 = scmp.eq.s32.totalorder %s18, 0
      %p52 = por %p50, %p51
      %p53 = scmp.ne.s32.totalorder %s42, %s45
      %p54 = scmp.eq.s32.totalorder %s23, 1
      %p55 = por %p53, %p54
      %p56 = scmp.ne.s32.totalorder %s45, %s46
      %p57 = scmp.eq.s32.totalorder %s23, 0
      %p58 = por %p56, %p57
      %p59 = scmp.ne.s32.totalorder %s45, %s46
      %p60 = scmp.eq.s32.totalorder %s24, 1
      %p61 = por %p59, %p60
      %p63 = scmp.ne.s32.totalorder %s46, %s62
      %p64 = scmp.eq.s32.totalorder %s24, 0
      %p65 = por %p63, %p64
      %s66 = ssub.s32 %s25, %s37
      %p67 = scmp.eq.s32.totalorder %s66, 0
      %s69 = sadd.s32 %s68, 1
      %s70 = scalar_select %p67, %s68, %s69
      %p73 = pneg %p67
      %p74 = scmp.eq.s32.totalorder %s18, 1
      %p75 = por %p73, %p74
      %p76 = scmp.ne.s32.totalorder %s68, %s71
      %p77 = scmp.eq.s32.totalorder %s18, 0
      %p78 = por %p76, %p77
      %p79 = scmp.ne.s32.totalorder %s68, %s71
      %p80 = scmp.eq.s32.totalorder %s23, 1
      %p81 = por %p79, %p80
      %p82 = scmp.ne.s32.totalorder %s71, %s72
      %p83 = scmp.eq.s32.totalorder %s23, 0
      %p84 = por %p82, %p83
      %p85 = scmp.ne.s32.totalorder %s71, %s72
      %p86 = scmp.eq.s32.totalorder %s24, 1
      %p87 = por %p85, %p86
      %p89 = scmp.ne.s32.totalorder %s72, %s88
      %p90 = scmp.eq.s32.totalorder %s24, 0
      %p91 = por %p89, %p90
      %s92 = ssub.s32 %s25, %s37
      %p93 = scmp.eq.s32.totalorder %s92, 0
      %s95 = sadd.s32 %s94, 1
      %s96 = scalar_select %p93, %s94, %s95
      %p99 = pneg %p93
      %p100 = scmp.eq.s32.totalorder %s18, 1
      %p101 = por %p99, %p100
      %p102 = scmp.ne.s32.totalorder %s94, %s97
      %p103 = scmp.eq.s32.totalorder %s18, 0
      %p104 = por %p102, %p103
      %p105 = scmp.ne.s32.totalorder %s94, %s97
      %p106 = scmp.eq.s32.totalorder %s23, 1
      %p107 = por %p105, %p106
      %p108 = scmp.ne.s32.totalorder %s97, %s98
      %p109 = scmp.eq.s32.totalorder %s23, 0
      %p110 = por %p108, %p109
      %p111 = scmp.ne.s32.totalorder %s97, %s98
      %p112 = scmp.eq.s32.totalorder %s24, 1
      %p113 = por %p111, %p112
      %p115 = scmp.ne.s32.totalorder %s98, %s114
      %p116 = scmp.eq.s32.totalorder %s24, 0
      %p117 = por %p115, %p116
      %s118 = ssub.s32 %s25, %s37
      %p119 = scmp.eq.s32.totalorder %s118, 0
      %s121 = sadd.s32 %s120, 1
      %s122 = scalar_select %p119, %s120, %s121
      %p125 = pneg %p119
      %p126 = scmp.eq.s32.totalorder %s18, 1
      %p127 = por %p125, %p126
      %p128 = scmp.ne.s32.totalorder %s120, %s123
      %p129 = scmp.eq.s32.totalorder %s18, 0
      %p130 = por %p128, %p129
      %p131 = scmp.ne.s32.totalorder %s120, %s123
      %p132 = scmp.eq.s32.totalorder %s23, 1
      %p133 = por %p131, %p132
      %p134 = scmp.ne.s32.totalorder %s123, %s124
      %p135 = scmp.eq.s32.totalorder %s23, 0
      %p136 = por %p134, %p135
      %p137 = scmp.ne.s32.totalorder %s123, %s124
      %p138 = scmp.eq.s32.totalorder %s24, 1
      %p139 = por %p137, %p138
      %p141 = scmp.ne.s32.totalorder %s124, %s140
      %p142 = scmp.eq.s32.totalorder %s24, 0
      %p143 = por %p141, %p142
      %s144 = ssub.s32 %s26, %s33
      %p145 = scmp.eq.s32.totalorder %s144, 0
      %s147 = sadd.s32 %s146, 1
      %s148 = scalar_select %p145, %s146, %s147
      %p151 = pneg %p145
      %p152 = scmp.eq.s32.totalorder %s18, 1
      %p153 = por %p151, %p152
      %p154 = scmp.ne.s32.totalorder %s146, %s149
      %p155 = scmp.eq.s32.totalorder %s18, 0
      %p156 = por %p154, %p155
      %p157 = scmp.ne.s32.totalorder %s146, %s149
      %p158 = scmp.eq.s32.totalorder %s23, 1
      %p159 = por %p157, %p158
      %p160 = scmp.ne.s32.totalorder %s149, %s150
      %p161 = scmp.eq.s32.totalorder %s23, 0
      %p162 = por %p160, %p161
      %p163 = scmp.ne.s32.totalorder %s149, %s150
      %p164 = scmp.eq.s32.totalorder %s24, 1
      %p165 = por %p163, %p164
      %p167 = scmp.ne.s32.totalorder %s150, %s166
      %p168 = scmp.eq.s32.totalorder %s24, 0
      %p169 = por %p167, %p168
      %s170 = ssub.s32 %s25, %s37
      %s171 = ssub.s32 %s26, %s33
      %s172 = sor.u32 %s170, %s171
      %p173 = scmp.eq.s32.totalorder %s172, 0
      %s175 = sadd.s32 %s174, 1
      %s176 = scalar_select %p173, %s174, %s175
      %p179 = pneg %p173
      %p180 = scmp.eq.s32.totalorder %s18, 1
      %p181 = por %p179, %p180
      %p182 = scmp.ne.s32.totalorder %s174, %s177
      %p183 = scmp.eq.s32.totalorder %s18, 0
      %p184 = por %p182, %p183
      %p185 = scmp.ne.s32.totalorder %s174, %s177
      %p186 = scmp.eq.s32.totalorder %s23, 1
      %p187 = por %p185, %p186
      %p188 = scmp.ne.s32.totalorder %s177, %s178
      %p189 = scmp.eq.s32.totalorder %s23, 0
      %p190 = por %p188, %p189
      %p191 = scmp.ne.s32.totalorder %s177, %s178
      %p192 = scmp.eq.s32.totalorder %s24, 1
      %p193 = por %p191, %p192
      %p195 = scmp.ne.s32.totalorder %s178, %s194
      %p196 = scmp.eq.s32.totalorder %s24, 0
      %p197 = por %p195, %p196
      %p198 = scmp.le.s32.totalorder 1, %s18
      %p199 = scmp.lt.s32.totalorder %s18, 3
      %p200 = pnand %p198, %p199
      %p201 = pneg %p200
      // Predicated region
      $region9: #{tpu_custom_call.1} parent=5 // pred_check
        _
      $region10: #{tpu_custom_call.1} parent=5 // pred_check_branch
        %203 = sbr.rel (%p200) target = $region12
      $region11: #{tpu_custom_call.1} parent=5 // pred_region
        %s204 = ssub.s32 %s18, 1
        // Predicated region
        $region13: #{tpu_custom_call.1} parent=11 // pred_check
          %p205 = pneg %p162
        $region14: #{tpu_custom_call.1} parent=11 // pred_check_branch
          %207 = sbr.rel (%p205) target = $region16
        $region15: #{tpu_custom_call.1} parent=11 // pred_region
          %s208 = smul.u32 2, %s28
          %s210 = ssub.s32 256, 256
          %211 = vsyncadd [#allocation6], %s210
          %s212 = smul.addr %s208, 128
          %s213 = scalar_lea.hbm %s4, %s212
          %s214 = sshll.u32 [#allocation5], 4
          %s215 = int_to_ptr.vmem [resolvable:$true] %s214
          %220 = dma.hbm_to_vmem [thread:$0]  %s213, 256, %s215, [#allocation6], 128, 128, 8
        $region16: #{tpu_custom_call.1} parent=11 // pred_fallthru
          _
      $region12: #{tpu_custom_call.1} parent=5 // pred_fallthru
        _
      %p221 = scmp.lt.s32.totalorder %s18, 2
      // Predicated region
      $region17: #{tpu_custom_call.1} parent=5 // pred_check
        %p222 = pneg %p221
      $region18: #{tpu_custom_call.1} parent=5 // pred_check_branch
        %224 = sbr.rel (%p222) target = $region20
      $region19: #{tpu_custom_call.1} parent=5 // pred_region
        // Predicated region
        $region21: #{tpu_custom_call.1} parent=19 // pred_check
          %p225 = pneg %p52
        $region22: #{tpu_custom_call.1} parent=19 // pred_check_branch
          %227 = sbr.rel (%p225) target = $region24
        $region23: #{tpu_custom_call.1} parent=19 // pred_region
          %s228 = smul.u32 8, %s25
          %s229 = smul.u32 2, %s26
          %p230 = scmp.lt.s32.totalorder %s228, 15
          %s231 = scalar_select %p230, %s228, 15
          %p232 = scmp.lt.s32.totalorder %s229, 1
          %s233 = scalar_select %p232, %s229, 1
          %s234 = smul.addr %s231, 2
          %s235 = sadd.s32 %s233, %s234
          %s236 = smul.addr %s235, 8
          %s237 = scalar_lea.vmem %s0, %s236
          %s238 = smul.u32 8, %s25
          %s239 = smul.u32 2, %s26
        $region24: #{tpu_custom_call.1} parent=19 // pred_fallthru
          _
        // Predicated region
        $region25: #{tpu_custom_call.1} parent=19 // pred_check
          %p240 = pneg %p78
        $region26: #{tpu_custom_call.1} parent=19 // pred_check_branch
          %242 = sbr.rel (%p240) target = $region28
        $region27: #{tpu_custom_call.1} parent=19 // pred_region
          %s243 = smul.u32 8, %s25
          %p244 = scmp.lt.s32.totalorder %s243, 15
          %s245 = scalar_select %p244, %s243, 15
          %s246 = scalar_lea.vmem %s1, %s245
          %s247 = smul.u32 8, %s25
        $region28: #{tpu_custom_call.1} parent=19 // pred_fallthru
          _
        // Predicated region
        $region29: #{tpu_custom_call.1} parent=19 // pred_check
          %p248 = pneg %p104
        $region30: #{tpu_custom_call.1} parent=19 // pred_check_branch
          %250 = sbr.rel (%p248) target = $region32
        $region31: #{tpu_custom_call.1} parent=19 // pred_region
          %s251 = smul.u32 8, %s25
          %p252 = scmp.lt.s32.totalorder %s251, 15
          %s253 = scalar_select %p252, %s251, 15
          %s254 = smul.addr %s253, 2
          %s255 = smul.addr %s254, 8
          %s256 = scalar_lea.vmem %s2, %s255
          %s257 = smul.u32 8, %s25
        $region32: #{tpu_custom_call.1} parent=19 // pred_fallthru
          _
        // Predicated region
        $region33: #{tpu_custom_call.1} parent=19 // pred_check
          %p258 = pneg %p130
        $region34: #{tpu_custom_call.1} parent=19 // pred_check_branch
          %260 = sbr.rel (%p258) target = $region36
        $region35: #{tpu_custom_call.1} parent=19 // pred_region
          %s261 = sand.u32 %s120, 1
          %s262 = scalar_lea.sflag [#allocation3], %s261
          %s263 = sand.u32 %s120, 1
          %s264 = smul.addr %s263, 128
          %s265 = scalar_lea.vmem [#allocation2], %s264
          %s266 = smul.u32 8, %s25
          %s268 = ssub.s32 2048, 2048
          %269 = vsyncadd %s262, %s268
          %s270 = smul.addr %s266, 2
          %s271 = smul.addr %s270, 128
          %s272 = scalar_lea.hbm %s3, %s271
          %s273 = sshll.u32 %s265, 4
          %s274 = int_to_ptr.vmem [resolvable:$true] %s273
          %279 = dma.hbm_to_vmem [thread:$0]  %s272, 2048, %s274, %s262, 128, 128, 8
        $region36: #{tpu_custom_call.1} parent=19 // pred_fallthru
          _
      $region20: #{tpu_custom_call.1} parent=5 // pred_fallthru
        _
      %p280 = scmp.le.s32.totalorder 1, %s18
      %p281 = scmp.lt.s32.totalorder %s18, 3
      %p282 = pnand %p280, %p281
      %p283 = pneg %p282
      // Predicated region
      $region37: #{tpu_custom_call.1} parent=5 // pred_check
        _
      $region38: #{tpu_custom_call.1} parent=5 // pred_check_branch
        %285 = sbr.rel (%p282) target = $region40
      $region39: #{tpu_custom_call.1} parent=5 // pred_region
        %s286 = ssub.s32 %s18, 1
        %s287 = sand.u32 %s123, 1
        %s288 = scalar_lea.sflag [#allocation3], %s287
        %s289 = sand.u32 %s123, 1
        %s290 = smul.addr %s289, 128
        %s291 = scalar_lea.vmem [#allocation2], %s290
        // Predicated region
        $region41: #{tpu_custom_call.1} parent=39 // pred_check
          %p292 = pneg %p136
        $region42: #{tpu_custom_call.1} parent=39 // pred_check_branch
          %294 = sbr.rel (%p292) target = $region44
        $region43: #{tpu_custom_call.1} parent=39 // pred_region
          %295 = dma.done %s288, 2048
        $region44: #{tpu_custom_call.1} parent=39 // pred_fallthru
          _
        // Predicated region
        $region45: #{tpu_custom_call.1} parent=39 // pred_check
          %p296 = pneg %p162
        $region46: #{tpu_custom_call.1} parent=39 // pred_check_branch
          %298 = sbr.rel (%p296) target = $region48
        $region47: #{tpu_custom_call.1} parent=39 // pred_region
          %299 = dma.done [#allocation6], 256
        $region48: #{tpu_custom_call.1} parent=39 // pred_fallthru
          _
        %s300 = smul.u32 8, %s27
        %s301 = smul.u32 2, %s28
        %p302 = scmp.lt.s32.totalorder %s300, 15
        %s303 = scalar_select %p302, %s300, 15
        %p304 = scmp.lt.s32.totalorder %s301, 1
        %s305 = scalar_select %p304, %s301, 1
        %s306 = smul.addr %s303, 2
        %s307 = sadd.s32 %s305, %s306
        %s308 = smul.addr %s307, 8
        %s309 = scalar_lea.vmem %s0, %s308
        %p310 = pneg %p58
        %p311 = pneg %p55
        %s312 = smul.u32 8, %s27
        %p313 = scmp.lt.s32.totalorder %s312, 15
        %s314 = scalar_select %p313, %s312, 15
        %s315 = scalar_lea.vmem %s1, %s314
        %p316 = pneg %p84
        %p317 = pneg %p81
        %s318 = smul.u32 8, %s27
        %p319 = scmp.lt.s32.totalorder %s318, 15
        %s320 = scalar_select %p319, %s318, 15
        %s321 = smul.addr %s320, 2
        %s322 = smul.addr %s321, 8
        %s323 = scalar_lea.vmem %s2, %s322
        %p324 = pneg %p110
        %p325 = pneg %p107
        %s326 = sand.u32 %s123, 1
        %s327 = scalar_lea.sflag [#allocation3], %s326
        %s328 = sand.u32 %s123, 1
        %s329 = smul.addr %s328, 128
        %s330 = scalar_lea.vmem [#allocation2], %s329
        %p331 = pneg %p136
        %p332 = pneg %p133
        %p333 = pneg %p162
        %p334 = pneg %p159
        %p335 = pneg %p190
        %p336 = pneg %p187
        %s337 = sand.u32 %s177, 1
        %s338 = scalar_lea.sflag [#allocation4], %s337
        %s339 = sand.u32 %s177, 1
        %s340 = smul.addr %s339, 128
        %s341 = scalar_lea.vmem [#allocation7], %s340
        %s342 = smul.u32 8, %s27
        %s343 = smul.u32 2, %s28
        %p344 = scmp.lt.s32.totalorder %s342, 15
        %s345 = scalar_select %p344, %s342, 15
        %p346 = scmp.lt.s32.totalorder %s343, 1
        %s347 = scalar_select %p346, %s343, 1
        %s348 = smul.addr %s345, 2
        %s349 = sadd.s32 %s347, %s348
        %s350 = smul.addr %s349, 8
        %s351 = scalar_lea.vmem %s0, %s350
        %s352 = smul.u32 8, %s27
        %s353 = smul.u32 2, %s28
        %s354 = smul.u32 8, %s27
        %p355 = scmp.lt.s32.totalorder %s354, 15
        %s356 = scalar_select %p355, %s354, 15
        %s357 = scalar_lea.vmem %s1, %s356
        %s358 = smul.u32 8, %s27
        %s359 = smul.u32 8, %s27
        %p360 = scmp.lt.s32.totalorder %s359, 15
        %s361 = scalar_select %p360, %s359, 15
        %s362 = smul.addr %s361, 2
        %s363 = smul.addr %s362, 8
        %s364 = scalar_lea.vmem %s2, %s363
        %s365 = smul.u32 8, %s27
        %s366 = smul.u32 8, %s27
        %s367 = smul.u32 2, %s28
        %s368 = smul.u32 8, %s27
        %s369 = smul.u32 2, %s28
        %v370 = vld [vmem:[%s351] sm:$0xff]
        %v371 = vld [vmem:[%s351 + $0x8] sm:$0xff]
        %v372 = vld [vmem:[%s351 + $0x10] sm:$0xff]
        %v373 = vld [vmem:[%s351 + $0x18] sm:$0xff]
        %v374 = vld [vmem:[%s351 + $0x20] sm:$0xff]
        %v375 = vld [vmem:[%s351 + $0x28] sm:$0xff]
        %v376 = vld [vmem:[%s351 + $0x30] sm:$0xff]
        %v377 = vld [vmem:[%s351 + $0x38] sm:$0xff]
        %v378 = vld [vmem:[%s351 + $0x40] sm:$0xff]
        %v379 = vld [vmem:[%s351 + $0x48] sm:$0xff]
        %v380 = vld [vmem:[%s351 + $0x50] sm:$0xff]
        %v381 = vld [vmem:[%s351 + $0x58] sm:$0xff]
        %v382 = vld [vmem:[%s351 + $0x60] sm:$0xff]
        %v383 = vld [vmem:[%s351 + $0x68] sm:$0xff]
        %v384 = vld [vmem:[%s351 + $0x70] sm:$0xff]
        %v385 = vld [vmem:[%s351 + $0x78] sm:$0xff]
        %v386 = vld [vmem:[%s357] sm:$0x1]
        %v387 = vld [vmem:[%s357 + $0x1] sm:$0x1]
        %v388 = vld [vmem:[%s357 + $0x2] sm:$0x1]
        %v389 = vld [vmem:[%s357 + $0x3] sm:$0x1]
        %v390 = vld [vmem:[%s357 + $0x4] sm:$0x1]
        %v391 = vld [vmem:[%s357 + $0x5] sm:$0x1]
        %v392 = vld [vmem:[%s357 + $0x6] sm:$0x1]
        %v393 = vld [vmem:[%s357 + $0x7] sm:$0x1]
        %395 = vset.pattern.permute.xlu0 0
        %396 = vperm.xlu0 %395, %v370
        %v397 = vpop.permute.xlu0 %396
        %400 = vset.pattern.permute.xlu0 0
        %401 = vperm.xlu0 %400, %v371
        %v402 = vpop.permute.xlu0 %401
        %405 = vset.pattern.permute.xlu0 0
        %406 = vperm.xlu0 %405, %v372
        %v407 = vpop.permute.xlu0 %406
        %410 = vset.pattern.permute.xlu0 0
        %411 = vperm.xlu0 %410, %v373
        %v412 = vpop.permute.xlu0 %411
        %415 = vset.pattern.permute.xlu0 0
        %416 = vperm.xlu0 %415, %v374
        %v417 = vpop.permute.xlu0 %416
        %420 = vset.pattern.permute.xlu0 0
        %421 = vperm.xlu0 %420, %v375
        %v422 = vpop.permute.xlu0 %421
        %425 = vset.pattern.permute.xlu0 0
        %426 = vperm.xlu0 %425, %v376
        %v427 = vpop.permute.xlu0 %426
        %430 = vset.pattern.permute.xlu0 0
        %431 = vperm.xlu0 %430, %v377
        %v432 = vpop.permute.xlu0 %431
        %435 = vset.pattern.permute.xlu0 0
        %436 = vperm.xlu0 %435, %v378
        %v437 = vpop.permute.xlu0 %436
        %440 = vset.pattern.permute.xlu0 0
        %441 = vperm.xlu0 %440, %v379
        %v442 = vpop.permute.xlu0 %441
        %445 = vset.pattern.permute.xlu0 0
        %446 = vperm.xlu0 %445, %v380
        %v447 = vpop.permute.xlu0 %446
        %450 = vset.pattern.permute.xlu0 0
        %451 = vperm.xlu0 %450, %v381
        %v452 = vpop.permute.xlu0 %451
        %455 = vset.pattern.permute.xlu0 0
        %456 = vperm.xlu0 %455, %v382
        %v457 = vpop.permute.xlu0 %456
        %460 = vset.pattern.permute.xlu0 0
        %461 = vperm.xlu0 %460, %v383
        %v462 = vpop.permute.xlu0 %461
        %465 = vset.pattern.permute.xlu0 0
        %466 = vperm.xlu0 %465, %v384
        %v467 = vpop.permute.xlu0 %466
        %470 = vset.pattern.permute.xlu0 0
        %471 = vperm.xlu0 %470, %v385
        %v472 = vpop.permute.xlu0 %471
        %v482 = vlaneseq
        %v483 = vshrl.u32 %v482, 7
        %v484 = vsub.s32 0, %v483
        %v485 = vrot.slane %v386, %v484
        %v486 = vlaneseq
        %v487 = vshrl.u32 %v486, 7
        %v488 = vsub.s32 0, %v487
        %v489 = vrot.slane %v387, %v488
        %v490 = vlaneseq
        %v491 = vshrl.u32 %v490, 7
        %v492 = vsub.s32 0, %v491
        %v493 = vrot.slane %v388, %v492
        %v494 = vlaneseq
        %v495 = vshrl.u32 %v494, 7
        %v496 = vsub.s32 0, %v495
        %v497 = vrot.slane %v389, %v496
        %v498 = vlaneseq
        %v499 = vshrl.u32 %v498, 7
        %v500 = vsub.s32 0, %v499
        %v501 = vrot.slane %v390, %v500
        %v502 = vlaneseq
        %v503 = vshrl.u32 %v502, 7
        %v504 = vsub.s32 0, %v503
        %v505 = vrot.slane %v391, %v504
        %v506 = vlaneseq
        %v507 = vshrl.u32 %v506, 7
        %v508 = vsub.s32 0, %v507
        %v509 = vrot.slane %v392, %v508
        %v510 = vlaneseq
        %v511 = vshrl.u32 %v510, 7
        %v512 = vsub.s32 0, %v511
        %v513 = vrot.slane %v393, %v512
        %v522 = vmul.f32 %v397, %v485
        %v523 = vmul.f32 %v402, %v485
        %v524 = vmul.f32 %v407, %v489
        %v525 = vmul.f32 %v412, %v489
        %v526 = vmul.f32 %v417, %v493
        %v527 = vmul.f32 %v422, %v493
        %v528 = vmul.f32 %v427, %v497
        %v529 = vmul.f32 %v432, %v497
        %v530 = vmul.f32 %v437, %v501
        %v531 = vmul.f32 %v442, %v501
        %v532 = vmul.f32 %v447, %v505
        %v533 = vmul.f32 %v452, %v505
        %v534 = vmul.f32 %v457, %v509
        %v535 = vmul.f32 %v462, %v509
        %v536 = vmul.f32 %v467, %v513
        %v537 = vmul.f32 %v472, %v513
        %v538 = vand.u32 2147483647, %v522
        %vm539 = vcmp.le.f32.partialorder %v538, 0.7853982
        %vm540 = vcmp.lt.s32.totalorder %v522, 0
        %v541 = vand.u32 %v522, 2139095040
        %v542 = vshrl.u32 %v541, 23
        %v543 = vsub.s32 %v542, 127
        %v544 = vand.u32 2147483647, %v522
        %v545 = vand.u32 %v544, 8388607
        %v546 = vor.u32 %v545, 8388608
        %v547 = vsub.s32 0, %v546
        %v548 = vadd.s32 %v543, 1
        %vm549 = vcmp.gt.s32.totalorder %v548, 0
        %v550 = vsel %vm549, %v548, 0
        %v551 = vshrl.u32 %v550, 5
        %v552 = vand.u32 %v550, 31
        %v553 = vsub.s32 32, %v552
        %v554 = vshrl.u32 683565275, %v553
        %v555 = vshll.u32 683565275, %v552
        %v556 = vshrl.u32 2475754826, %v553
        %v557 = vor.u32 %v555, %v556
        %v558 = vshll.u32 2475754826, %v552
        %v559 = vshrl.u32 2131351028, %v553
        %v560 = vor.u32 %v558, %v559
        %v561 = vshll.u32 2131351028, %v552
        %v562 = vshrl.u32 2102212464, %v553
        %v563 = vor.u32 %v561, %v562
        %v564 = vshll.u32 2102212464, %v552
        %v565 = vshrl.u32 920167782, %v553
        %v566 = vor.u32 %v564, %v565
        %v567 = vshll.u32 920167782, %v552
        %v568 = vshrl.u32 1326507024, %v553
        %v569 = vor.u32 %v567, %v568
        %vm570 = vcmp.lt.s32.totalorder %v551, 1
        %vm571 = vcmp.lt.s32.totalorder %v551, 2
        %vm572 = vcmp.lt.s32.totalorder %v551, 3
        %vm573 = vcmp.lt.s32.totalorder %v551, 4
        %v574 = vsel %vm570, %v554, %v557
        %v575 = vsel %vm573, %v563, 2102212464
        %v576 = vsel %vm572, %v560, %v575
        %v577 = vsel %vm571, %v574, %v576
        %v578 = vsel %vm570, %v557, %v560
        %v579 = vsel %vm573, %v566, 920167782
        %v580 = vsel %vm572, %v563, %v579
        %v581 = vsel %vm571, %v578, %v580
        %v582 = vsel %vm570, %v560, %v563
        %v583 = vsel %vm573, %v569, 1326507024
        %v584 = vsel %vm572, %v566, %v583
        %v585 = vsel %vm571, %v582, %v584
        %v586 = vshll.u32 %v546, 8
        %v587 = vmul.u32.u64.compose %v586, %v585
        %v588 = vextract.low.u32 %v587
        %v589 = vextract.high.u32 %v587
        %v590 = vmul.u32.u64.compose %v586, %v581
        %v591 = vextract.low.u32 %v590
        %v592 = vextract.high.u32 %v590
        %v593 = vmul.u32 %v586, %v577
        %v594 = vadd.s32 %v589, %v591
        %vm595 = vc.u32 %v589, %v591
        %v596 = vadd.s32 %v592, 1
        %v597 = vsel %vm595, %v596, %v592
        %v598 = vadd.s32 %v593, %v597
        %v599 = vadd.s32 %v598, 536870912
        %v600 = vshrl.u32 %v599, 30
        %v601 = vshll.u32 %v600, 30
        %v602 = vsub.s32 %v598, %v601
        %vm603 = vcmp.lt.s32.totalorder %v602, 0
        %v604 = vsub.s32 0, %v602
        %v605 = vsel %vm603, %v604, %v602
        %v606 = vclz %v605
        %v607 = vsub.s32 %v606, 2
        %vm608 = vcmp.gt.s32.totalorder 0, %v607
        %v609 = vsel %vm608, 0, %v607
        %v610 = vsub.s32 32, %v609
        %v611 = vshll.u32 %v602, %v609
        %v612 = vshrl.u32 %v594, %v610
        %v613 = vor.u32 %v611, %v612
        %v614 = vsub.s32 4294967266, %v609
        %v615 = vadd.s32 %v614, 127
        %v616 = vshll.u32 %v615, 23
        %v617 = vor.u32 4788187, %v616
        %v618 = vand.u32 2147483647, %v617
        %v620 = vcvt.s32.f32 %v613
        %v621 = vmul.f32 %v620, %v618
        %v622 = vxor.u32 %v621, 2147483648
        %v623 = vsel %vm540, %v622, %v621
        %v624 = vsub.s32 4, %v600
        %v625 = vsel %vm540, %v624, %v600
        %v626 = vsel %vm539, %v522, %v623
        %v627 = vsel %vm539, 0, %v625
        %v628 = vcosq.f32.pop %v626
        %v629 = vsinq.f32.pop %v626
        %vm630 = vweird.f32 %v522
        %v631 = vand.u32 %v627, 3
        %vm632 = vcmp.lt.s32.totalorder %v631, 2
        %vm633 = vcmp.eq.s32.totalorder %v631, 0
        %v634 = vxor.u32 %v629, 2147483648
        %v635 = vsel %vm633, %v628, %v634
        %vm636 = vcmp.eq.s32.totalorder %v631, 2
        %v637 = vxor.u32 %v628, 2147483648
        %v638 = vsel %vm636, %v637, %v629
        %v639 = vsel %vm632, %v635, %v638
        %v640 = vsel %vm630, nan, %v639
        %v641 = vand.u32 2147483647, %v523
        %vm642 = vcmp.le.f32.partialorder %v641, 0.7853982
        %vm643 = vcmp.lt.s32.totalorder %v523, 0
        %v644 = vand.u32 %v523, 2139095040
        %v645 = vshrl.u32 %v644, 23
        %v646 = vsub.s32 %v645, 127
        %v647 = vand.u32 2147483647, %v523
        %v648 = vand.u32 %v647, 8388607
        %v649 = vor.u32 %v648, 8388608
        %v650 = vsub.s32 0, %v649
        %v651 = vadd.s32 %v646, 1
        %vm652 = vcmp.gt.s32.totalorder %v651, 0
        %v653 = vsel %vm652, %v651, 0
        %v654 = vshrl.u32 %v653, 5
        %v655 = vand.u32 %v653, 31
        %v656 = vsub.s32 32, %v655
        %v657 = vshrl.u32 683565275, %v656
        %v658 = vshll.u32 683565275, %v655
        %v659 = vshrl.u32 2475754826, %v656
        %v660 = vor.u32 %v658, %v659
        %v661 = vshll.u32 2475754826, %v655
        %v662 = vshrl.u32 2131351028, %v656
        %v663 = vor.u32 %v661, %v662
        %v664 = vshll.u32 2131351028, %v655
        %v665 = vshrl.u32 2102212464, %v656
        %v666 = vor.u32 %v664, %v665
        %v667 = vshll.u32 2102212464, %v655
        %v668 = vshrl.u32 920167782, %v656
        %v669 = vor.u32 %v667, %v668
        %v670 = vshll.u32 920167782, %v655
        %v671 = vshrl.u32 1326507024, %v656
        %v672 = vor.u32 %v670, %v671
        %vm673 = vcmp.lt.s32.totalorder %v654, 1
        %vm674 = vcmp.lt.s32.totalorder %v654, 2
        %vm675 = vcmp.lt.s32.totalorder %v654, 3
        %vm676 = vcmp.lt.s32.totalorder %v654, 4
        %v677 = vsel %vm673, %v657, %v660
        %v678 = vsel %vm676, %v666, 2102212464
        %v679 = vsel %vm675, %v663, %v678
        %v680 = vsel %vm674, %v677, %v679
        %v681 = vsel %vm673, %v660, %v663
        %v682 = vsel %vm676, %v669, 920167782
        %v683 = vsel %vm675, %v666, %v682
        %v684 = vsel %vm674, %v681, %v683
        %v685 = vsel %vm673, %v663, %v666
        %v686 = vsel %vm676, %v672, 1326507024
        %v687 = vsel %vm675, %v669, %v686
        %v688 = vsel %vm674, %v685, %v687
        %v689 = vshll.u32 %v649, 8
        %v690 = vmul.u32.u64.compose %v689, %v688
        %v691 = vextract.low.u32 %v690
        %v692 = vextract.high.u32 %v690
        %v693 = vmul.u32.u64.compose %v689, %v684
        %v694 = vextract.low.u32 %v693
        %v695 = vextract.high.u32 %v693
        %v696 = vmul.u32 %v689, %v680
        %v697 = vadd.s32 %v692, %v694
        %vm698 = vc.u32 %v692, %v694
        %v699 = vadd.s32 %v695, 1
        %v700 = vsel %vm698, %v699, %v695
        %v701 = vadd.s32 %v696, %v700
        %v702 = vadd.s32 %v701, 536870912
        %v703 = vshrl.u32 %v702, 30
        %v704 = vshll.u32 %v703, 30
        %v705 = vsub.s32 %v701, %v704
        %vm706 = vcmp.lt.s32.totalorder %v705, 0
        %v707 = vsub.s32 0, %v705
        %v708 = vsel %vm706, %v707, %v705
        %v709 = vclz %v708
        %v710 = vsub.s32 %v709, 2
        %vm711 = vcmp.gt.s32.totalorder 0, %v710
        %v712 = vsel %vm711, 0, %v710
        %v713 = vsub.s32 32, %v712
        %v714 = vshll.u32 %v705, %v712
        %v715 = vshrl.u32 %v697, %v713
        %v716 = vor.u32 %v714, %v715
        %v717 = vsub.s32 4294967266, %v712
        %v718 = vadd.s32 %v717, 127
        %v719 = vshll.u32 %v718, 23
        %v720 = vor.u32 4788187, %v719
        %v721 = vand.u32 2147483647, %v720
        %v723 = vcvt.s32.f32 %v716
        %v724 = vmul.f32 %v723, %v721
        %v725 = vxor.u32 %v724, 2147483648
        %v726 = vsel %vm643, %v725, %v724
        %v727 = vsub.s32 4, %v703
        %v728 = vsel %vm643, %v727, %v703
        %v729 = vsel %vm642, %v523, %v726
        %v730 = vsel %vm642, 0, %v728
        %v731 = vcosq.f32.pop %v729
        %v732 = vsinq.f32.pop %v729
        %vm733 = vweird.f32 %v523
        %v734 = vand.u32 %v730, 3
        %vm735 = vcmp.lt.s32.totalorder %v734, 2
        %vm736 = vcmp.eq.s32.totalorder %v734, 0
        %v737 = vxor.u32 %v732, 2147483648
        %v738 = vsel %vm736, %v731, %v737
        %vm739 = vcmp.eq.s32.totalorder %v734, 2
        %v740 = vxor.u32 %v731, 2147483648
        %v741 = vsel %vm739, %v740, %v732
        %v742 = vsel %vm735, %v738, %v741
        %v743 = vsel %vm733, nan, %v742
        %v744 = vand.u32 2147483647, %v524
        %vm745 = vcmp.le.f32.partialorder %v744, 0.7853982
        %vm746 = vcmp.lt.s32.totalorder %v524, 0
        %v747 = vand.u32 %v524, 2139095040
        %v748 = vshrl.u32 %v747, 23
        %v749 = vsub.s32 %v748, 127
        %v750 = vand.u32 2147483647, %v524
        %v751 = vand.u32 %v750, 8388607
        %v752 = vor.u32 %v751, 8388608
        %v753 = vsub.s32 0, %v752
        %v754 = vadd.s32 %v749, 1
        %vm755 = vcmp.gt.s32.totalorder %v754, 0
        %v756 = vsel %vm755, %v754, 0
        %v757 = vshrl.u32 %v756, 5
        %v758 = vand.u32 %v756, 31
        %v759 = vsub.s32 32, %v758
        %v760 = vshrl.u32 683565275, %v759
        %v761 = vshll.u32 683565275, %v758
        %v762 = vshrl.u32 2475754826, %v759
        %v763 = vor.u32 %v761, %v762
        %v764 = vshll.u32 2475754826, %v758
        %v765 = vshrl.u32 2131351028, %v759
        %v766 = vor.u32 %v764, %v765
        %v767 = vshll.u32 2131351028, %v758
        %v768 = vshrl.u32 2102212464, %v759
        %v769 = vor.u32 %v767, %v768
        %v770 = vshll.u32 2102212464, %v758
        %v771 = vshrl.u32 920167782, %v759
        %v772 = vor.u32 %v770, %v771
        %v773 = vshll.u32 920167782, %v758
        %v774 = vshrl.u32 1326507024, %v759
        %v775 = vor.u32 %v773, %v774
        %vm776 = vcmp.lt.s32.totalorder %v757, 1
        %vm777 = vcmp.lt.s32.totalorder %v757, 2
        %vm778 = vcmp.lt.s32.totalorder %v757, 3
        %vm779 = vcmp.lt.s32.totalorder %v757, 4
        %v780 = vsel %vm776, %v760, %v763
        %v781 = vsel %vm779, %v769, 2102212464
        %v782 = vsel %vm778, %v766, %v781
        %v783 = vsel %vm777, %v780, %v782
        %v784 = vsel %vm776, %v763, %v766
        %v785 = vsel %vm779, %v772, 920167782
        %v786 = vsel %vm778, %v769, %v785
        %v787 = vsel %vm777, %v784, %v786
        %v788 = vsel %vm776, %v766, %v769
        %v789 = vsel %vm779, %v775, 1326507024
        %v790 = vsel %vm778, %v772, %v789
        %v791 = vsel %vm777, %v788, %v790
        %v792 = vshll.u32 %v752, 8
        %v793 = vmul.u32.u64.compose %v792, %v791
        %v794 = vextract.low.u32 %v793
        %v795 = vextract.high.u32 %v793
        %v796 = vmul.u32.u64.compose %v792, %v787
        %v797 = vextract.low.u32 %v796
        %v798 = vextract.high.u32 %v796
        %v799 = vmul.u32 %v792, %v783
        %v800 = vadd.s32 %v795, %v797
        %vm801 = vc.u32 %v795, %v797
        %v802 = vadd.s32 %v798, 1
        %v803 = vsel %vm801, %v802, %v798
        %v804 = vadd.s32 %v799, %v803
        %v805 = vadd.s32 %v804, 536870912
        %v806 = vshrl.u32 %v805, 30
        %v807 = vshll.u32 %v806, 30
        %v808 = vsub.s32 %v804, %v807
        %vm809 = vcmp.lt.s32.totalorder %v808, 0
        %v810 = vsub.s32 0, %v808
        %v811 = vsel %vm809, %v810, %v808
        %v812 = vclz %v811
        %v813 = vsub.s32 %v812, 2
        %vm814 = vcmp.gt.s32.totalorder 0, %v813
        %v815 = vsel %vm814, 0, %v813
        %v816 = vsub.s32 32, %v815
        %v817 = vshll.u32 %v808, %v815
        %v818 = vshrl.u32 %v800, %v816
        %v819 = vor.u32 %v817, %v818
        %v820 = vsub.s32 4294967266, %v815
        %v821 = vadd.s32 %v820, 127
        %v822 = vshll.u32 %v821, 23
        %v823 = vor.u32 4788187, %v822
        %v824 = vand.u32 2147483647, %v823
        %v826 = vcvt.s32.f32 %v819
        %v827 = vmul.f32 %v826, %v824
        %v828 = vxor.u32 %v827, 2147483648
        %v829 = vsel %vm746, %v828, %v827
        %v830 = vsub.s32 4, %v806
        %v831 = vsel %vm746, %v830, %v806
        %v832 = vsel %vm745, %v524, %v829
        %v833 = vsel %vm745, 0, %v831
        %v834 = vcosq.f32.pop %v832
        %v835 = vsinq.f32.pop %v832
        %vm836 = vweird.f32 %v524
        %v837 = vand.u32 %v833, 3
        %vm838 = vcmp.lt.s32.totalorder %v837, 2
        %vm839 = vcmp.eq.s32.totalorder %v837, 0
        %v840 = vxor.u32 %v835, 2147483648
        %v841 = vsel %vm839, %v834, %v840
        %vm842 = vcmp.eq.s32.totalorder %v837, 2
        %v843 = vxor.u32 %v834, 2147483648
        %v844 = vsel %vm842, %v843, %v835
        %v845 = vsel %vm838, %v841, %v844
        %v846 = vsel %vm836, nan, %v845
        %v847 = vand.u32 2147483647, %v525
        %vm848 = vcmp.le.f32.partialorder %v847, 0.7853982
        %vm849 = vcmp.lt.s32.totalorder %v525, 0
        %v850 = vand.u32 %v525, 2139095040
        %v851 = vshrl.u32 %v850, 23
        %v852 = vsub.s32 %v851, 127
        %v853 = vand.u32 2147483647, %v525
        %v854 = vand.u32 %v853, 8388607
        %v855 = vor.u32 %v854, 8388608
        %v856 = vsub.s32 0, %v855
        %v857 = vadd.s32 %v852, 1
        %vm858 = vcmp.gt.s32.totalorder %v857, 0
        %v859 = vsel %vm858, %v857, 0
        %v860 = vshrl.u32 %v859, 5
        %v861 = vand.u32 %v859, 31
        %v862 = vsub.s32 32, %v861
        %v863 = vshrl.u32 683565275, %v862
        %v864 = vshll.u32 683565275, %v861
        %v865 = vshrl.u32 2475754826, %v862
        %v866 = vor.u32 %v864, %v865
        %v867 = vshll.u32 2475754826, %v861
        %v868 = vshrl.u32 2131351028, %v862
        %v869 = vor.u32 %v867, %v868
        %v870 = vshll.u32 2131351028, %v861
        %v871 = vshrl.u32 2102212464, %v862
        %v872 = vor.u32 %v870, %v871
        %v873 = vshll.u32 2102212464, %v861
        %v874 = vshrl.u32 920167782, %v862
        %v875 = vor.u32 %v873, %v874
        %v876 = vshll.u32 920167782, %v861
        %v877 = vshrl.u32 1326507024, %v862
        %v878 = vor.u32 %v876, %v877
        %vm879 = vcmp.lt.s32.totalorder %v860, 1
        %vm880 = vcmp.lt.s32.totalorder %v860, 2
        %vm881 = vcmp.lt.s32.totalorder %v860, 3
        %vm882 = vcmp.lt.s32.totalorder %v860, 4
        %v883 = vsel %vm879, %v863, %v866
        %v884 = vsel %vm882, %v872, 2102212464
        %v885 = vsel %vm881, %v869, %v884
        %v886 = vsel %vm880, %v883, %v885
        %v887 = vsel %vm879, %v866, %v869
        %v888 = vsel %vm882, %v875, 920167782
        %v889 = vsel %vm881, %v872, %v888
        %v890 = vsel %vm880, %v887, %v889
        %v891 = vsel %vm879, %v869, %v872
        %v892 = vsel %vm882, %v878, 1326507024
        %v893 = vsel %vm881, %v875, %v892
        %v894 = vsel %vm880, %v891, %v893
        %v895 = vshll.u32 %v855, 8
        %v896 = vmul.u32.u64.compose %v895, %v894
        %v897 = vextract.low.u32 %v896
        %v898 = vextract.high.u32 %v896
        %v899 = vmul.u32.u64.compose %v895, %v890
        %v900 = vextract.low.u32 %v899
        %v901 = vextract.high.u32 %v899
        %v902 = vmul.u32 %v895, %v886
        %v903 = vadd.s32 %v898, %v900
        %vm904 = vc.u32 %v898, %v900
        %v905 = vadd.s32 %v901, 1
        %v906 = vsel %vm904, %v905, %v901
        %v907 = vadd.s32 %v902, %v906
        %v908 = vadd.s32 %v907, 536870912
        %v909 = vshrl.u32 %v908, 30
        %v910 = vshll.u32 %v909, 30
        %v911 = vsub.s32 %v907, %v910
        %vm912 = vcmp.lt.s32.totalorder %v911, 0
        %v913 = vsub.s32 0, %v911
        %v914 = vsel %vm912, %v913, %v911
        %v915 = vclz %v914
        %v916 = vsub.s32 %v915, 2
        %vm917 = vcmp.gt.s32.totalorder 0, %v916
        %v918 = vsel %vm917, 0, %v916
        %v919 = vsub.s32 32, %v918
        %v920 = vshll.u32 %v911, %v918
        %v921 = vshrl.u32 %v903, %v919
        %v922 = vor.u32 %v920, %v921
        %v923 = vsub.s32 4294967266, %v918
        %v924 = vadd.s32 %v923, 127
        %v925 = vshll.u32 %v924, 23
        %v926 = vor.u32 4788187, %v925
        %v927 = vand.u32 2147483647, %v926
        %v929 = vcvt.s32.f32 %v922
        %v930 = vmul.f32 %v929, %v927
        %v931 = vxor.u32 %v930, 2147483648
        %v932 = vsel %vm849, %v931, %v930
        %v933 = vsub.s32 4, %v909
        %v934 = vsel %vm849, %v933, %v909
        %v935 = vsel %vm848, %v525, %v932
        %v936 = vsel %vm848, 0, %v934
        %v937 = vcosq.f32.pop %v935
        %v938 = vsinq.f32.pop %v935
        %vm939 = vweird.f32 %v525
        %v940 = vand.u32 %v936, 3
        %vm941 = vcmp.lt.s32.totalorder %v940, 2
        %vm942 = vcmp.eq.s32.totalorder %v940, 0
        %v943 = vxor.u32 %v938, 2147483648
        %v944 = vsel %vm942, %v937, %v943
        %vm945 = vcmp.eq.s32.totalorder %v940, 2
        %v946 = vxor.u32 %v937, 2147483648
        %v947 = vsel %vm945, %v946, %v938
        %v948 = vsel %vm941, %v944, %v947
        %v949 = vsel %vm939, nan, %v948
        %v950 = vand.u32 2147483647, %v526
        %vm951 = vcmp.le.f32.partialorder %v950, 0.7853982
        %vm952 = vcmp.lt.s32.totalorder %v526, 0
        %v953 = vand.u32 %v526, 2139095040
        %v954 = vshrl.u32 %v953, 23
        %v955 = vsub.s32 %v954, 127
        %v956 = vand.u32 2147483647, %v526
        %v957 = vand.u32 %v956, 8388607
        %v958 = vor.u32 %v957, 8388608
        %v959 = vsub.s32 0, %v958
        %v960 = vadd.s32 %v955, 1
        %vm961 = vcmp.gt.s32.totalorder %v960, 0
        %v962 = vsel %vm961, %v960, 0
        %v963 = vshrl.u32 %v962, 5
        %v964 = vand.u32 %v962, 31
        %v965 = vsub.s32 32, %v964
        %v966 = vshrl.u32 683565275, %v965
        %v967 = vshll.u32 683565275, %v964
        %v968 = vshrl.u32 2475754826, %v965
        %v969 = vor.u32 %v967, %v968
        %v970 = vshll.u32 2475754826, %v964
        %v971 = vshrl.u32 2131351028, %v965
        %v972 = vor.u32 %v970, %v971
        %v973 = vshll.u32 2131351028, %v964
        %v974 = vshrl.u32 2102212464, %v965
        %v975 = vor.u32 %v973, %v974
        %v976 = vshll.u32 2102212464, %v964
        %v977 = vshrl.u32 920167782, %v965
        %v978 = vor.u32 %v976, %v977
        %v979 = vshll.u32 920167782, %v964
        %v980 = vshrl.u32 1326507024, %v965
        %v981 = vor.u32 %v979, %v980
        %vm982 = vcmp.lt.s32.totalorder %v963, 1
        %vm983 = vcmp.lt.s32.totalorder %v963, 2
        %vm984 = vcmp.lt.s32.totalorder %v963, 3
        %vm985 = vcmp.lt.s32.totalorder %v963, 4
        %v986 = vsel %vm982, %v966, %v969
        %v987 = vsel %vm985, %v975, 2102212464
        %v988 = vsel %vm984, %v972, %v987
        %v989 = vsel %vm983, %v986, %v988
        %v990 = vsel %vm982, %v969, %v972
        %v991 = vsel %vm985, %v978, 920167782
        %v992 = vsel %vm984, %v975, %v991
        %v993 = vsel %vm983, %v990, %v992
        %v994 = vsel %vm982, %v972, %v975
        %v995 = vsel %vm985, %v981, 1326507024
        %v996 = vsel %vm984, %v978, %v995
        %v997 = vsel %vm983, %v994, %v996
        %v998 = vshll.u32 %v958, 8
        %v999 = vmul.u32.u64.compose %v998, %v997
        %v1000 = vextract.low.u32 %v999
        %v1001 = vextract.high.u32 %v999
        %v1002 = vmul.u32.u64.compose %v998, %v993
        %v1003 = vextract.low.u32 %v1002
        %v1004 = vextract.high.u32 %v1002
        %v1005 = vmul.u32 %v998, %v989
        %v1006 = vadd.s32 %v1001, %v1003
        %vm1007 = vc.u32 %v1001, %v1003
        %v1008 = vadd.s32 %v1004, 1
        %v1009 = vsel %vm1007, %v1008, %v1004
        %v1010 = vadd.s32 %v1005, %v1009
        %v1011 = vadd.s32 %v1010, 536870912
        %v1012 = vshrl.u32 %v1011, 30
        %v1013 = vshll.u32 %v1012, 30
        %v1014 = vsub.s32 %v1010, %v1013
        %vm1015 = vcmp.lt.s32.totalorder %v1014, 0
        %v1016 = vsub.s32 0, %v1014
        %v1017 = vsel %vm1015, %v1016, %v1014
        %v1018 = vclz %v1017
        %v1019 = vsub.s32 %v1018, 2
        %vm1020 = vcmp.gt.s32.totalorder 0, %v1019
        %v1021 = vsel %vm1020, 0, %v1019
        %v1022 = vsub.s32 32, %v1021
        %v1023 = vshll.u32 %v1014, %v1021
        %v1024 = vshrl.u32 %v1006, %v1022
        %v1025 = vor.u32 %v1023, %v1024
        %v1026 = vsub.s32 4294967266, %v1021
        %v1027 = vadd.s32 %v1026, 127
        %v1028 = vshll.u32 %v1027, 23
        %v1029 = vor.u32 4788187, %v1028
        %v1030 = vand.u32 2147483647, %v1029
        %v1032 = vcvt.s32.f32 %v1025
        %v1033 = vmul.f32 %v1032, %v1030
        %v1034 = vxor.u32 %v1033, 2147483648
        %v1035 = vsel %vm952, %v1034, %v1033
        %v1036 = vsub.s32 4, %v1012
        %v1037 = vsel %vm952, %v1036, %v1012
        %v1038 = vsel %vm951, %v526, %v1035
        %v1039 = vsel %vm951, 0, %v1037
        %v1040 = vcosq.f32.pop %v1038
        %v1041 = vsinq.f32.pop %v1038
        %vm1042 = vweird.f32 %v526
        %v1043 = vand.u32 %v1039, 3
        %vm1044 = vcmp.lt.s32.totalorder %v1043, 2
        %vm1045 = vcmp.eq.s32.totalorder %v1043, 0
        %v1046 = vxor.u32 %v1041, 2147483648
        %v1047 = vsel %vm1045, %v1040, %v1046
        %vm1048 = vcmp.eq.s32.totalorder %v1043, 2
        %v1049 = vxor.u32 %v1040, 2147483648
        %v1050 = vsel %vm1048, %v1049, %v1041
        %v1051 = vsel %vm1044, %v1047, %v1050
        %v1052 = vsel %vm1042, nan, %v1051
        %v1053 = vand.u32 2147483647, %v527
        %vm1054 = vcmp.le.f32.partialorder %v1053, 0.7853982
        %vm1055 = vcmp.lt.s32.totalorder %v527, 0
        %v1056 = vand.u32 %v527, 2139095040
        %v1057 = vshrl.u32 %v1056, 23
        %v1058 = vsub.s32 %v1057, 127
        %v1059 = vand.u32 2147483647, %v527
        %v1060 = vand.u32 %v1059, 8388607
        %v1061 = vor.u32 %v1060, 8388608
        %v1062 = vsub.s32 0, %v1061
        %v1063 = vadd.s32 %v1058, 1
        %vm1064 = vcmp.gt.s32.totalorder %v1063, 0
        %v1065 = vsel %vm1064, %v1063, 0
        %v1066 = vshrl.u32 %v1065, 5
        %v1067 = vand.u32 %v1065, 31
        %v1068 = vsub.s32 32, %v1067
        %v1069 = vshrl.u32 683565275, %v1068
        %v1070 = vshll.u32 683565275, %v1067
        %v1071 = vshrl.u32 2475754826, %v1068
        %v1072 = vor.u32 %v1070, %v1071
        %v1073 = vshll.u32 2475754826, %v1067
        %v1074 = vshrl.u32 2131351028, %v1068
        %v1075 = vor.u32 %v1073, %v1074
        %v1076 = vshll.u32 2131351028, %v1067
        %v1077 = vshrl.u32 2102212464, %v1068
        %v1078 = vor.u32 %v1076, %v1077
        %v1079 = vshll.u32 2102212464, %v1067
        %v1080 = vshrl.u32 920167782, %v1068
        %v1081 = vor.u32 %v1079, %v1080
        %v1082 = vshll.u32 920167782, %v1067
        %v1083 = vshrl.u32 1326507024, %v1068
        %v1084 = vor.u32 %v1082, %v1083
        %vm1085 = vcmp.lt.s32.totalorder %v1066, 1
        %vm1086 = vcmp.lt.s32.totalorder %v1066, 2
        %vm1087 = vcmp.lt.s32.totalorder %v1066, 3
        %vm1088 = vcmp.lt.s32.totalorder %v1066, 4
        %v1089 = vsel %vm1085, %v1069, %v1072
        %v1090 = vsel %vm1088, %v1078, 2102212464
        %v1091 = vsel %vm1087, %v1075, %v1090
        %v1092 = vsel %vm1086, %v1089, %v1091
        %v1093 = vsel %vm1085, %v1072, %v1075
        %v1094 = vsel %vm1088, %v1081, 920167782
        %v1095 = vsel %vm1087, %v1078, %v1094
        %v1096 = vsel %vm1086, %v1093, %v1095
        %v1097 = vsel %vm1085, %v1075, %v1078
        %v1098 = vsel %vm1088, %v1084, 1326507024
        %v1099 = vsel %vm1087, %v1081, %v1098
        %v1100 = vsel %vm1086, %v1097, %v1099
        %v1101 = vshll.u32 %v1061, 8
        %v1102 = vmul.u32.u64.compose %v1101, %v1100
        %v1103 = vextract.low.u32 %v1102
        %v1104 = vextract.high.u32 %v1102
        %v1105 = vmul.u32.u64.compose %v1101, %v1096
        %v1106 = vextract.low.u32 %v1105
        %v1107 = vextract.high.u32 %v1105
        %v1108 = vmul.u32 %v1101, %v1092
        %v1109 = vadd.s32 %v1104, %v1106
        %vm1110 = vc.u32 %v1104, %v1106
        %v1111 = vadd.s32 %v1107, 1
        %v1112 = vsel %vm1110, %v1111, %v1107
        %v1113 = vadd.s32 %v1108, %v1112
        %v1114 = vadd.s32 %v1113, 536870912
        %v1115 = vshrl.u32 %v1114, 30
        %v1116 = vshll.u32 %v1115, 30
        %v1117 = vsub.s32 %v1113, %v1116
        %vm1118 = vcmp.lt.s32.totalorder %v1117, 0
        %v1119 = vsub.s32 0, %v1117
        %v1120 = vsel %vm1118, %v1119, %v1117
        %v1121 = vclz %v1120
        %v1122 = vsub.s32 %v1121, 2
        %vm1123 = vcmp.gt.s32.totalorder 0, %v1122
        %v1124 = vsel %vm1123, 0, %v1122
        %v1125 = vsub.s32 32, %v1124
        %v1126 = vshll.u32 %v1117, %v1124
        %v1127 = vshrl.u32 %v1109, %v1125
        %v1128 = vor.u32 %v1126, %v1127
        %v1129 = vsub.s32 4294967266, %v1124
        %v1130 = vadd.s32 %v1129, 127
        %v1131 = vshll.u32 %v1130, 23
        %v1132 = vor.u32 4788187, %v1131
        %v1133 = vand.u32 2147483647, %v1132
        %v1135 = vcvt.s32.f32 %v1128
        %v1136 = vmul.f32 %v1135, %v1133
        %v1137 = vxor.u32 %v1136, 2147483648
        %v1138 = vsel %vm1055, %v1137, %v1136
        %v1139 = vsub.s32 4, %v1115
        %v1140 = vsel %vm1055, %v1139, %v1115
        %v1141 = vsel %vm1054, %v527, %v1138
        %v1142 = vsel %vm1054, 0, %v1140
        %v1143 = vcosq.f32.pop %v1141
        %v1144 = vsinq.f32.pop %v1141
        %vm1145 = vweird.f32 %v527
        %v1146 = vand.u32 %v1142, 3
        %vm1147 = vcmp.lt.s32.totalorder %v1146, 2
        %vm1148 = vcmp.eq.s32.totalorder %v1146, 0
        %v1149 = vxor.u32 %v1144, 2147483648
        %v1150 = vsel %vm1148, %v1143, %v1149
        %vm1151 = vcmp.eq.s32.totalorder %v1146, 2
        %v1152 = vxor.u32 %v1143, 2147483648
        %v1153 = vsel %vm1151, %v1152, %v1144
        %v1154 = vsel %vm1147, %v1150, %v1153
        %v1155 = vsel %vm1145, nan, %v1154
        %v1156 = vand.u32 2147483647, %v528
        %vm1157 = vcmp.le.f32.partialorder %v1156, 0.7853982
        %vm1158 = vcmp.lt.s32.totalorder %v528, 0
        %v1159 = vand.u32 %v528, 2139095040
        %v1160 = vshrl.u32 %v1159, 23
        %v1161 = vsub.s32 %v1160, 127
        %v1162 = vand.u32 2147483647, %v528
        %v1163 = vand.u32 %v1162, 8388607
        %v1164 = vor.u32 %v1163, 8388608
        %v1165 = vsub.s32 0, %v1164
        %v1166 = vadd.s32 %v1161, 1
        %vm1167 = vcmp.gt.s32.totalorder %v1166, 0
        %v1168 = vsel %vm1167, %v1166, 0
        %v1169 = vshrl.u32 %v1168, 5
        %v1170 = vand.u32 %v1168, 31
        %v1171 = vsub.s32 32, %v1170
        %v1172 = vshrl.u32 683565275, %v1171
        %v1173 = vshll.u32 683565275, %v1170
        %v1174 = vshrl.u32 2475754826, %v1171
        %v1175 = vor.u32 %v1173, %v1174
        %v1176 = vshll.u32 2475754826, %v1170
        %v1177 = vshrl.u32 2131351028, %v1171
        %v1178 = vor.u32 %v1176, %v1177
        %v1179 = vshll.u32 2131351028, %v1170
        %v1180 = vshrl.u32 2102212464, %v1171
        %v1181 = vor.u32 %v1179, %v1180
        %v1182 = vshll.u32 2102212464, %v1170
        %v1183 = vshrl.u32 920167782, %v1171
        %v1184 = vor.u32 %v1182, %v1183
        %v1185 = vshll.u32 920167782, %v1170
        %v1186 = vshrl.u32 1326507024, %v1171
        %v1187 = vor.u32 %v1185, %v1186
        %vm1188 = vcmp.lt.s32.totalorder %v1169, 1
        %vm1189 = vcmp.lt.s32.totalorder %v1169, 2
        %vm1190 = vcmp.lt.s32.totalorder %v1169, 3
        %vm1191 = vcmp.lt.s32.totalorder %v1169, 4
        %v1192 = vsel %vm1188, %v1172, %v1175
        %v1193 = vsel %vm1191, %v1181, 2102212464
        %v1194 = vsel %vm1190, %v1178, %v1193
        %v1195 = vsel %vm1189, %v1192, %v1194
        %v1196 = vsel %vm1188, %v1175, %v1178
        %v1197 = vsel %vm1191, %v1184, 920167782
        %v1198 = vsel %vm1190, %v1181, %v1197
        %v1199 = vsel %vm1189, %v1196, %v1198
        %v1200 = vsel %vm1188, %v1178, %v1181
        %v1201 = vsel %vm1191, %v1187, 1326507024
        %v1202 = vsel %vm1190, %v1184, %v1201
        %v1203 = vsel %vm1189, %v1200, %v1202
        %v1204 = vshll.u32 %v1164, 8
        %v1205 = vmul.u32.u64.compose %v1204, %v1203
        %v1206 = vextract.low.u32 %v1205
        %v1207 = vextract.high.u32 %v1205
        %v1208 = vmul.u32.u64.compose %v1204, %v1199
        %v1209 = vextract.low.u32 %v1208
        %v1210 = vextract.high.u32 %v1208
        %v1211 = vmul.u32 %v1204, %v1195
        %v1212 = vadd.s32 %v1207, %v1209
        %vm1213 = vc.u32 %v1207, %v1209
        %v1214 = vadd.s32 %v1210, 1
        %v1215 = vsel %vm1213, %v1214, %v1210
        %v1216 = vadd.s32 %v1211, %v1215
        %v1217 = vadd.s32 %v1216, 536870912
        %v1218 = vshrl.u32 %v1217, 30
        %v1219 = vshll.u32 %v1218, 30
        %v1220 = vsub.s32 %v1216, %v1219
        %vm1221 = vcmp.lt.s32.totalorder %v1220, 0
        %v1222 = vsub.s32 0, %v1220
        %v1223 = vsel %vm1221, %v1222, %v1220
        %v1224 = vclz %v1223
        %v1225 = vsub.s32 %v1224, 2
        %vm1226 = vcmp.gt.s32.totalorder 0, %v1225
        %v1227 = vsel %vm1226, 0, %v1225
        %v1228 = vsub.s32 32, %v1227
        %v1229 = vshll.u32 %v1220, %v1227
        %v1230 = vshrl.u32 %v1212, %v1228
        %v1231 = vor.u32 %v1229, %v1230
        %v1232 = vsub.s32 4294967266, %v1227
        %v1233 = vadd.s32 %v1232, 127
        %v1234 = vshll.u32 %v1233, 23
        %v1235 = vor.u32 4788187, %v1234
        %v1236 = vand.u32 2147483647, %v1235
        %v1238 = vcvt.s32.f32 %v1231
        %v1239 = vmul.f32 %v1238, %v1236
        %v1240 = vxor.u32 %v1239, 2147483648
        %v1241 = vsel %vm1158, %v1240, %v1239
        %v1242 = vsub.s32 4, %v1218
        %v1243 = vsel %vm1158, %v1242, %v1218
        %v1244 = vsel %vm1157, %v528, %v1241
        %v1245 = vsel %vm1157, 0, %v1243
        %v1246 = vcosq.f32.pop %v1244
        %v1247 = vsinq.f32.pop %v1244
        %vm1248 = vweird.f32 %v528
        %v1249 = vand.u32 %v1245, 3
        %vm1250 = vcmp.lt.s32.totalorder %v1249, 2
        %vm1251 = vcmp.eq.s32.totalorder %v1249, 0
        %v1252 = vxor.u32 %v1247, 2147483648
        %v1253 = vsel %vm1251, %v1246, %v1252
        %vm1254 = vcmp.eq.s32.totalorder %v1249, 2
        %v1255 = vxor.u32 %v1246, 2147483648
        %v1256 = vsel %vm1254, %v1255, %v1247
        %v1257 = vsel %vm1250, %v1253, %v1256
        %v1258 = vsel %vm1248, nan, %v1257
        %v1259 = vand.u32 2147483647, %v529
        %vm1260 = vcmp.le.f32.partialorder %v1259, 0.7853982
        %vm1261 = vcmp.lt.s32.totalorder %v529, 0
        %v1262 = vand.u32 %v529, 2139095040
        %v1263 = vshrl.u32 %v1262, 23
        %v1264 = vsub.s32 %v1263, 127
        %v1265 = vand.u32 2147483647, %v529
        %v1266 = vand.u32 %v1265, 8388607
        %v1267 = vor.u32 %v1266, 8388608
        %v1268 = vsub.s32 0, %v1267
        %v1269 = vadd.s32 %v1264, 1
        %vm1270 = vcmp.gt.s32.totalorder %v1269, 0
        %v1271 = vsel %vm1270, %v1269, 0
        %v1272 = vshrl.u32 %v1271, 5
        %v1273 = vand.u32 %v1271, 31
        %v1274 = vsub.s32 32, %v1273
        %v1275 = vshrl.u32 683565275, %v1274
        %v1276 = vshll.u32 683565275, %v1273
        %v1277 = vshrl.u32 2475754826, %v1274
        %v1278 = vor.u32 %v1276, %v1277
        %v1279 = vshll.u32 2475754826, %v1273
        %v1280 = vshrl.u32 2131351028, %v1274
        %v1281 = vor.u32 %v1279, %v1280
        %v1282 = vshll.u32 2131351028, %v1273
        %v1283 = vshrl.u32 2102212464, %v1274
        %v1284 = vor.u32 %v1282, %v1283
        %v1285 = vshll.u32 2102212464, %v1273
        %v1286 = vshrl.u32 920167782, %v1274
        %v1287 = vor.u32 %v1285, %v1286
        %v1288 = vshll.u32 920167782, %v1273
        %v1289 = vshrl.u32 1326507024, %v1274
        %v1290 = vor.u32 %v1288, %v1289
        %vm1291 = vcmp.lt.s32.totalorder %v1272, 1
        %vm1292 = vcmp.lt.s32.totalorder %v1272, 2
        %vm1293 = vcmp.lt.s32.totalorder %v1272, 3
        %vm1294 = vcmp.lt.s32.totalorder %v1272, 4
        %v1295 = vsel %vm1291, %v1275, %v1278
        %v1296 = vsel %vm1294, %v1284, 2102212464
        %v1297 = vsel %vm1293, %v1281, %v1296
        %v1298 = vsel %vm1292, %v1295, %v1297
        %v1299 = vsel %vm1291, %v1278, %v1281
        %v1300 = vsel %vm1294, %v1287, 920167782
        %v1301 = vsel %vm1293, %v1284, %v1300
        %v1302 = vsel %vm1292, %v1299, %v1301
        %v1303 = vsel %vm1291, %v1281, %v1284
        %v1304 = vsel %vm1294, %v1290, 1326507024
        %v1305 = vsel %vm1293, %v1287, %v1304
        %v1306 = vsel %vm1292, %v1303, %v1305
        %v1307 = vshll.u32 %v1267, 8
        %v1308 = vmul.u32.u64.compose %v1307, %v1306
        %v1309 = vextract.low.u32 %v1308
        %v1310 = vextract.high.u32 %v1308
        %v1311 = vmul.u32.u64.compose %v1307, %v1302
        %v1312 = vextract.low.u32 %v1311
        %v1313 = vextract.high.u32 %v1311
        %v1314 = vmul.u32 %v1307, %v1298
        %v1315 = vadd.s32 %v1310, %v1312
        %vm1316 = vc.u32 %v1310, %v1312
        %v1317 = vadd.s32 %v1313, 1
        %v1318 = vsel %vm1316, %v1317, %v1313
        %v1319 = vadd.s32 %v1314, %v1318
        %v1320 = vadd.s32 %v1319, 536870912
        %v1321 = vshrl.u32 %v1320, 30
        %v1322 = vshll.u32 %v1321, 30
        %v1323 = vsub.s32 %v1319, %v1322
        %vm1324 = vcmp.lt.s32.totalorder %v1323, 0
        %v1325 = vsub.s32 0, %v1323
        %v1326 = vsel %vm1324, %v1325, %v1323
        %v1327 = vclz %v1326
        %v1328 = vsub.s32 %v1327, 2
        %vm1329 = vcmp.gt.s32.totalorder 0, %v1328
        %v1330 = vsel %vm1329, 0, %v1328
        %v1331 = vsub.s32 32, %v1330
        %v1332 = vshll.u32 %v1323, %v1330
        %v1333 = vshrl.u32 %v1315, %v1331
        %v1334 = vor.u32 %v1332, %v1333
        %v1335 = vsub.s32 4294967266, %v1330
        %v1336 = vadd.s32 %v1335, 127
        %v1337 = vshll.u32 %v1336, 23
        %v1338 = vor.u32 4788187, %v1337
        %v1339 = vand.u32 2147483647, %v1338
        %v1341 = vcvt.s32.f32 %v1334
        %v1342 = vmul.f32 %v1341, %v1339
        %v1343 = vxor.u32 %v1342, 2147483648
        %v1344 = vsel %vm1261, %v1343, %v1342
        %v1345 = vsub.s32 4, %v1321
        %v1346 = vsel %vm1261, %v1345, %v1321
        %v1347 = vsel %vm1260, %v529, %v1344
        %v1348 = vsel %vm1260, 0, %v1346
        %v1349 = vcosq.f32.pop %v1347
        %v1350 = vsinq.f32.pop %v1347
        %vm1351 = vweird.f32 %v529
        %v1352 = vand.u32 %v1348, 3
        %vm1353 = vcmp.lt.s32.totalorder %v1352, 2
        %vm1354 = vcmp.eq.s32.totalorder %v1352, 0
        %v1355 = vxor.u32 %v1350, 2147483648
        %v1356 = vsel %vm1354, %v1349, %v1355
        %vm1357 = vcmp.eq.s32.totalorder %v1352, 2
        %v1358 = vxor.u32 %v1349, 2147483648
        %v1359 = vsel %vm1357, %v1358, %v1350
        %v1360 = vsel %vm1353, %v1356, %v1359
        %v1361 = vsel %vm1351, nan, %v1360
        %v1362 = vand.u32 2147483647, %v530
        %vm1363 = vcmp.le.f32.partialorder %v1362, 0.7853982
        %vm1364 = vcmp.lt.s32.totalorder %v530, 0
        %v1365 = vand.u32 %v530, 2139095040
        %v1366 = vshrl.u32 %v1365, 23
        %v1367 = vsub.s32 %v1366, 127
        %v1368 = vand.u32 2147483647, %v530
        %v1369 = vand.u32 %v1368, 8388607
        %v1370 = vor.u32 %v1369, 8388608
        %v1371 = vsub.s32 0, %v1370
        %v1372 = vadd.s32 %v1367, 1
        %vm1373 = vcmp.gt.s32.totalorder %v1372, 0
        %v1374 = vsel %vm1373, %v1372, 0
        %v1375 = vshrl.u32 %v1374, 5
        %v1376 = vand.u32 %v1374, 31
        %v1377 = vsub.s32 32, %v1376
        %v1378 = vshrl.u32 683565275, %v1377
        %v1379 = vshll.u32 683565275, %v1376
        %v1380 = vshrl.u32 2475754826, %v1377
        %v1381 = vor.u32 %v1379, %v1380
        %v1382 = vshll.u32 2475754826, %v1376
        %v1383 = vshrl.u32 2131351028, %v1377
        %v1384 = vor.u32 %v1382, %v1383
        %v1385 = vshll.u32 2131351028, %v1376
        %v1386 = vshrl.u32 2102212464, %v1377
        %v1387 = vor.u32 %v1385, %v1386
        %v1388 = vshll.u32 2102212464, %v1376
        %v1389 = vshrl.u32 920167782, %v1377
        %v1390 = vor.u32 %v1388, %v1389
        %v1391 = vshll.u32 920167782, %v1376
        %v1392 = vshrl.u32 1326507024, %v1377
        %v1393 = vor.u32 %v1391, %v1392
        %vm1394 = vcmp.lt.s32.totalorder %v1375, 1
        %vm1395 = vcmp.lt.s32.totalorder %v1375, 2
        %vm1396 = vcmp.lt.s32.totalorder %v1375, 3
        %vm1397 = vcmp.lt.s32.totalorder %v1375, 4
        %v1398 = vsel %vm1394, %v1378, %v1381
        %v1399 = vsel %vm1397, %v1387, 2102212464
        %v1400 = vsel %vm1396, %v1384, %v1399
        %v1401 = vsel %vm1395, %v1398, %v1400
        %v1402 = vsel %vm1394, %v1381, %v1384
        %v1403 = vsel %vm1397, %v1390, 920167782
        %v1404 = vsel %vm1396, %v1387, %v1403
        %v1405 = vsel %vm1395, %v1402, %v1404
        %v1406 = vsel %vm1394, %v1384, %v1387
        %v1407 = vsel %vm1397, %v1393, 1326507024
        %v1408 = vsel %vm1396, %v1390, %v1407
        %v1409 = vsel %vm1395, %v1406, %v1408
        %v1410 = vshll.u32 %v1370, 8
        %v1411 = vmul.u32.u64.compose %v1410, %v1409
        %v1412 = vextract.low.u32 %v1411
        %v1413 = vextract.high.u32 %v1411
        %v1414 = vmul.u32.u64.compose %v1410, %v1405
        %v1415 = vextract.low.u32 %v1414
        %v1416 = vextract.high.u32 %v1414
        %v1417 = vmul.u32 %v1410, %v1401
        %v1418 = vadd.s32 %v1413, %v1415
        %vm1419 = vc.u32 %v1413, %v1415
        %v1420 = vadd.s32 %v1416, 1
        %v1421 = vsel %vm1419, %v1420, %v1416
        %v1422 = vadd.s32 %v1417, %v1421
        %v1423 = vadd.s32 %v1422, 536870912
        %v1424 = vshrl.u32 %v1423, 30
        %v1425 = vshll.u32 %v1424, 30
        %v1426 = vsub.s32 %v1422, %v1425
        %vm1427 = vcmp.lt.s32.totalorder %v1426, 0
        %v1428 = vsub.s32 0, %v1426
        %v1429 = vsel %vm1427, %v1428, %v1426
        %v1430 = vclz %v1429
        %v1431 = vsub.s32 %v1430, 2
        %vm1432 = vcmp.gt.s32.totalorder 0, %v1431
        %v1433 = vsel %vm1432, 0, %v1431
        %v1434 = vsub.s32 32, %v1433
        %v1435 = vshll.u32 %v1426, %v1433
        %v1436 = vshrl.u32 %v1418, %v1434
        %v1437 = vor.u32 %v1435, %v1436
        %v1438 = vsub.s32 4294967266, %v1433
        %v1439 = vadd.s32 %v1438, 127
        %v1440 = vshll.u32 %v1439, 23
        %v1441 = vor.u32 4788187, %v1440
        %v1442 = vand.u32 2147483647, %v1441
        %v1444 = vcvt.s32.f32 %v1437
        %v1445 = vmul.f32 %v1444, %v1442
        %v1446 = vxor.u32 %v1445, 2147483648
        %v1447 = vsel %vm1364, %v1446, %v1445
        %v1448 = vsub.s32 4, %v1424
        %v1449 = vsel %vm1364, %v1448, %v1424
        %v1450 = vsel %vm1363, %v530, %v1447
        %v1451 = vsel %vm1363, 0, %v1449
        %v1452 = vcosq.f32.pop %v1450
        %v1453 = vsinq.f32.pop %v1450
        %vm1454 = vweird.f32 %v530
        %v1455 = vand.u32 %v1451, 3
        %vm1456 = vcmp.lt.s32.totalorder %v1455, 2
        %vm1457 = vcmp.eq.s32.totalorder %v1455, 0
        %v1458 = vxor.u32 %v1453, 2147483648
        %v1459 = vsel %vm1457, %v1452, %v1458
        %vm1460 = vcmp.eq.s32.totalorder %v1455, 2
        %v1461 = vxor.u32 %v1452, 2147483648
        %v1462 = vsel %vm1460, %v1461, %v1453
        %v1463 = vsel %vm1456, %v1459, %v1462
        %v1464 = vsel %vm1454, nan, %v1463
        %v1465 = vand.u32 2147483647, %v531
        %vm1466 = vcmp.le.f32.partialorder %v1465, 0.7853982
        %vm1467 = vcmp.lt.s32.totalorder %v531, 0
        %v1468 = vand.u32 %v531, 2139095040
        %v1469 = vshrl.u32 %v1468, 23
        %v1470 = vsub.s32 %v1469, 127
        %v1471 = vand.u32 2147483647, %v531
        %v1472 = vand.u32 %v1471, 8388607
        %v1473 = vor.u32 %v1472, 8388608
        %v1474 = vsub.s32 0, %v1473
        %v1475 = vadd.s32 %v1470, 1
        %vm1476 = vcmp.gt.s32.totalorder %v1475, 0
        %v1477 = vsel %vm1476, %v1475, 0
        %v1478 = vshrl.u32 %v1477, 5
        %v1479 = vand.u32 %v1477, 31
        %v1480 = vsub.s32 32, %v1479
        %v1481 = vshrl.u32 683565275, %v1480
        %v1482 = vshll.u32 683565275, %v1479
        %v1483 = vshrl.u32 2475754826, %v1480
        %v1484 = vor.u32 %v1482, %v1483
        %v1485 = vshll.u32 2475754826, %v1479
        %v1486 = vshrl.u32 2131351028, %v1480
        %v1487 = vor.u32 %v1485, %v1486
        %v1488 = vshll.u32 2131351028, %v1479
        %v1489 = vshrl.u32 2102212464, %v1480
        %v1490 = vor.u32 %v1488, %v1489
        %v1491 = vshll.u32 2102212464, %v1479
        %v1492 = vshrl.u32 920167782, %v1480
        %v1493 = vor.u32 %v1491, %v1492
        %v1494 = vshll.u32 920167782, %v1479
        %v1495 = vshrl.u32 1326507024, %v1480
        %v1496 = vor.u32 %v1494, %v1495
        %vm1497 = vcmp.lt.s32.totalorder %v1478, 1
        %vm1498 = vcmp.lt.s32.totalorder %v1478, 2
        %vm1499 = vcmp.lt.s32.totalorder %v1478, 3
        %vm1500 = vcmp.lt.s32.totalorder %v1478, 4
        %v1501 = vsel %vm1497, %v1481, %v1484
        %v1502 = vsel %vm1500, %v1490, 2102212464
        %v1503 = vsel %vm1499, %v1487, %v1502
        %v1504 = vsel %vm1498, %v1501, %v1503
        %v1505 = vsel %vm1497, %v1484, %v1487
        %v1506 = vsel %vm1500, %v1493, 920167782
        %v1507 = vsel %vm1499, %v1490, %v1506
        %v1508 = vsel %vm1498, %v1505, %v1507
        %v1509 = vsel %vm1497, %v1487, %v1490
        %v1510 = vsel %vm1500, %v1496, 1326507024
        %v1511 = vsel %vm1499, %v1493, %v1510
        %v1512 = vsel %vm1498, %v1509, %v1511
        %v1513 = vshll.u32 %v1473, 8
        %v1514 = vmul.u32.u64.compose %v1513, %v1512
        %v1515 = vextract.low.u32 %v1514
        %v1516 = vextract.high.u32 %v1514
        %v1517 = vmul.u32.u64.compose %v1513, %v1508
        %v1518 = vextract.low.u32 %v1517
        %v1519 = vextract.high.u32 %v1517
        %v1520 = vmul.u32 %v1513, %v1504
        %v1521 = vadd.s32 %v1516, %v1518
        %vm1522 = vc.u32 %v1516, %v1518
        %v1523 = vadd.s32 %v1519, 1
        %v1524 = vsel %vm1522, %v1523, %v1519
        %v1525 = vadd.s32 %v1520, %v1524
        %v1526 = vadd.s32 %v1525, 536870912
        %v1527 = vshrl.u32 %v1526, 30
        %v1528 = vshll.u32 %v1527, 30
        %v1529 = vsub.s32 %v1525, %v1528
        %vm1530 = vcmp.lt.s32.totalorder %v1529, 0
        %v1531 = vsub.s32 0, %v1529
        %v1532 = vsel %vm1530, %v1531, %v1529
        %v1533 = vclz %v1532
        %v1534 = vsub.s32 %v1533, 2
        %vm1535 = vcmp.gt.s32.totalorder 0, %v1534
        %v1536 = vsel %vm1535, 0, %v1534
        %v1537 = vsub.s32 32, %v1536
        %v1538 = vshll.u32 %v1529, %v1536
        %v1539 = vshrl.u32 %v1521, %v1537
        %v1540 = vor.u32 %v1538, %v1539
        %v1541 = vsub.s32 4294967266, %v1536
        %v1542 = vadd.s32 %v1541, 127
        %v1543 = vshll.u32 %v1542, 23
        %v1544 = vor.u32 4788187, %v1543
        %v1545 = vand.u32 2147483647, %v1544
        %v1547 = vcvt.s32.f32 %v1540
        %v1548 = vmul.f32 %v1547, %v1545
        %v1549 = vxor.u32 %v1548, 2147483648
        %v1550 = vsel %vm1467, %v1549, %v1548
        %v1551 = vsub.s32 4, %v1527
        %v1552 = vsel %vm1467, %v1551, %v1527
        %v1553 = vsel %vm1466, %v531, %v1550
        %v1554 = vsel %vm1466, 0, %v1552
        %v1555 = vcosq.f32.pop %v1553
        %v1556 = vsinq.f32.pop %v1553
        %vm1557 = vweird.f32 %v531
        %v1558 = vand.u32 %v1554, 3
        %vm1559 = vcmp.lt.s32.totalorder %v1558, 2
        %vm1560 = vcmp.eq.s32.totalorder %v1558, 0
        %v1561 = vxor.u32 %v1556, 2147483648
        %v1562 = vsel %vm1560, %v1555, %v1561
        %vm1563 = vcmp.eq.s32.totalorder %v1558, 2
        %v1564 = vxor.u32 %v1555, 2147483648
        %v1565 = vsel %vm1563, %v1564, %v1556
        %v1566 = vsel %vm1559, %v1562, %v1565
        %v1567 = vsel %vm1557, nan, %v1566
        %v1568 = vand.u32 2147483647, %v532
        %vm1569 = vcmp.le.f32.partialorder %v1568, 0.7853982
        %vm1570 = vcmp.lt.s32.totalorder %v532, 0
        %v1571 = vand.u32 %v532, 2139095040
        %v1572 = vshrl.u32 %v1571, 23
        %v1573 = vsub.s32 %v1572, 127
        %v1574 = vand.u32 2147483647, %v532
        %v1575 = vand.u32 %v1574, 8388607
        %v1576 = vor.u32 %v1575, 8388608
        %v1577 = vsub.s32 0, %v1576
        %v1578 = vadd.s32 %v1573, 1
        %vm1579 = vcmp.gt.s32.totalorder %v1578, 0
        %v1580 = vsel %vm1579, %v1578, 0
        %v1581 = vshrl.u32 %v1580, 5
        %v1582 = vand.u32 %v1580, 31
        %v1583 = vsub.s32 32, %v1582
        %v1584 = vshrl.u32 683565275, %v1583
        %v1585 = vshll.u32 683565275, %v1582
        %v1586 = vshrl.u32 2475754826, %v1583
        %v1587 = vor.u32 %v1585, %v1586
        %v1588 = vshll.u32 2475754826, %v1582
        %v1589 = vshrl.u32 2131351028, %v1583
        %v1590 = vor.u32 %v1588, %v1589
        %v1591 = vshll.u32 2131351028, %v1582
        %v1592 = vshrl.u32 2102212464, %v1583
        %v1593 = vor.u32 %v1591, %v1592
        %v1594 = vshll.u32 2102212464, %v1582
        %v1595 = vshrl.u32 920167782, %v1583
        %v1596 = vor.u32 %v1594, %v1595
        %v1597 = vshll.u32 920167782, %v1582
        %v1598 = vshrl.u32 1326507024, %v1583
        %v1599 = vor.u32 %v1597, %v1598
        %vm1600 = vcmp.lt.s32.totalorder %v1581, 1
        %vm1601 = vcmp.lt.s32.totalorder %v1581, 2
        %vm1602 = vcmp.lt.s32.totalorder %v1581, 3
        %vm1603 = vcmp.lt.s32.totalorder %v1581, 4
        %v1604 = vsel %vm1600, %v1584, %v1587
        %v1605 = vsel %vm1603, %v1593, 2102212464
        %v1606 = vsel %vm1602, %v1590, %v1605
        %v1607 = vsel %vm1601, %v1604, %v1606
        %v1608 = vsel %vm1600, %v1587, %v1590
        %v1609 = vsel %vm1603, %v1596, 920167782
        %v1610 = vsel %vm1602, %v1593, %v1609
        %v1611 = vsel %vm1601, %v1608, %v1610
        %v1612 = vsel %vm1600, %v1590, %v1593
        %v1613 = vsel %vm1603, %v1599, 1326507024
        %v1614 = vsel %vm1602, %v1596, %v1613
        %v1615 = vsel %vm1601, %v1612, %v1614
        %v1616 = vshll.u32 %v1576, 8
        %v1617 = vmul.u32.u64.compose %v1616, %v1615
        %v1618 = vextract.low.u32 %v1617
        %v1619 = vextract.high.u32 %v1617
        %v1620 = vmul.u32.u64.compose %v1616, %v1611
        %v1621 = vextract.low.u32 %v1620
        %v1622 = vextract.high.u32 %v1620
        %v1623 = vmul.u32 %v1616, %v1607
        %v1624 = vadd.s32 %v1619, %v1621
        %vm1625 = vc.u32 %v1619, %v1621
        %v1626 = vadd.s32 %v1622, 1
        %v1627 = vsel %vm1625, %v1626, %v1622
        %v1628 = vadd.s32 %v1623, %v1627
        %v1629 = vadd.s32 %v1628, 536870912
        %v1630 = vshrl.u32 %v1629, 30
        %v1631 = vshll.u32 %v1630, 30
        %v1632 = vsub.s32 %v1628, %v1631
        %vm1633 = vcmp.lt.s32.totalorder %v1632, 0
        %v1634 = vsub.s32 0, %v1632
        %v1635 = vsel %vm1633, %v1634, %v1632
        %v1636 = vclz %v1635
        %v1637 = vsub.s32 %v1636, 2
        %vm1638 = vcmp.gt.s32.totalorder 0, %v1637
        %v1639 = vsel %vm1638, 0, %v1637
        %v1640 = vsub.s32 32, %v1639
        %v1641 = vshll.u32 %v1632, %v1639
        %v1642 = vshrl.u32 %v1624, %v1640
        %v1643 = vor.u32 %v1641, %v1642
        %v1644 = vsub.s32 4294967266, %v1639
        %v1645 = vadd.s32 %v1644, 127
        %v1646 = vshll.u32 %v1645, 23
        %v1647 = vor.u32 4788187, %v1646
        %v1648 = vand.u32 2147483647, %v1647
        %v1650 = vcvt.s32.f32 %v1643
        %v1651 = vmul.f32 %v1650, %v1648
        %v1652 = vxor.u32 %v1651, 2147483648
        %v1653 = vsel %vm1570, %v1652, %v1651
        %v1654 = vsub.s32 4, %v1630
        %v1655 = vsel %vm1570, %v1654, %v1630
        %v1656 = vsel %vm1569, %v532, %v1653
        %v1657 = vsel %vm1569, 0, %v1655
        %v1658 = vcosq.f32.pop %v1656
        %v1659 = vsinq.f32.pop %v1656
        %vm1660 = vweird.f32 %v532
        %v1661 = vand.u32 %v1657, 3
        %vm1662 = vcmp.lt.s32.totalorder %v1661, 2
        %vm1663 = vcmp.eq.s32.totalorder %v1661, 0
        %v1664 = vxor.u32 %v1659, 2147483648
        %v1665 = vsel %vm1663, %v1658, %v1664
        %vm1666 = vcmp.eq.s32.totalorder %v1661, 2
        %v1667 = vxor.u32 %v1658, 2147483648
        %v1668 = vsel %vm1666, %v1667, %v1659
        %v1669 = vsel %vm1662, %v1665, %v1668
        %v1670 = vsel %vm1660, nan, %v1669
        %v1671 = vand.u32 2147483647, %v533
        %vm1672 = vcmp.le.f32.partialorder %v1671, 0.7853982
        %vm1673 = vcmp.lt.s32.totalorder %v533, 0
        %v1674 = vand.u32 %v533, 2139095040
        %v1675 = vshrl.u32 %v1674, 23
        %v1676 = vsub.s32 %v1675, 127
        %v1677 = vand.u32 2147483647, %v533
        %v1678 = vand.u32 %v1677, 8388607
        %v1679 = vor.u32 %v1678, 8388608
        %v1680 = vsub.s32 0, %v1679
        %v1681 = vadd.s32 %v1676, 1
        %vm1682 = vcmp.gt.s32.totalorder %v1681, 0
        %v1683 = vsel %vm1682, %v1681, 0
        %v1684 = vshrl.u32 %v1683, 5
        %v1685 = vand.u32 %v1683, 31
        %v1686 = vsub.s32 32, %v1685
        %v1687 = vshrl.u32 683565275, %v1686
        %v1688 = vshll.u32 683565275, %v1685
        %v1689 = vshrl.u32 2475754826, %v1686
        %v1690 = vor.u32 %v1688, %v1689
        %v1691 = vshll.u32 2475754826, %v1685
        %v1692 = vshrl.u32 2131351028, %v1686
        %v1693 = vor.u32 %v1691, %v1692
        %v1694 = vshll.u32 2131351028, %v1685
        %v1695 = vshrl.u32 2102212464, %v1686
        %v1696 = vor.u32 %v1694, %v1695
        %v1697 = vshll.u32 2102212464, %v1685
        %v1698 = vshrl.u32 920167782, %v1686
        %v1699 = vor.u32 %v1697, %v1698
        %v1700 = vshll.u32 920167782, %v1685
        %v1701 = vshrl.u32 1326507024, %v1686
        %v1702 = vor.u32 %v1700, %v1701
        %vm1703 = vcmp.lt.s32.totalorder %v1684, 1
        %vm1704 = vcmp.lt.s32.totalorder %v1684, 2
        %vm1705 = vcmp.lt.s32.totalorder %v1684, 3
        %vm1706 = vcmp.lt.s32.totalorder %v1684, 4
        %v1707 = vsel %vm1703, %v1687, %v1690
        %v1708 = vsel %vm1706, %v1696, 2102212464
        %v1709 = vsel %vm1705, %v1693, %v1708
        %v1710 = vsel %vm1704, %v1707, %v1709
        %v1711 = vsel %vm1703, %v1690, %v1693
        %v1712 = vsel %vm1706, %v1699, 920167782
        %v1713 = vsel %vm1705, %v1696, %v1712
        %v1714 = vsel %vm1704, %v1711, %v1713
        %v1715 = vsel %vm1703, %v1693, %v1696
        %v1716 = vsel %vm1706, %v1702, 1326507024
        %v1717 = vsel %vm1705, %v1699, %v1716
        %v1718 = vsel %vm1704, %v1715, %v1717
        %v1719 = vshll.u32 %v1679, 8
        %v1720 = vmul.u32.u64.compose %v1719, %v1718
        %v1721 = vextract.low.u32 %v1720
        %v1722 = vextract.high.u32 %v1720
        %v1723 = vmul.u32.u64.compose %v1719, %v1714
        %v1724 = vextract.low.u32 %v1723
        %v1725 = vextract.high.u32 %v1723
        %v1726 = vmul.u32 %v1719, %v1710
        %v1727 = vadd.s32 %v1722, %v1724
        %vm1728 = vc.u32 %v1722, %v1724
        %v1729 = vadd.s32 %v1725, 1
        %v1730 = vsel %vm1728, %v1729, %v1725
        %v1731 = vadd.s32 %v1726, %v1730
        %v1732 = vadd.s32 %v1731, 536870912
        %v1733 = vshrl.u32 %v1732, 30
        %v1734 = vshll.u32 %v1733, 30
        %v1735 = vsub.s32 %v1731, %v1734
        %vm1736 = vcmp.lt.s32.totalorder %v1735, 0
        %v1737 = vsub.s32 0, %v1735
        %v1738 = vsel %vm1736, %v1737, %v1735
        %v1739 = vclz %v1738
        %v1740 = vsub.s32 %v1739, 2
        %vm1741 = vcmp.gt.s32.totalorder 0, %v1740
        %v1742 = vsel %vm1741, 0, %v1740
        %v1743 = vsub.s32 32, %v1742
        %v1744 = vshll.u32 %v1735, %v1742
        %v1745 = vshrl.u32 %v1727, %v1743
        %v1746 = vor.u32 %v1744, %v1745
        %v1747 = vsub.s32 4294967266, %v1742
        %v1748 = vadd.s32 %v1747, 127
        %v1749 = vshll.u32 %v1748, 23
        %v1750 = vor.u32 4788187, %v1749
        %v1751 = vand.u32 2147483647, %v1750
        %v1753 = vcvt.s32.f32 %v1746
        %v1754 = vmul.f32 %v1753, %v1751
        %v1755 = vxor.u32 %v1754, 2147483648
        %v1756 = vsel %vm1673, %v1755, %v1754
        %v1757 = vsub.s32 4, %v1733
        %v1758 = vsel %vm1673, %v1757, %v1733
        %v1759 = vsel %vm1672, %v533, %v1756
        %v1760 = vsel %vm1672, 0, %v1758
        %v1761 = vcosq.f32.pop %v1759
        %v1762 = vsinq.f32.pop %v1759
        %vm1763 = vweird.f32 %v533
        %v1764 = vand.u32 %v1760, 3
        %vm1765 = vcmp.lt.s32.totalorder %v1764, 2
        %vm1766 = vcmp.eq.s32.totalorder %v1764, 0
        %v1767 = vxor.u32 %v1762, 2147483648
        %v1768 = vsel %vm1766, %v1761, %v1767
        %vm1769 = vcmp.eq.s32.totalorder %v1764, 2
        %v1770 = vxor.u32 %v1761, 2147483648
        %v1771 = vsel %vm1769, %v1770, %v1762
        %v1772 = vsel %vm1765, %v1768, %v1771
        %v1773 = vsel %vm1763, nan, %v1772
        %v1774 = vand.u32 2147483647, %v534
        %vm1775 = vcmp.le.f32.partialorder %v1774, 0.7853982
        %vm1776 = vcmp.lt.s32.totalorder %v534, 0
        %v1777 = vand.u32 %v534, 2139095040
        %v1778 = vshrl.u32 %v1777, 23
        %v1779 = vsub.s32 %v1778, 127
        %v1780 = vand.u32 2147483647, %v534
        %v1781 = vand.u32 %v1780, 8388607
        %v1782 = vor.u32 %v1781, 8388608
        %v1783 = vsub.s32 0, %v1782
        %v1784 = vadd.s32 %v1779, 1
        %vm1785 = vcmp.gt.s32.totalorder %v1784, 0
        %v1786 = vsel %vm1785, %v1784, 0
        %v1787 = vshrl.u32 %v1786, 5
        %v1788 = vand.u32 %v1786, 31
        %v1789 = vsub.s32 32, %v1788
        %v1790 = vshrl.u32 683565275, %v1789
        %v1791 = vshll.u32 683565275, %v1788
        %v1792 = vshrl.u32 2475754826, %v1789
        %v1793 = vor.u32 %v1791, %v1792
        %v1794 = vshll.u32 2475754826, %v1788
        %v1795 = vshrl.u32 2131351028, %v1789
        %v1796 = vor.u32 %v1794, %v1795
        %v1797 = vshll.u32 2131351028, %v1788
        %v1798 = vshrl.u32 2102212464, %v1789
        %v1799 = vor.u32 %v1797, %v1798
        %v1800 = vshll.u32 2102212464, %v1788
        %v1801 = vshrl.u32 920167782, %v1789
        %v1802 = vor.u32 %v1800, %v1801
        %v1803 = vshll.u32 920167782, %v1788
        %v1804 = vshrl.u32 1326507024, %v1789
        %v1805 = vor.u32 %v1803, %v1804
        %vm1806 = vcmp.lt.s32.totalorder %v1787, 1
        %vm1807 = vcmp.lt.s32.totalorder %v1787, 2
        %vm1808 = vcmp.lt.s32.totalorder %v1787, 3
        %vm1809 = vcmp.lt.s32.totalorder %v1787, 4
        %v1810 = vsel %vm1806, %v1790, %v1793
        %v1811 = vsel %vm1809, %v1799, 2102212464
        %v1812 = vsel %vm1808, %v1796, %v1811
        %v1813 = vsel %vm1807, %v1810, %v1812
        %v1814 = vsel %vm1806, %v1793, %v1796
        %v1815 = vsel %vm1809, %v1802, 920167782
        %v1816 = vsel %vm1808, %v1799, %v1815
        %v1817 = vsel %vm1807, %v1814, %v1816
        %v1818 = vsel %vm1806, %v1796, %v1799
        %v1819 = vsel %vm1809, %v1805, 1326507024
        %v1820 = vsel %vm1808, %v1802, %v1819
        %v1821 = vsel %vm1807, %v1818, %v1820
        %v1822 = vshll.u32 %v1782, 8
        %v1823 = vmul.u32.u64.compose %v1822, %v1821
        %v1824 = vextract.low.u32 %v1823
        %v1825 = vextract.high.u32 %v1823
        %v1826 = vmul.u32.u64.compose %v1822, %v1817
        %v1827 = vextract.low.u32 %v1826
        %v1828 = vextract.high.u32 %v1826
        %v1829 = vmul.u32 %v1822, %v1813
        %v1830 = vadd.s32 %v1825, %v1827
        %vm1831 = vc.u32 %v1825, %v1827
        %v1832 = vadd.s32 %v1828, 1
        %v1833 = vsel %vm1831, %v1832, %v1828
        %v1834 = vadd.s32 %v1829, %v1833
        %v1835 = vadd.s32 %v1834, 536870912
        %v1836 = vshrl.u32 %v1835, 30
        %v1837 = vshll.u32 %v1836, 30
        %v1838 = vsub.s32 %v1834, %v1837
        %vm1839 = vcmp.lt.s32.totalorder %v1838, 0
        %v1840 = vsub.s32 0, %v1838
        %v1841 = vsel %vm1839, %v1840, %v1838
        %v1842 = vclz %v1841
        %v1843 = vsub.s32 %v1842, 2
        %vm1844 = vcmp.gt.s32.totalorder 0, %v1843
        %v1845 = vsel %vm1844, 0, %v1843
        %v1846 = vsub.s32 32, %v1845
        %v1847 = vshll.u32 %v1838, %v1845
        %v1848 = vshrl.u32 %v1830, %v1846
        %v1849 = vor.u32 %v1847, %v1848
        %v1850 = vsub.s32 4294967266, %v1845
        %v1851 = vadd.s32 %v1850, 127
        %v1852 = vshll.u32 %v1851, 23
        %v1853 = vor.u32 4788187, %v1852
        %v1854 = vand.u32 2147483647, %v1853
        %v1856 = vcvt.s32.f32 %v1849
        %v1857 = vmul.f32 %v1856, %v1854
        %v1858 = vxor.u32 %v1857, 2147483648
        %v1859 = vsel %vm1776, %v1858, %v1857
        %v1860 = vsub.s32 4, %v1836
        %v1861 = vsel %vm1776, %v1860, %v1836
        %v1862 = vsel %vm1775, %v534, %v1859
        %v1863 = vsel %vm1775, 0, %v1861
        %v1864 = vcosq.f32.pop %v1862
        %v1865 = vsinq.f32.pop %v1862
        %vm1866 = vweird.f32 %v534
        %v1867 = vand.u32 %v1863, 3
        %vm1868 = vcmp.lt.s32.totalorder %v1867, 2
        %vm1869 = vcmp.eq.s32.totalorder %v1867, 0
        %v1870 = vxor.u32 %v1865, 2147483648
        %v1871 = vsel %vm1869, %v1864, %v1870
        %vm1872 = vcmp.eq.s32.totalorder %v1867, 2
        %v1873 = vxor.u32 %v1864, 2147483648
        %v1874 = vsel %vm1872, %v1873, %v1865
        %v1875 = vsel %vm1868, %v1871, %v1874
        %v1876 = vsel %vm1866, nan, %v1875
        %v1877 = vand.u32 2147483647, %v535
        %vm1878 = vcmp.le.f32.partialorder %v1877, 0.7853982
        %vm1879 = vcmp.lt.s32.totalorder %v535, 0
        %v1880 = vand.u32 %v535, 2139095040
        %v1881 = vshrl.u32 %v1880, 23
        %v1882 = vsub.s32 %v1881, 127
        %v1883 = vand.u32 2147483647, %v535
        %v1884 = vand.u32 %v1883, 8388607
        %v1885 = vor.u32 %v1884, 8388608
        %v1886 = vsub.s32 0, %v1885
        %v1887 = vadd.s32 %v1882, 1
        %vm1888 = vcmp.gt.s32.totalorder %v1887, 0
        %v1889 = vsel %vm1888, %v1887, 0
        %v1890 = vshrl.u32 %v1889, 5
        %v1891 = vand.u32 %v1889, 31
        %v1892 = vsub.s32 32, %v1891
        %v1893 = vshrl.u32 683565275, %v1892
        %v1894 = vshll.u32 683565275, %v1891
        %v1895 = vshrl.u32 2475754826, %v1892
        %v1896 = vor.u32 %v1894, %v1895
        %v1897 = vshll.u32 2475754826, %v1891
        %v1898 = vshrl.u32 2131351028, %v1892
        %v1899 = vor.u32 %v1897, %v1898
        %v1900 = vshll.u32 2131351028, %v1891
        %v1901 = vshrl.u32 2102212464, %v1892
        %v1902 = vor.u32 %v1900, %v1901
        %v1903 = vshll.u32 2102212464, %v1891
        %v1904 = vshrl.u32 920167782, %v1892
        %v1905 = vor.u32 %v1903, %v1904
        %v1906 = vshll.u32 920167782, %v1891
        %v1907 = vshrl.u32 1326507024, %v1892
        %v1908 = vor.u32 %v1906, %v1907
        %vm1909 = vcmp.lt.s32.totalorder %v1890, 1
        %vm1910 = vcmp.lt.s32.totalorder %v1890, 2
        %vm1911 = vcmp.lt.s32.totalorder %v1890, 3
        %vm1912 = vcmp.lt.s32.totalorder %v1890, 4
        %v1913 = vsel %vm1909, %v1893, %v1896
        %v1914 = vsel %vm1912, %v1902, 2102212464
        %v1915 = vsel %vm1911, %v1899, %v1914
        %v1916 = vsel %vm1910, %v1913, %v1915
        %v1917 = vsel %vm1909, %v1896, %v1899
        %v1918 = vsel %vm1912, %v1905, 920167782
        %v1919 = vsel %vm1911, %v1902, %v1918
        %v1920 = vsel %vm1910, %v1917, %v1919
        %v1921 = vsel %vm1909, %v1899, %v1902
        %v1922 = vsel %vm1912, %v1908, 1326507024
        %v1923 = vsel %vm1911, %v1905, %v1922
        %v1924 = vsel %vm1910, %v1921, %v1923
        %v1925 = vshll.u32 %v1885, 8
        %v1926 = vmul.u32.u64.compose %v1925, %v1924
        %v1927 = vextract.low.u32 %v1926
        %v1928 = vextract.high.u32 %v1926
        %v1929 = vmul.u32.u64.compose %v1925, %v1920
        %v1930 = vextract.low.u32 %v1929
        %v1931 = vextract.high.u32 %v1929
        %v1932 = vmul.u32 %v1925, %v1916
        %v1933 = vadd.s32 %v1928, %v1930
        %vm1934 = vc.u32 %v1928, %v1930
        %v1935 = vadd.s32 %v1931, 1
        %v1936 = vsel %vm1934, %v1935, %v1931
        %v1937 = vadd.s32 %v1932, %v1936
        %v1938 = vadd.s32 %v1937, 536870912
        %v1939 = vshrl.u32 %v1938, 30
        %v1940 = vshll.u32 %v1939, 30
        %v1941 = vsub.s32 %v1937, %v1940
        %vm1942 = vcmp.lt.s32.totalorder %v1941, 0
        %v1943 = vsub.s32 0, %v1941
        %v1944 = vsel %vm1942, %v1943, %v1941
        %v1945 = vclz %v1944
        %v1946 = vsub.s32 %v1945, 2
        %vm1947 = vcmp.gt.s32.totalorder 0, %v1946
        %v1948 = vsel %vm1947, 0, %v1946
        %v1949 = vsub.s32 32, %v1948
        %v1950 = vshll.u32 %v1941, %v1948
        %v1951 = vshrl.u32 %v1933, %v1949
        %v1952 = vor.u32 %v1950, %v1951
        %v1953 = vsub.s32 4294967266, %v1948
        %v1954 = vadd.s32 %v1953, 127
        %v1955 = vshll.u32 %v1954, 23
        %v1956 = vor.u32 4788187, %v1955
        %v1957 = vand.u32 2147483647, %v1956
        %v1959 = vcvt.s32.f32 %v1952
        %v1960 = vmul.f32 %v1959, %v1957
        %v1961 = vxor.u32 %v1960, 2147483648
        %v1962 = vsel %vm1879, %v1961, %v1960
        %v1963 = vsub.s32 4, %v1939
        %v1964 = vsel %vm1879, %v1963, %v1939
        %v1965 = vsel %vm1878, %v535, %v1962
        %v1966 = vsel %vm1878, 0, %v1964
        %v1967 = vcosq.f32.pop %v1965
        %v1968 = vsinq.f32.pop %v1965
        %vm1969 = vweird.f32 %v535
        %v1970 = vand.u32 %v1966, 3
        %vm1971 = vcmp.lt.s32.totalorder %v1970, 2
        %vm1972 = vcmp.eq.s32.totalorder %v1970, 0
        %v1973 = vxor.u32 %v1968, 2147483648
        %v1974 = vsel %vm1972, %v1967, %v1973
        %vm1975 = vcmp.eq.s32.totalorder %v1970, 2
        %v1976 = vxor.u32 %v1967, 2147483648
        %v1977 = vsel %vm1975, %v1976, %v1968
        %v1978 = vsel %vm1971, %v1974, %v1977
        %v1979 = vsel %vm1969, nan, %v1978
        %v1980 = vand.u32 2147483647, %v536
        %vm1981 = vcmp.le.f32.partialorder %v1980, 0.7853982
        %vm1982 = vcmp.lt.s32.totalorder %v536, 0
        %v1983 = vand.u32 %v536, 2139095040
        %v1984 = vshrl.u32 %v1983, 23
        %v1985 = vsub.s32 %v1984, 127
        %v1986 = vand.u32 2147483647, %v536
        %v1987 = vand.u32 %v1986, 8388607
        %v1988 = vor.u32 %v1987, 8388608
        %v1989 = vsub.s32 0, %v1988
        %v1990 = vadd.s32 %v1985, 1
        %vm1991 = vcmp.gt.s32.totalorder %v1990, 0
        %v1992 = vsel %vm1991, %v1990, 0
        %v1993 = vshrl.u32 %v1992, 5
        %v1994 = vand.u32 %v1992, 31
        %v1995 = vsub.s32 32, %v1994
        %v1996 = vshrl.u32 683565275, %v1995
        %v1997 = vshll.u32 683565275, %v1994
        %v1998 = vshrl.u32 2475754826, %v1995
        %v1999 = vor.u32 %v1997, %v1998
        %v2000 = vshll.u32 2475754826, %v1994
        %v2001 = vshrl.u32 2131351028, %v1995
        %v2002 = vor.u32 %v2000, %v2001
        %v2003 = vshll.u32 2131351028, %v1994
        %v2004 = vshrl.u32 2102212464, %v1995
        %v2005 = vor.u32 %v2003, %v2004
        %v2006 = vshll.u32 2102212464, %v1994
        %v2007 = vshrl.u32 920167782, %v1995
        %v2008 = vor.u32 %v2006, %v2007
        %v2009 = vshll.u32 920167782, %v1994
        %v2010 = vshrl.u32 1326507024, %v1995
        %v2011 = vor.u32 %v2009, %v2010
        %vm2012 = vcmp.lt.s32.totalorder %v1993, 1
        %vm2013 = vcmp.lt.s32.totalorder %v1993, 2
        %vm2014 = vcmp.lt.s32.totalorder %v1993, 3
        %vm2015 = vcmp.lt.s32.totalorder %v1993, 4
        %v2016 = vsel %vm2012, %v1996, %v1999
        %v2017 = vsel %vm2015, %v2005, 2102212464
        %v2018 = vsel %vm2014, %v2002, %v2017
        %v2019 = vsel %vm2013, %v2016, %v2018
        %v2020 = vsel %vm2012, %v1999, %v2002
        %v2021 = vsel %vm2015, %v2008, 920167782
        %v2022 = vsel %vm2014, %v2005, %v2021
        %v2023 = vsel %vm2013, %v2020, %v2022
        %v2024 = vsel %vm2012, %v2002, %v2005
        %v2025 = vsel %vm2015, %v2011, 1326507024
        %v2026 = vsel %vm2014, %v2008, %v2025
        %v2027 = vsel %vm2013, %v2024, %v2026
        %v2028 = vshll.u32 %v1988, 8
        %v2029 = vmul.u32.u64.compose %v2028, %v2027
        %v2030 = vextract.low.u32 %v2029
        %v2031 = vextract.high.u32 %v2029
        %v2032 = vmul.u32.u64.compose %v2028, %v2023
        %v2033 = vextract.low.u32 %v2032
        %v2034 = vextract.high.u32 %v2032
        %v2035 = vmul.u32 %v2028, %v2019
        %v2036 = vadd.s32 %v2031, %v2033
        %vm2037 = vc.u32 %v2031, %v2033
        %v2038 = vadd.s32 %v2034, 1
        %v2039 = vsel %vm2037, %v2038, %v2034
        %v2040 = vadd.s32 %v2035, %v2039
        %v2041 = vadd.s32 %v2040, 536870912
        %v2042 = vshrl.u32 %v2041, 30
        %v2043 = vshll.u32 %v2042, 30
        %v2044 = vsub.s32 %v2040, %v2043
        %vm2045 = vcmp.lt.s32.totalorder %v2044, 0
        %v2046 = vsub.s32 0, %v2044
        %v2047 = vsel %vm2045, %v2046, %v2044
        %v2048 = vclz %v2047
        %v2049 = vsub.s32 %v2048, 2
        %vm2050 = vcmp.gt.s32.totalorder 0, %v2049
        %v2051 = vsel %vm2050, 0, %v2049
        %v2052 = vsub.s32 32, %v2051
        %v2053 = vshll.u32 %v2044, %v2051
        %v2054 = vshrl.u32 %v2036, %v2052
        %v2055 = vor.u32 %v2053, %v2054
        %v2056 = vsub.s32 4294967266, %v2051
        %v2057 = vadd.s32 %v2056, 127
        %v2058 = vshll.u32 %v2057, 23
        %v2059 = vor.u32 4788187, %v2058
        %v2060 = vand.u32 2147483647, %v2059
        %v2062 = vcvt.s32.f32 %v2055
        %v2063 = vmul.f32 %v2062, %v2060
        %v2064 = vxor.u32 %v2063, 2147483648
        %v2065 = vsel %vm1982, %v2064, %v2063
        %v2066 = vsub.s32 4, %v2042
        %v2067 = vsel %vm1982, %v2066, %v2042
        %v2068 = vsel %vm1981, %v536, %v2065
        %v2069 = vsel %vm1981, 0, %v2067
        %v2070 = vcosq.f32.pop %v2068
        %v2071 = vsinq.f32.pop %v2068
        %vm2072 = vweird.f32 %v536
        %v2073 = vand.u32 %v2069, 3
        %vm2074 = vcmp.lt.s32.totalorder %v2073, 2
        %vm2075 = vcmp.eq.s32.totalorder %v2073, 0
        %v2076 = vxor.u32 %v2071, 2147483648
        %v2077 = vsel %vm2075, %v2070, %v2076
        %vm2078 = vcmp.eq.s32.totalorder %v2073, 2
        %v2079 = vxor.u32 %v2070, 2147483648
        %v2080 = vsel %vm2078, %v2079, %v2071
        %v2081 = vsel %vm2074, %v2077, %v2080
        %v2082 = vsel %vm2072, nan, %v2081
        %v2083 = vand.u32 2147483647, %v537
        %vm2084 = vcmp.le.f32.partialorder %v2083, 0.7853982
        %vm2085 = vcmp.lt.s32.totalorder %v537, 0
        %v2086 = vand.u32 %v537, 2139095040
        %v2087 = vshrl.u32 %v2086, 23
        %v2088 = vsub.s32 %v2087, 127
        %v2089 = vand.u32 2147483647, %v537
        %v2090 = vand.u32 %v2089, 8388607
        %v2091 = vor.u32 %v2090, 8388608
        %v2092 = vsub.s32 0, %v2091
        %v2093 = vadd.s32 %v2088, 1
        %vm2094 = vcmp.gt.s32.totalorder %v2093, 0
        %v2095 = vsel %vm2094, %v2093, 0
        %v2096 = vshrl.u32 %v2095, 5
        %v2097 = vand.u32 %v2095, 31
        %v2098 = vsub.s32 32, %v2097
        %v2099 = vshrl.u32 683565275, %v2098
        %v2100 = vshll.u32 683565275, %v2097
        %v2101 = vshrl.u32 2475754826, %v2098
        %v2102 = vor.u32 %v2100, %v2101
        %v2103 = vshll.u32 2475754826, %v2097
        %v2104 = vshrl.u32 2131351028, %v2098
        %v2105 = vor.u32 %v2103, %v2104
        %v2106 = vshll.u32 2131351028, %v2097
        %v2107 = vshrl.u32 2102212464, %v2098
        %v2108 = vor.u32 %v2106, %v2107
        %v2109 = vshll.u32 2102212464, %v2097
        %v2110 = vshrl.u32 920167782, %v2098
        %v2111 = vor.u32 %v2109, %v2110
        %v2112 = vshll.u32 920167782, %v2097
        %v2113 = vshrl.u32 1326507024, %v2098
        %v2114 = vor.u32 %v2112, %v2113
        %vm2115 = vcmp.lt.s32.totalorder %v2096, 1
        %vm2116 = vcmp.lt.s32.totalorder %v2096, 2
        %vm2117 = vcmp.lt.s32.totalorder %v2096, 3
        %vm2118 = vcmp.lt.s32.totalorder %v2096, 4
        %v2119 = vsel %vm2115, %v2099, %v2102
        %v2120 = vsel %vm2118, %v2108, 2102212464
        %v2121 = vsel %vm2117, %v2105, %v2120
        %v2122 = vsel %vm2116, %v2119, %v2121
        %v2123 = vsel %vm2115, %v2102, %v2105
        %v2124 = vsel %vm2118, %v2111, 920167782
        %v2125 = vsel %vm2117, %v2108, %v2124
        %v2126 = vsel %vm2116, %v2123, %v2125
        %v2127 = vsel %vm2115, %v2105, %v2108
        %v2128 = vsel %vm2118, %v2114, 1326507024
        %v2129 = vsel %vm2117, %v2111, %v2128
        %v2130 = vsel %vm2116, %v2127, %v2129
        %v2131 = vshll.u32 %v2091, 8
        %v2132 = vmul.u32.u64.compose %v2131, %v2130
        %v2133 = vextract.low.u32 %v2132
        %v2134 = vextract.high.u32 %v2132
        %v2135 = vmul.u32.u64.compose %v2131, %v2126
        %v2136 = vextract.low.u32 %v2135
        %v2137 = vextract.high.u32 %v2135
        %v2138 = vmul.u32 %v2131, %v2122
        %v2139 = vadd.s32 %v2134, %v2136
        %vm2140 = vc.u32 %v2134, %v2136
        %v2141 = vadd.s32 %v2137, 1
        %v2142 = vsel %vm2140, %v2141, %v2137
        %v2143 = vadd.s32 %v2138, %v2142
        %v2144 = vadd.s32 %v2143, 536870912
        %v2145 = vshrl.u32 %v2144, 30
        %v2146 = vshll.u32 %v2145, 30
        %v2147 = vsub.s32 %v2143, %v2146
        %vm2148 = vcmp.lt.s32.totalorder %v2147, 0
        %v2149 = vsub.s32 0, %v2147
        %v2150 = vsel %vm2148, %v2149, %v2147
        %v2151 = vclz %v2150
        %v2152 = vsub.s32 %v2151, 2
        %vm2153 = vcmp.gt.s32.totalorder 0, %v2152
        %v2154 = vsel %vm2153, 0, %v2152
        %v2155 = vsub.s32 32, %v2154
        %v2156 = vshll.u32 %v2147, %v2154
        %v2157 = vshrl.u32 %v2139, %v2155
        %v2158 = vor.u32 %v2156, %v2157
        %v2159 = vsub.s32 4294967266, %v2154
        %v2160 = vadd.s32 %v2159, 127
        %v2161 = vshll.u32 %v2160, 23
        %v2162 = vor.u32 4788187, %v2161
        %v2163 = vand.u32 2147483647, %v2162
        %v2165 = vcvt.s32.f32 %v2158
        %v2166 = vmul.f32 %v2165, %v2163
        %v2167 = vxor.u32 %v2166, 2147483648
        %v2168 = vsel %vm2085, %v2167, %v2166
        %v2169 = vsub.s32 4, %v2145
        %v2170 = vsel %vm2085, %v2169, %v2145
        %v2171 = vsel %vm2084, %v537, %v2168
        %v2172 = vsel %vm2084, 0, %v2170
        %v2173 = vcosq.f32.pop %v2171
        %v2174 = vsinq.f32.pop %v2171
        %vm2175 = vweird.f32 %v537
        %v2176 = vand.u32 %v2172, 3
        %vm2177 = vcmp.lt.s32.totalorder %v2176, 2
        %vm2178 = vcmp.eq.s32.totalorder %v2176, 0
        %v2179 = vxor.u32 %v2174, 2147483648
        %v2180 = vsel %vm2178, %v2173, %v2179
        %vm2181 = vcmp.eq.s32.totalorder %v2176, 2
        %v2182 = vxor.u32 %v2173, 2147483648
        %v2183 = vsel %vm2181, %v2182, %v2174
        %v2184 = vsel %vm2177, %v2180, %v2183
        %v2185 = vsel %vm2175, nan, %v2184
        %v2186 = vand.u32 2147483647, %v522
        %vm2187 = vcmp.le.f32.partialorder %v2186, 0.7853982
        %vm2188 = vcmp.lt.s32.totalorder %v522, 0
        %v2189 = vand.u32 %v522, 2139095040
        %v2190 = vshrl.u32 %v2189, 23
        %v2191 = vsub.s32 %v2190, 127
        %v2192 = vand.u32 2147483647, %v522
        %v2193 = vand.u32 %v2192, 8388607
        %v2194 = vor.u32 %v2193, 8388608
        %v2195 = vsub.s32 0, %v2194
        %v2196 = vadd.s32 %v2191, 1
        %vm2197 = vcmp.gt.s32.totalorder %v2196, 0
        %v2198 = vsel %vm2197, %v2196, 0
        %v2199 = vshrl.u32 %v2198, 5
        %v2200 = vand.u32 %v2198, 31
        %v2201 = vsub.s32 32, %v2200
        %v2202 = vshrl.u32 683565275, %v2201
        %v2203 = vshll.u32 683565275, %v2200
        %v2204 = vshrl.u32 2475754826, %v2201
        %v2205 = vor.u32 %v2203, %v2204
        %v2206 = vshll.u32 2475754826, %v2200
        %v2207 = vshrl.u32 2131351028, %v2201
        %v2208 = vor.u32 %v2206, %v2207
        %v2209 = vshll.u32 2131351028, %v2200
        %v2210 = vshrl.u32 2102212464, %v2201
        %v2211 = vor.u32 %v2209, %v2210
        %v2212 = vshll.u32 2102212464, %v2200
        %v2213 = vshrl.u32 920167782, %v2201
        %v2214 = vor.u32 %v2212, %v2213
        %v2215 = vshll.u32 920167782, %v2200
        %v2216 = vshrl.u32 1326507024, %v2201
        %v2217 = vor.u32 %v2215, %v2216
        %vm2218 = vcmp.lt.s32.totalorder %v2199, 1
        %vm2219 = vcmp.lt.s32.totalorder %v2199, 2
        %vm2220 = vcmp.lt.s32.totalorder %v2199, 3
        %vm2221 = vcmp.lt.s32.totalorder %v2199, 4
        %v2222 = vsel %vm2218, %v2202, %v2205
        %v2223 = vsel %vm2221, %v2211, 2102212464
        %v2224 = vsel %vm2220, %v2208, %v2223
        %v2225 = vsel %vm2219, %v2222, %v2224
        %v2226 = vsel %vm2218, %v2205, %v2208
        %v2227 = vsel %vm2221, %v2214, 920167782
        %v2228 = vsel %vm2220, %v2211, %v2227
        %v2229 = vsel %vm2219, %v2226, %v2228
        %v2230 = vsel %vm2218, %v2208, %v2211
        %v2231 = vsel %vm2221, %v2217, 1326507024
        %v2232 = vsel %vm2220, %v2214, %v2231
        %v2233 = vsel %vm2219, %v2230, %v2232
        %v2234 = vshll.u32 %v2194, 8
        %v2235 = vmul.u32.u64.compose %v2234, %v2233
        %v2236 = vextract.low.u32 %v2235
        %v2237 = vextract.high.u32 %v2235
        %v2238 = vmul.u32.u64.compose %v2234, %v2229
        %v2239 = vextract.low.u32 %v2238
        %v2240 = vextract.high.u32 %v2238
        %v2241 = vmul.u32 %v2234, %v2225
        %v2242 = vadd.s32 %v2237, %v2239
        %vm2243 = vc.u32 %v2237, %v2239
        %v2244 = vadd.s32 %v2240, 1
        %v2245 = vsel %vm2243, %v2244, %v2240
        %v2246 = vadd.s32 %v2241, %v2245
        %v2247 = vadd.s32 %v2246, 536870912
        %v2248 = vshrl.u32 %v2247, 30
        %v2249 = vshll.u32 %v2248, 30
        %v2250 = vsub.s32 %v2246, %v2249
        %vm2251 = vcmp.lt.s32.totalorder %v2250, 0
        %v2252 = vsub.s32 0, %v2250
        %v2253 = vsel %vm2251, %v2252, %v2250
        %v2254 = vclz %v2253
        %v2255 = vsub.s32 %v2254, 2
        %vm2256 = vcmp.gt.s32.totalorder 0, %v2255
        %v2257 = vsel %vm2256, 0, %v2255
        %v2258 = vsub.s32 32, %v2257
        %v2259 = vshll.u32 %v2250, %v2257
        %v2260 = vshrl.u32 %v2242, %v2258
        %v2261 = vor.u32 %v2259, %v2260
        %v2262 = vsub.s32 4294967266, %v2257
        %v2263 = vadd.s32 %v2262, 127
        %v2264 = vshll.u32 %v2263, 23
        %v2265 = vor.u32 4788187, %v2264
        %v2266 = vand.u32 2147483647, %v2265
        %v2268 = vcvt.s32.f32 %v2261
        %v2269 = vmul.f32 %v2268, %v2266
        %v2270 = vxor.u32 %v2269, 2147483648
        %v2271 = vsel %vm2188, %v2270, %v2269
        %v2272 = vsub.s32 4, %v2248
        %v2273 = vsel %vm2188, %v2272, %v2248
        %v2274 = vsel %vm2187, %v522, %v2271
        %v2275 = vsel %vm2187, 0, %v2273
        %v2276 = vcosq.f32.pop %v2274
        %v2277 = vsinq.f32.pop %v2274
        %vm2278 = vweird.f32 %v522
        %v2279 = vadd.s32 %v2275, 3
        %v2280 = vand.u32 %v2279, 3
        %vm2281 = vcmp.lt.s32.totalorder %v2280, 2
        %vm2282 = vcmp.eq.s32.totalorder %v2280, 0
        %v2283 = vxor.u32 %v2277, 2147483648
        %v2284 = vsel %vm2282, %v2276, %v2283
        %vm2285 = vcmp.eq.s32.totalorder %v2280, 2
        %v2286 = vxor.u32 %v2276, 2147483648
        %v2287 = vsel %vm2285, %v2286, %v2277
        %v2288 = vsel %vm2281, %v2284, %v2287
        %v2289 = vsel %vm2278, nan, %v2288
        %v2290 = vand.u32 2147483647, %v523
        %vm2291 = vcmp.le.f32.partialorder %v2290, 0.7853982
        %vm2292 = vcmp.lt.s32.totalorder %v523, 0
        %v2293 = vand.u32 %v523, 2139095040
        %v2294 = vshrl.u32 %v2293, 23
        %v2295 = vsub.s32 %v2294, 127
        %v2296 = vand.u32 2147483647, %v523
        %v2297 = vand.u32 %v2296, 8388607
        %v2298 = vor.u32 %v2297, 8388608
        %v2299 = vsub.s32 0, %v2298
        %v2300 = vadd.s32 %v2295, 1
        %vm2301 = vcmp.gt.s32.totalorder %v2300, 0
        %v2302 = vsel %vm2301, %v2300, 0
        %v2303 = vshrl.u32 %v2302, 5
        %v2304 = vand.u32 %v2302, 31
        %v2305 = vsub.s32 32, %v2304
        %v2306 = vshrl.u32 683565275, %v2305
        %v2307 = vshll.u32 683565275, %v2304
        %v2308 = vshrl.u32 2475754826, %v2305
        %v2309 = vor.u32 %v2307, %v2308
        %v2310 = vshll.u32 2475754826, %v2304
        %v2311 = vshrl.u32 2131351028, %v2305
        %v2312 = vor.u32 %v2310, %v2311
        %v2313 = vshll.u32 2131351028, %v2304
        %v2314 = vshrl.u32 2102212464, %v2305
        %v2315 = vor.u32 %v2313, %v2314
        %v2316 = vshll.u32 2102212464, %v2304
        %v2317 = vshrl.u32 920167782, %v2305
        %v2318 = vor.u32 %v2316, %v2317
        %v2319 = vshll.u32 920167782, %v2304
        %v2320 = vshrl.u32 1326507024, %v2305
        %v2321 = vor.u32 %v2319, %v2320
        %vm2322 = vcmp.lt.s32.totalorder %v2303, 1
        %vm2323 = vcmp.lt.s32.totalorder %v2303, 2
        %vm2324 = vcmp.lt.s32.totalorder %v2303, 3
        %vm2325 = vcmp.lt.s32.totalorder %v2303, 4
        %v2326 = vsel %vm2322, %v2306, %v2309
        %v2327 = vsel %vm2325, %v2315, 2102212464
        %v2328 = vsel %vm2324, %v2312, %v2327
        %v2329 = vsel %vm2323, %v2326, %v2328
        %v2330 = vsel %vm2322, %v2309, %v2312
        %v2331 = vsel %vm2325, %v2318, 920167782
        %v2332 = vsel %vm2324, %v2315, %v2331
        %v2333 = vsel %vm2323, %v2330, %v2332
        %v2334 = vsel %vm2322, %v2312, %v2315
        %v2335 = vsel %vm2325, %v2321, 1326507024
        %v2336 = vsel %vm2324, %v2318, %v2335
        %v2337 = vsel %vm2323, %v2334, %v2336
        %v2338 = vshll.u32 %v2298, 8
        %v2339 = vmul.u32.u64.compose %v2338, %v2337
        %v2340 = vextract.low.u32 %v2339
        %v2341 = vextract.high.u32 %v2339
        %v2342 = vmul.u32.u64.compose %v2338, %v2333
        %v2343 = vextract.low.u32 %v2342
        %v2344 = vextract.high.u32 %v2342
        %v2345 = vmul.u32 %v2338, %v2329
        %v2346 = vadd.s32 %v2341, %v2343
        %vm2347 = vc.u32 %v2341, %v2343
        %v2348 = vadd.s32 %v2344, 1
        %v2349 = vsel %vm2347, %v2348, %v2344
        %v2350 = vadd.s32 %v2345, %v2349
        %v2351 = vadd.s32 %v2350, 536870912
        %v2352 = vshrl.u32 %v2351, 30
        %v2353 = vshll.u32 %v2352, 30
        %v2354 = vsub.s32 %v2350, %v2353
        %vm2355 = vcmp.lt.s32.totalorder %v2354, 0
        %v2356 = vsub.s32 0, %v2354
        %v2357 = vsel %vm2355, %v2356, %v2354
        %v2358 = vclz %v2357
        %v2359 = vsub.s32 %v2358, 2
        %vm2360 = vcmp.gt.s32.totalorder 0, %v2359
        %v2361 = vsel %vm2360, 0, %v2359
        %v2362 = vsub.s32 32, %v2361
        %v2363 = vshll.u32 %v2354, %v2361
        %v2364 = vshrl.u32 %v2346, %v2362
        %v2365 = vor.u32 %v2363, %v2364
        %v2366 = vsub.s32 4294967266, %v2361
        %v2367 = vadd.s32 %v2366, 127
        %v2368 = vshll.u32 %v2367, 23
        %v2369 = vor.u32 4788187, %v2368
        %v2370 = vand.u32 2147483647, %v2369
        %v2372 = vcvt.s32.f32 %v2365
        %v2373 = vmul.f32 %v2372, %v2370
        %v2374 = vxor.u32 %v2373, 2147483648
        %v2375 = vsel %vm2292, %v2374, %v2373
        %v2376 = vsub.s32 4, %v2352
        %v2377 = vsel %vm2292, %v2376, %v2352
        %v2378 = vsel %vm2291, %v523, %v2375
        %v2379 = vsel %vm2291, 0, %v2377
        %v2380 = vcosq.f32.pop %v2378
        %v2381 = vsinq.f32.pop %v2378
        %vm2382 = vweird.f32 %v523
        %v2383 = vadd.s32 %v2379, 3
        %v2384 = vand.u32 %v2383, 3
        %vm2385 = vcmp.lt.s32.totalorder %v2384, 2
        %vm2386 = vcmp.eq.s32.totalorder %v2384, 0
        %v2387 = vxor.u32 %v2381, 2147483648
        %v2388 = vsel %vm2386, %v2380, %v2387
        %vm2389 = vcmp.eq.s32.totalorder %v2384, 2
        %v2390 = vxor.u32 %v2380, 2147483648
        %v2391 = vsel %vm2389, %v2390, %v2381
        %v2392 = vsel %vm2385, %v2388, %v2391
        %v2393 = vsel %vm2382, nan, %v2392
        %v2394 = vand.u32 2147483647, %v524
        %vm2395 = vcmp.le.f32.partialorder %v2394, 0.7853982
        %vm2396 = vcmp.lt.s32.totalorder %v524, 0
        %v2397 = vand.u32 %v524, 2139095040
        %v2398 = vshrl.u32 %v2397, 23
        %v2399 = vsub.s32 %v2398, 127
        %v2400 = vand.u32 2147483647, %v524
        %v2401 = vand.u32 %v2400, 8388607
        %v2402 = vor.u32 %v2401, 8388608
        %v2403 = vsub.s32 0, %v2402
        %v2404 = vadd.s32 %v2399, 1
        %vm2405 = vcmp.gt.s32.totalorder %v2404, 0
        %v2406 = vsel %vm2405, %v2404, 0
        %v2407 = vshrl.u32 %v2406, 5
        %v2408 = vand.u32 %v2406, 31
        %v2409 = vsub.s32 32, %v2408
        %v2410 = vshrl.u32 683565275, %v2409
        %v2411 = vshll.u32 683565275, %v2408
        %v2412 = vshrl.u32 2475754826, %v2409
        %v2413 = vor.u32 %v2411, %v2412
        %v2414 = vshll.u32 2475754826, %v2408
        %v2415 = vshrl.u32 2131351028, %v2409
        %v2416 = vor.u32 %v2414, %v2415
        %v2417 = vshll.u32 2131351028, %v2408
        %v2418 = vshrl.u32 2102212464, %v2409
        %v2419 = vor.u32 %v2417, %v2418
        %v2420 = vshll.u32 2102212464, %v2408
        %v2421 = vshrl.u32 920167782, %v2409
        %v2422 = vor.u32 %v2420, %v2421
        %v2423 = vshll.u32 920167782, %v2408
        %v2424 = vshrl.u32 1326507024, %v2409
        %v2425 = vor.u32 %v2423, %v2424
        %vm2426 = vcmp.lt.s32.totalorder %v2407, 1
        %vm2427 = vcmp.lt.s32.totalorder %v2407, 2
        %vm2428 = vcmp.lt.s32.totalorder %v2407, 3
        %vm2429 = vcmp.lt.s32.totalorder %v2407, 4
        %v2430 = vsel %vm2426, %v2410, %v2413
        %v2431 = vsel %vm2429, %v2419, 2102212464
        %v2432 = vsel %vm2428, %v2416, %v2431
        %v2433 = vsel %vm2427, %v2430, %v2432
        %v2434 = vsel %vm2426, %v2413, %v2416
        %v2435 = vsel %vm2429, %v2422, 920167782
        %v2436 = vsel %vm2428, %v2419, %v2435
        %v2437 = vsel %vm2427, %v2434, %v2436
        %v2438 = vsel %vm2426, %v2416, %v2419
        %v2439 = vsel %vm2429, %v2425, 1326507024
        %v2440 = vsel %vm2428, %v2422, %v2439
        %v2441 = vsel %vm2427, %v2438, %v2440
        %v2442 = vshll.u32 %v2402, 8
        %v2443 = vmul.u32.u64.compose %v2442, %v2441
        %v2444 = vextract.low.u32 %v2443
        %v2445 = vextract.high.u32 %v2443
        %v2446 = vmul.u32.u64.compose %v2442, %v2437
        %v2447 = vextract.low.u32 %v2446
        %v2448 = vextract.high.u32 %v2446
        %v2449 = vmul.u32 %v2442, %v2433
        %v2450 = vadd.s32 %v2445, %v2447
        %vm2451 = vc.u32 %v2445, %v2447
        %v2452 = vadd.s32 %v2448, 1
        %v2453 = vsel %vm2451, %v2452, %v2448
        %v2454 = vadd.s32 %v2449, %v2453
        %v2455 = vadd.s32 %v2454, 536870912
        %v2456 = vshrl.u32 %v2455, 30
        %v2457 = vshll.u32 %v2456, 30
        %v2458 = vsub.s32 %v2454, %v2457
        %vm2459 = vcmp.lt.s32.totalorder %v2458, 0
        %v2460 = vsub.s32 0, %v2458
        %v2461 = vsel %vm2459, %v2460, %v2458
        %v2462 = vclz %v2461
        %v2463 = vsub.s32 %v2462, 2
        %vm2464 = vcmp.gt.s32.totalorder 0, %v2463
        %v2465 = vsel %vm2464, 0, %v2463
        %v2466 = vsub.s32 32, %v2465
        %v2467 = vshll.u32 %v2458, %v2465
        %v2468 = vshrl.u32 %v2450, %v2466
        %v2469 = vor.u32 %v2467, %v2468
        %v2470 = vsub.s32 4294967266, %v2465
        %v2471 = vadd.s32 %v2470, 127
        %v2472 = vshll.u32 %v2471, 23
        %v2473 = vor.u32 4788187, %v2472
        %v2474 = vand.u32 2147483647, %v2473
        %v2476 = vcvt.s32.f32 %v2469
        %v2477 = vmul.f32 %v2476, %v2474
        %v2478 = vxor.u32 %v2477, 2147483648
        %v2479 = vsel %vm2396, %v2478, %v2477
        %v2480 = vsub.s32 4, %v2456
        %v2481 = vsel %vm2396, %v2480, %v2456
        %v2482 = vsel %vm2395, %v524, %v2479
        %v2483 = vsel %vm2395, 0, %v2481
        %v2484 = vcosq.f32.pop %v2482
        %v2485 = vsinq.f32.pop %v2482
        %vm2486 = vweird.f32 %v524
        %v2487 = vadd.s32 %v2483, 3
        %v2488 = vand.u32 %v2487, 3
        %vm2489 = vcmp.lt.s32.totalorder %v2488, 2
        %vm2490 = vcmp.eq.s32.totalorder %v2488, 0
        %v2491 = vxor.u32 %v2485, 2147483648
        %v2492 = vsel %vm2490, %v2484, %v2491
        %vm2493 = vcmp.eq.s32.totalorder %v2488, 2
        %v2494 = vxor.u32 %v2484, 2147483648
        %v2495 = vsel %vm2493, %v2494, %v2485
        %v2496 = vsel %vm2489, %v2492, %v2495
        %v2497 = vsel %vm2486, nan, %v2496
        %v2498 = vand.u32 2147483647, %v525
        %vm2499 = vcmp.le.f32.partialorder %v2498, 0.7853982
        %vm2500 = vcmp.lt.s32.totalorder %v525, 0
        %v2501 = vand.u32 %v525, 2139095040
        %v2502 = vshrl.u32 %v2501, 23
        %v2503 = vsub.s32 %v2502, 127
        %v2504 = vand.u32 2147483647, %v525
        %v2505 = vand.u32 %v2504, 8388607
        %v2506 = vor.u32 %v2505, 8388608
        %v2507 = vsub.s32 0, %v2506
        %v2508 = vadd.s32 %v2503, 1
        %vm2509 = vcmp.gt.s32.totalorder %v2508, 0
        %v2510 = vsel %vm2509, %v2508, 0
        %v2511 = vshrl.u32 %v2510, 5
        %v2512 = vand.u32 %v2510, 31
        %v2513 = vsub.s32 32, %v2512
        %v2514 = vshrl.u32 683565275, %v2513
        %v2515 = vshll.u32 683565275, %v2512
        %v2516 = vshrl.u32 2475754826, %v2513
        %v2517 = vor.u32 %v2515, %v2516
        %v2518 = vshll.u32 2475754826, %v2512
        %v2519 = vshrl.u32 2131351028, %v2513
        %v2520 = vor.u32 %v2518, %v2519
        %v2521 = vshll.u32 2131351028, %v2512
        %v2522 = vshrl.u32 2102212464, %v2513
        %v2523 = vor.u32 %v2521, %v2522
        %v2524 = vshll.u32 2102212464, %v2512
        %v2525 = vshrl.u32 920167782, %v2513
        %v2526 = vor.u32 %v2524, %v2525
        %v2527 = vshll.u32 920167782, %v2512
        %v2528 = vshrl.u32 1326507024, %v2513
        %v2529 = vor.u32 %v2527, %v2528
        %vm2530 = vcmp.lt.s32.totalorder %v2511, 1
        %vm2531 = vcmp.lt.s32.totalorder %v2511, 2
        %vm2532 = vcmp.lt.s32.totalorder %v2511, 3
        %vm2533 = vcmp.lt.s32.totalorder %v2511, 4
        %v2534 = vsel %vm2530, %v2514, %v2517
        %v2535 = vsel %vm2533, %v2523, 2102212464
        %v2536 = vsel %vm2532, %v2520, %v2535
        %v2537 = vsel %vm2531, %v2534, %v2536
        %v2538 = vsel %vm2530, %v2517, %v2520
        %v2539 = vsel %vm2533, %v2526, 920167782
        %v2540 = vsel %vm2532, %v2523, %v2539
        %v2541 = vsel %vm2531, %v2538, %v2540
        %v2542 = vsel %vm2530, %v2520, %v2523
        %v2543 = vsel %vm2533, %v2529, 1326507024
        %v2544 = vsel %vm2532, %v2526, %v2543
        %v2545 = vsel %vm2531, %v2542, %v2544
        %v2546 = vshll.u32 %v2506, 8
        %v2547 = vmul.u32.u64.compose %v2546, %v2545
        %v2548 = vextract.low.u32 %v2547
        %v2549 = vextract.high.u32 %v2547
        %v2550 = vmul.u32.u64.compose %v2546, %v2541
        %v2551 = vextract.low.u32 %v2550
        %v2552 = vextract.high.u32 %v2550
        %v2553 = vmul.u32 %v2546, %v2537
        %v2554 = vadd.s32 %v2549, %v2551
        %vm2555 = vc.u32 %v2549, %v2551
        %v2556 = vadd.s32 %v2552, 1
        %v2557 = vsel %vm2555, %v2556, %v2552
        %v2558 = vadd.s32 %v2553, %v2557
        %v2559 = vadd.s32 %v2558, 536870912
        %v2560 = vshrl.u32 %v2559, 30
        %v2561 = vshll.u32 %v2560, 30
        %v2562 = vsub.s32 %v2558, %v2561
        %vm2563 = vcmp.lt.s32.totalorder %v2562, 0
        %v2564 = vsub.s32 0, %v2562
        %v2565 = vsel %vm2563, %v2564, %v2562
        %v2566 = vclz %v2565
        %v2567 = vsub.s32 %v2566, 2
        %vm2568 = vcmp.gt.s32.totalorder 0, %v2567
        %v2569 = vsel %vm2568, 0, %v2567
        %v2570 = vsub.s32 32, %v2569
        %v2571 = vshll.u32 %v2562, %v2569
        %v2572 = vshrl.u32 %v2554, %v2570
        %v2573 = vor.u32 %v2571, %v2572
        %v2574 = vsub.s32 4294967266, %v2569
        %v2575 = vadd.s32 %v2574, 127
        %v2576 = vshll.u32 %v2575, 23
        %v2577 = vor.u32 4788187, %v2576
        %v2578 = vand.u32 2147483647, %v2577
        %v2580 = vcvt.s32.f32 %v2573
        %v2581 = vmul.f32 %v2580, %v2578
        %v2582 = vxor.u32 %v2581, 2147483648
        %v2583 = vsel %vm2500, %v2582, %v2581
        %v2584 = vsub.s32 4, %v2560
        %v2585 = vsel %vm2500, %v2584, %v2560
        %v2586 = vsel %vm2499, %v525, %v2583
        %v2587 = vsel %vm2499, 0, %v2585
        %v2588 = vcosq.f32.pop %v2586
        %v2589 = vsinq.f32.pop %v2586
        %vm2590 = vweird.f32 %v525
        %v2591 = vadd.s32 %v2587, 3
        %v2592 = vand.u32 %v2591, 3
        %vm2593 = vcmp.lt.s32.totalorder %v2592, 2
        %vm2594 = vcmp.eq.s32.totalorder %v2592, 0
        %v2595 = vxor.u32 %v2589, 2147483648
        %v2596 = vsel %vm2594, %v2588, %v2595
        %vm2597 = vcmp.eq.s32.totalorder %v2592, 2
        %v2598 = vxor.u32 %v2588, 2147483648
        %v2599 = vsel %vm2597, %v2598, %v2589
        %v2600 = vsel %vm2593, %v2596, %v2599
        %v2601 = vsel %vm2590, nan, %v2600
        %v2602 = vand.u32 2147483647, %v526
        %vm2603 = vcmp.le.f32.partialorder %v2602, 0.7853982
        %vm2604 = vcmp.lt.s32.totalorder %v526, 0
        %v2605 = vand.u32 %v526, 2139095040
        %v2606 = vshrl.u32 %v2605, 23
        %v2607 = vsub.s32 %v2606, 127
        %v2608 = vand.u32 2147483647, %v526
        %v2609 = vand.u32 %v2608, 8388607
        %v2610 = vor.u32 %v2609, 8388608
        %v2611 = vsub.s32 0, %v2610
        %v2612 = vadd.s32 %v2607, 1
        %vm2613 = vcmp.gt.s32.totalorder %v2612, 0
        %v2614 = vsel %vm2613, %v2612, 0
        %v2615 = vshrl.u32 %v2614, 5
        %v2616 = vand.u32 %v2614, 31
        %v2617 = vsub.s32 32, %v2616
        %v2618 = vshrl.u32 683565275, %v2617
        %v2619 = vshll.u32 683565275, %v2616
        %v2620 = vshrl.u32 2475754826, %v2617
        %v2621 = vor.u32 %v2619, %v2620
        %v2622 = vshll.u32 2475754826, %v2616
        %v2623 = vshrl.u32 2131351028, %v2617
        %v2624 = vor.u32 %v2622, %v2623
        %v2625 = vshll.u32 2131351028, %v2616
        %v2626 = vshrl.u32 2102212464, %v2617
        %v2627 = vor.u32 %v2625, %v2626
        %v2628 = vshll.u32 2102212464, %v2616
        %v2629 = vshrl.u32 920167782, %v2617
        %v2630 = vor.u32 %v2628, %v2629
        %v2631 = vshll.u32 920167782, %v2616
        %v2632 = vshrl.u32 1326507024, %v2617
        %v2633 = vor.u32 %v2631, %v2632
        %vm2634 = vcmp.lt.s32.totalorder %v2615, 1
        %vm2635 = vcmp.lt.s32.totalorder %v2615, 2
        %vm2636 = vcmp.lt.s32.totalorder %v2615, 3
        %vm2637 = vcmp.lt.s32.totalorder %v2615, 4
        %v2638 = vsel %vm2634, %v2618, %v2621
        %v2639 = vsel %vm2637, %v2627, 2102212464
        %v2640 = vsel %vm2636, %v2624, %v2639
        %v2641 = vsel %vm2635, %v2638, %v2640
        %v2642 = vsel %vm2634, %v2621, %v2624
        %v2643 = vsel %vm2637, %v2630, 920167782
        %v2644 = vsel %vm2636, %v2627, %v2643
        %v2645 = vsel %vm2635, %v2642, %v2644
        %v2646 = vsel %vm2634, %v2624, %v2627
        %v2647 = vsel %vm2637, %v2633, 1326507024
        %v2648 = vsel %vm2636, %v2630, %v2647
        %v2649 = vsel %vm2635, %v2646, %v2648
        %v2650 = vshll.u32 %v2610, 8
        %v2651 = vmul.u32.u64.compose %v2650, %v2649
        %v2652 = vextract.low.u32 %v2651
        %v2653 = vextract.high.u32 %v2651
        %v2654 = vmul.u32.u64.compose %v2650, %v2645
        %v2655 = vextract.low.u32 %v2654
        %v2656 = vextract.high.u32 %v2654
        %v2657 = vmul.u32 %v2650, %v2641
        %v2658 = vadd.s32 %v2653, %v2655
        %vm2659 = vc.u32 %v2653, %v2655
        %v2660 = vadd.s32 %v2656, 1
        %v2661 = vsel %vm2659, %v2660, %v2656
        %v2662 = vadd.s32 %v2657, %v2661
        %v2663 = vadd.s32 %v2662, 536870912
        %v2664 = vshrl.u32 %v2663, 30
        %v2665 = vshll.u32 %v2664, 30
        %v2666 = vsub.s32 %v2662, %v2665
        %vm2667 = vcmp.lt.s32.totalorder %v2666, 0
        %v2668 = vsub.s32 0, %v2666
        %v2669 = vsel %vm2667, %v2668, %v2666
        %v2670 = vclz %v2669
        %v2671 = vsub.s32 %v2670, 2
        %vm2672 = vcmp.gt.s32.totalorder 0, %v2671
        %v2673 = vsel %vm2672, 0, %v2671
        %v2674 = vsub.s32 32, %v2673
        %v2675 = vshll.u32 %v2666, %v2673
        %v2676 = vshrl.u32 %v2658, %v2674
        %v2677 = vor.u32 %v2675, %v2676
        %v2678 = vsub.s32 4294967266, %v2673
        %v2679 = vadd.s32 %v2678, 127
        %v2680 = vshll.u32 %v2679, 23
        %v2681 = vor.u32 4788187, %v2680
        %v2682 = vand.u32 2147483647, %v2681
        %v2684 = vcvt.s32.f32 %v2677
        %v2685 = vmul.f32 %v2684, %v2682
        %v2686 = vxor.u32 %v2685, 2147483648
        %v2687 = vsel %vm2604, %v2686, %v2685
        %v2688 = vsub.s32 4, %v2664
        %v2689 = vsel %vm2604, %v2688, %v2664
        %v2690 = vsel %vm2603, %v526, %v2687
        %v2691 = vsel %vm2603, 0, %v2689
        %v2692 = vcosq.f32.pop %v2690
        %v2693 = vsinq.f32.pop %v2690
        %vm2694 = vweird.f32 %v526
        %v2695 = vadd.s32 %v2691, 3
        %v2696 = vand.u32 %v2695, 3
        %vm2697 = vcmp.lt.s32.totalorder %v2696, 2
        %vm2698 = vcmp.eq.s32.totalorder %v2696, 0
        %v2699 = vxor.u32 %v2693, 2147483648
        %v2700 = vsel %vm2698, %v2692, %v2699
        %vm2701 = vcmp.eq.s32.totalorder %v2696, 2
        %v2702 = vxor.u32 %v2692, 2147483648
        %v2703 = vsel %vm2701, %v2702, %v2693
        %v2704 = vsel %vm2697, %v2700, %v2703
        %v2705 = vsel %vm2694, nan, %v2704
        %v2706 = vand.u32 2147483647, %v527
        %vm2707 = vcmp.le.f32.partialorder %v2706, 0.7853982
        %vm2708 = vcmp.lt.s32.totalorder %v527, 0
        %v2709 = vand.u32 %v527, 2139095040
        %v2710 = vshrl.u32 %v2709, 23
        %v2711 = vsub.s32 %v2710, 127
        %v2712 = vand.u32 2147483647, %v527
        %v2713 = vand.u32 %v2712, 8388607
        %v2714 = vor.u32 %v2713, 8388608
        %v2715 = vsub.s32 0, %v2714
        %v2716 = vadd.s32 %v2711, 1
        %vm2717 = vcmp.gt.s32.totalorder %v2716, 0
        %v2718 = vsel %vm2717, %v2716, 0
        %v2719 = vshrl.u32 %v2718, 5
        %v2720 = vand.u32 %v2718, 31
        %v2721 = vsub.s32 32, %v2720
        %v2722 = vshrl.u32 683565275, %v2721
        %v2723 = vshll.u32 683565275, %v2720
        %v2724 = vshrl.u32 2475754826, %v2721
        %v2725 = vor.u32 %v2723, %v2724
        %v2726 = vshll.u32 2475754826, %v2720
        %v2727 = vshrl.u32 2131351028, %v2721
        %v2728 = vor.u32 %v2726, %v2727
        %v2729 = vshll.u32 2131351028, %v2720
        %v2730 = vshrl.u32 2102212464, %v2721
        %v2731 = vor.u32 %v2729, %v2730
        %v2732 = vshll.u32 2102212464, %v2720
        %v2733 = vshrl.u32 920167782, %v2721
        %v2734 = vor.u32 %v2732, %v2733
        %v2735 = vshll.u32 920167782, %v2720
        %v2736 = vshrl.u32 1326507024, %v2721
        %v2737 = vor.u32 %v2735, %v2736
        %vm2738 = vcmp.lt.s32.totalorder %v2719, 1
        %vm2739 = vcmp.lt.s32.totalorder %v2719, 2
        %vm2740 = vcmp.lt.s32.totalorder %v2719, 3
        %vm2741 = vcmp.lt.s32.totalorder %v2719, 4
        %v2742 = vsel %vm2738, %v2722, %v2725
        %v2743 = vsel %vm2741, %v2731, 2102212464
        %v2744 = vsel %vm2740, %v2728, %v2743
        %v2745 = vsel %vm2739, %v2742, %v2744
        %v2746 = vsel %vm2738, %v2725, %v2728
        %v2747 = vsel %vm2741, %v2734, 920167782
        %v2748 = vsel %vm2740, %v2731, %v2747
        %v2749 = vsel %vm2739, %v2746, %v2748
        %v2750 = vsel %vm2738, %v2728, %v2731
        %v2751 = vsel %vm2741, %v2737, 1326507024
        %v2752 = vsel %vm2740, %v2734, %v2751
        %v2753 = vsel %vm2739, %v2750, %v2752
        %v2754 = vshll.u32 %v2714, 8
        %v2755 = vmul.u32.u64.compose %v2754, %v2753
        %v2756 = vextract.low.u32 %v2755
        %v2757 = vextract.high.u32 %v2755
        %v2758 = vmul.u32.u64.compose %v2754, %v2749
        %v2759 = vextract.low.u32 %v2758
        %v2760 = vextract.high.u32 %v2758
        %v2761 = vmul.u32 %v2754, %v2745
        %v2762 = vadd.s32 %v2757, %v2759
        %vm2763 = vc.u32 %v2757, %v2759
        %v2764 = vadd.s32 %v2760, 1
        %v2765 = vsel %vm2763, %v2764, %v2760
        %v2766 = vadd.s32 %v2761, %v2765
        %v2767 = vadd.s32 %v2766, 536870912
        %v2768 = vshrl.u32 %v2767, 30
        %v2769 = vshll.u32 %v2768, 30
        %v2770 = vsub.s32 %v2766, %v2769
        %vm2771 = vcmp.lt.s32.totalorder %v2770, 0
        %v2772 = vsub.s32 0, %v2770
        %v2773 = vsel %vm2771, %v2772, %v2770
        %v2774 = vclz %v2773
        %v2775 = vsub.s32 %v2774, 2
        %vm2776 = vcmp.gt.s32.totalorder 0, %v2775
        %v2777 = vsel %vm2776, 0, %v2775
        %v2778 = vsub.s32 32, %v2777
        %v2779 = vshll.u32 %v2770, %v2777
        %v2780 = vshrl.u32 %v2762, %v2778
        %v2781 = vor.u32 %v2779, %v2780
        %v2782 = vsub.s32 4294967266, %v2777
        %v2783 = vadd.s32 %v2782, 127
        %v2784 = vshll.u32 %v2783, 23
        %v2785 = vor.u32 4788187, %v2784
        %v2786 = vand.u32 2147483647, %v2785
        %v2788 = vcvt.s32.f32 %v2781
        %v2789 = vmul.f32 %v2788, %v2786
        %v2790 = vxor.u32 %v2789, 2147483648
        %v2791 = vsel %vm2708, %v2790, %v2789
        %v2792 = vsub.s32 4, %v2768
        %v2793 = vsel %vm2708, %v2792, %v2768
        %v2794 = vsel %vm2707, %v527, %v2791
        %v2795 = vsel %vm2707, 0, %v2793
        %v2796 = vcosq.f32.pop %v2794
        %v2797 = vsinq.f32.pop %v2794
        %vm2798 = vweird.f32 %v527
        %v2799 = vadd.s32 %v2795, 3
        %v2800 = vand.u32 %v2799, 3
        %vm2801 = vcmp.lt.s32.totalorder %v2800, 2
        %vm2802 = vcmp.eq.s32.totalorder %v2800, 0
        %v2803 = vxor.u32 %v2797, 2147483648
        %v2804 = vsel %vm2802, %v2796, %v2803
        %vm2805 = vcmp.eq.s32.totalorder %v2800, 2
        %v2806 = vxor.u32 %v2796, 2147483648
        %v2807 = vsel %vm2805, %v2806, %v2797
        %v2808 = vsel %vm2801, %v2804, %v2807
        %v2809 = vsel %vm2798, nan, %v2808
        %v2810 = vand.u32 2147483647, %v528
        %vm2811 = vcmp.le.f32.partialorder %v2810, 0.7853982
        %vm2812 = vcmp.lt.s32.totalorder %v528, 0
        %v2813 = vand.u32 %v528, 2139095040
        %v2814 = vshrl.u32 %v2813, 23
        %v2815 = vsub.s32 %v2814, 127
        %v2816 = vand.u32 2147483647, %v528
        %v2817 = vand.u32 %v2816, 8388607
        %v2818 = vor.u32 %v2817, 8388608
        %v2819 = vsub.s32 0, %v2818
        %v2820 = vadd.s32 %v2815, 1
        %vm2821 = vcmp.gt.s32.totalorder %v2820, 0
        %v2822 = vsel %vm2821, %v2820, 0
        %v2823 = vshrl.u32 %v2822, 5
        %v2824 = vand.u32 %v2822, 31
        %v2825 = vsub.s32 32, %v2824
        %v2826 = vshrl.u32 683565275, %v2825
        %v2827 = vshll.u32 683565275, %v2824
        %v2828 = vshrl.u32 2475754826, %v2825
        %v2829 = vor.u32 %v2827, %v2828
        %v2830 = vshll.u32 2475754826, %v2824
        %v2831 = vshrl.u32 2131351028, %v2825
        %v2832 = vor.u32 %v2830, %v2831
        %v2833 = vshll.u32 2131351028, %v2824
        %v2834 = vshrl.u32 2102212464, %v2825
        %v2835 = vor.u32 %v2833, %v2834
        %v2836 = vshll.u32 2102212464, %v2824
        %v2837 = vshrl.u32 920167782, %v2825
        %v2838 = vor.u32 %v2836, %v2837
        %v2839 = vshll.u32 920167782, %v2824
        %v2840 = vshrl.u32 1326507024, %v2825
        %v2841 = vor.u32 %v2839, %v2840
        %vm2842 = vcmp.lt.s32.totalorder %v2823, 1
        %vm2843 = vcmp.lt.s32.totalorder %v2823, 2
        %vm2844 = vcmp.lt.s32.totalorder %v2823, 3
        %vm2845 = vcmp.lt.s32.totalorder %v2823, 4
        %v2846 = vsel %vm2842, %v2826, %v2829
        %v2847 = vsel %vm2845, %v2835, 2102212464
        %v2848 = vsel %vm2844, %v2832, %v2847
        %v2849 = vsel %vm2843, %v2846, %v2848
        %v2850 = vsel %vm2842, %v2829, %v2832
        %v2851 = vsel %vm2845, %v2838, 920167782
        %v2852 = vsel %vm2844, %v2835, %v2851
        %v2853 = vsel %vm2843, %v2850, %v2852
        %v2854 = vsel %vm2842, %v2832, %v2835
        %v2855 = vsel %vm2845, %v2841, 1326507024
        %v2856 = vsel %vm2844, %v2838, %v2855
        %v2857 = vsel %vm2843, %v2854, %v2856
        %v2858 = vshll.u32 %v2818, 8
        %v2859 = vmul.u32.u64.compose %v2858, %v2857
        %v2860 = vextract.low.u32 %v2859
        %v2861 = vextract.high.u32 %v2859
        %v2862 = vmul.u32.u64.compose %v2858, %v2853
        %v2863 = vextract.low.u32 %v2862
        %v2864 = vextract.high.u32 %v2862
        %v2865 = vmul.u32 %v2858, %v2849
        %v2866 = vadd.s32 %v2861, %v2863
        %vm2867 = vc.u32 %v2861, %v2863
        %v2868 = vadd.s32 %v2864, 1
        %v2869 = vsel %vm2867, %v2868, %v2864
        %v2870 = vadd.s32 %v2865, %v2869
        %v2871 = vadd.s32 %v2870, 536870912
        %v2872 = vshrl.u32 %v2871, 30
        %v2873 = vshll.u32 %v2872, 30
        %v2874 = vsub.s32 %v2870, %v2873
        %vm2875 = vcmp.lt.s32.totalorder %v2874, 0
        %v2876 = vsub.s32 0, %v2874
        %v2877 = vsel %vm2875, %v2876, %v2874
        %v2878 = vclz %v2877
        %v2879 = vsub.s32 %v2878, 2
        %vm2880 = vcmp.gt.s32.totalorder 0, %v2879
        %v2881 = vsel %vm2880, 0, %v2879
        %v2882 = vsub.s32 32, %v2881
        %v2883 = vshll.u32 %v2874, %v2881
        %v2884 = vshrl.u32 %v2866, %v2882
        %v2885 = vor.u32 %v2883, %v2884
        %v2886 = vsub.s32 4294967266, %v2881
        %v2887 = vadd.s32 %v2886, 127
        %v2888 = vshll.u32 %v2887, 23
        %v2889 = vor.u32 4788187, %v2888
        %v2890 = vand.u32 2147483647, %v2889
        %v2892 = vcvt.s32.f32 %v2885
        %v2893 = vmul.f32 %v2892, %v2890
        %v2894 = vxor.u32 %v2893, 2147483648
        %v2895 = vsel %vm2812, %v2894, %v2893
        %v2896 = vsub.s32 4, %v2872
        %v2897 = vsel %vm2812, %v2896, %v2872
        %v2898 = vsel %vm2811, %v528, %v2895
        %v2899 = vsel %vm2811, 0, %v2897
        %v2900 = vcosq.f32.pop %v2898
        %v2901 = vsinq.f32.pop %v2898
        %vm2902 = vweird.f32 %v528
        %v2903 = vadd.s32 %v2899, 3
        %v2904 = vand.u32 %v2903, 3
        %vm2905 = vcmp.lt.s32.totalorder %v2904, 2
        %vm2906 = vcmp.eq.s32.totalorder %v2904, 0
        %v2907 = vxor.u32 %v2901, 2147483648
        %v2908 = vsel %vm2906, %v2900, %v2907
        %vm2909 = vcmp.eq.s32.totalorder %v2904, 2
        %v2910 = vxor.u32 %v2900, 2147483648
        %v2911 = vsel %vm2909, %v2910, %v2901
        %v2912 = vsel %vm2905, %v2908, %v2911
        %v2913 = vsel %vm2902, nan, %v2912
        %v2914 = vand.u32 2147483647, %v529
        %vm2915 = vcmp.le.f32.partialorder %v2914, 0.7853982
        %vm2916 = vcmp.lt.s32.totalorder %v529, 0
        %v2917 = vand.u32 %v529, 2139095040
        %v2918 = vshrl.u32 %v2917, 23
        %v2919 = vsub.s32 %v2918, 127
        %v2920 = vand.u32 2147483647, %v529
        %v2921 = vand.u32 %v2920, 8388607
        %v2922 = vor.u32 %v2921, 8388608
        %v2923 = vsub.s32 0, %v2922
        %v2924 = vadd.s32 %v2919, 1
        %vm2925 = vcmp.gt.s32.totalorder %v2924, 0
        %v2926 = vsel %vm2925, %v2924, 0
        %v2927 = vshrl.u32 %v2926, 5
        %v2928 = vand.u32 %v2926, 31
        %v2929 = vsub.s32 32, %v2928
        %v2930 = vshrl.u32 683565275, %v2929
        %v2931 = vshll.u32 683565275, %v2928
        %v2932 = vshrl.u32 2475754826, %v2929
        %v2933 = vor.u32 %v2931, %v2932
        %v2934 = vshll.u32 2475754826, %v2928
        %v2935 = vshrl.u32 2131351028, %v2929
        %v2936 = vor.u32 %v2934, %v2935
        %v2937 = vshll.u32 2131351028, %v2928
        %v2938 = vshrl.u32 2102212464, %v2929
        %v2939 = vor.u32 %v2937, %v2938
        %v2940 = vshll.u32 2102212464, %v2928
        %v2941 = vshrl.u32 920167782, %v2929
        %v2942 = vor.u32 %v2940, %v2941
        %v2943 = vshll.u32 920167782, %v2928
        %v2944 = vshrl.u32 1326507024, %v2929
        %v2945 = vor.u32 %v2943, %v2944
        %vm2946 = vcmp.lt.s32.totalorder %v2927, 1
        %vm2947 = vcmp.lt.s32.totalorder %v2927, 2
        %vm2948 = vcmp.lt.s32.totalorder %v2927, 3
        %vm2949 = vcmp.lt.s32.totalorder %v2927, 4
        %v2950 = vsel %vm2946, %v2930, %v2933
        %v2951 = vsel %vm2949, %v2939, 2102212464
        %v2952 = vsel %vm2948, %v2936, %v2951
        %v2953 = vsel %vm2947, %v2950, %v2952
        %v2954 = vsel %vm2946, %v2933, %v2936
        %v2955 = vsel %vm2949, %v2942, 920167782
        %v2956 = vsel %vm2948, %v2939, %v2955
        %v2957 = vsel %vm2947, %v2954, %v2956
        %v2958 = vsel %vm2946, %v2936, %v2939
        %v2959 = vsel %vm2949, %v2945, 1326507024
        %v2960 = vsel %vm2948, %v2942, %v2959
        %v2961 = vsel %vm2947, %v2958, %v2960
        %v2962 = vshll.u32 %v2922, 8
        %v2963 = vmul.u32.u64.compose %v2962, %v2961
        %v2964 = vextract.low.u32 %v2963
        %v2965 = vextract.high.u32 %v2963
        %v2966 = vmul.u32.u64.compose %v2962, %v2957
        %v2967 = vextract.low.u32 %v2966
        %v2968 = vextract.high.u32 %v2966
        %v2969 = vmul.u32 %v2962, %v2953
        %v2970 = vadd.s32 %v2965, %v2967
        %vm2971 = vc.u32 %v2965, %v2967
        %v2972 = vadd.s32 %v2968, 1
        %v2973 = vsel %vm2971, %v2972, %v2968
        %v2974 = vadd.s32 %v2969, %v2973
        %v2975 = vadd.s32 %v2974, 536870912
        %v2976 = vshrl.u32 %v2975, 30
        %v2977 = vshll.u32 %v2976, 30
        %v2978 = vsub.s32 %v2974, %v2977
        %vm2979 = vcmp.lt.s32.totalorder %v2978, 0
        %v2980 = vsub.s32 0, %v2978
        %v2981 = vsel %vm2979, %v2980, %v2978
        %v2982 = vclz %v2981
        %v2983 = vsub.s32 %v2982, 2
        %vm2984 = vcmp.gt.s32.totalorder 0, %v2983
        %v2985 = vsel %vm2984, 0, %v2983
        %v2986 = vsub.s32 32, %v2985
        %v2987 = vshll.u32 %v2978, %v2985
        %v2988 = vshrl.u32 %v2970, %v2986
        %v2989 = vor.u32 %v2987, %v2988
        %v2990 = vsub.s32 4294967266, %v2985
        %v2991 = vadd.s32 %v2990, 127
        %v2992 = vshll.u32 %v2991, 23
        %v2993 = vor.u32 4788187, %v2992
        %v2994 = vand.u32 2147483647, %v2993
        %v2996 = vcvt.s32.f32 %v2989
        %v2997 = vmul.f32 %v2996, %v2994
        %v2998 = vxor.u32 %v2997, 2147483648
        %v2999 = vsel %vm2916, %v2998, %v2997
        %v3000 = vsub.s32 4, %v2976
        %v3001 = vsel %vm2916, %v3000, %v2976
        %v3002 = vsel %vm2915, %v529, %v2999
        %v3003 = vsel %vm2915, 0, %v3001
        %v3004 = vcosq.f32.pop %v3002
        %v3005 = vsinq.f32.pop %v3002
        %vm3006 = vweird.f32 %v529
        %v3007 = vadd.s32 %v3003, 3
        %v3008 = vand.u32 %v3007, 3
        %vm3009 = vcmp.lt.s32.totalorder %v3008, 2
        %vm3010 = vcmp.eq.s32.totalorder %v3008, 0
        %v3011 = vxor.u32 %v3005, 2147483648
        %v3012 = vsel %vm3010, %v3004, %v3011
        %vm3013 = vcmp.eq.s32.totalorder %v3008, 2
        %v3014 = vxor.u32 %v3004, 2147483648
        %v3015 = vsel %vm3013, %v3014, %v3005
        %v3016 = vsel %vm3009, %v3012, %v3015
        %v3017 = vsel %vm3006, nan, %v3016
        %v3018 = vand.u32 2147483647, %v530
        %vm3019 = vcmp.le.f32.partialorder %v3018, 0.7853982
        %vm3020 = vcmp.lt.s32.totalorder %v530, 0
        %v3021 = vand.u32 %v530, 2139095040
        %v3022 = vshrl.u32 %v3021, 23
        %v3023 = vsub.s32 %v3022, 127
        %v3024 = vand.u32 2147483647, %v530
        %v3025 = vand.u32 %v3024, 8388607
        %v3026 = vor.u32 %v3025, 8388608
        %v3027 = vsub.s32 0, %v3026
        %v3028 = vadd.s32 %v3023, 1
        %vm3029 = vcmp.gt.s32.totalorder %v3028, 0
        %v3030 = vsel %vm3029, %v3028, 0
        %v3031 = vshrl.u32 %v3030, 5
        %v3032 = vand.u32 %v3030, 31
        %v3033 = vsub.s32 32, %v3032
        %v3034 = vshrl.u32 683565275, %v3033
        %v3035 = vshll.u32 683565275, %v3032
        %v3036 = vshrl.u32 2475754826, %v3033
        %v3037 = vor.u32 %v3035, %v3036
        %v3038 = vshll.u32 2475754826, %v3032
        %v3039 = vshrl.u32 2131351028, %v3033
        %v3040 = vor.u32 %v3038, %v3039
        %v3041 = vshll.u32 2131351028, %v3032
        %v3042 = vshrl.u32 2102212464, %v3033
        %v3043 = vor.u32 %v3041, %v3042
        %v3044 = vshll.u32 2102212464, %v3032
        %v3045 = vshrl.u32 920167782, %v3033
        %v3046 = vor.u32 %v3044, %v3045
        %v3047 = vshll.u32 920167782, %v3032
        %v3048 = vshrl.u32 1326507024, %v3033
        %v3049 = vor.u32 %v3047, %v3048
        %vm3050 = vcmp.lt.s32.totalorder %v3031, 1
        %vm3051 = vcmp.lt.s32.totalorder %v3031, 2
        %vm3052 = vcmp.lt.s32.totalorder %v3031, 3
        %vm3053 = vcmp.lt.s32.totalorder %v3031, 4
        %v3054 = vsel %vm3050, %v3034, %v3037
        %v3055 = vsel %vm3053, %v3043, 2102212464
        %v3056 = vsel %vm3052, %v3040, %v3055
        %v3057 = vsel %vm3051, %v3054, %v3056
        %v3058 = vsel %vm3050, %v3037, %v3040
        %v3059 = vsel %vm3053, %v3046, 920167782
        %v3060 = vsel %vm3052, %v3043, %v3059
        %v3061 = vsel %vm3051, %v3058, %v3060
        %v3062 = vsel %vm3050, %v3040, %v3043
        %v3063 = vsel %vm3053, %v3049, 1326507024
        %v3064 = vsel %vm3052, %v3046, %v3063
        %v3065 = vsel %vm3051, %v3062, %v3064
        %v3066 = vshll.u32 %v3026, 8
        %v3067 = vmul.u32.u64.compose %v3066, %v3065
        %v3068 = vextract.low.u32 %v3067
        %v3069 = vextract.high.u32 %v3067
        %v3070 = vmul.u32.u64.compose %v3066, %v3061
        %v3071 = vextract.low.u32 %v3070
        %v3072 = vextract.high.u32 %v3070
        %v3073 = vmul.u32 %v3066, %v3057
        %v3074 = vadd.s32 %v3069, %v3071
        %vm3075 = vc.u32 %v3069, %v3071
        %v3076 = vadd.s32 %v3072, 1
        %v3077 = vsel %vm3075, %v3076, %v3072
        %v3078 = vadd.s32 %v3073, %v3077
        %v3079 = vadd.s32 %v3078, 536870912
        %v3080 = vshrl.u32 %v3079, 30
        %v3081 = vshll.u32 %v3080, 30
        %v3082 = vsub.s32 %v3078, %v3081
        %vm3083 = vcmp.lt.s32.totalorder %v3082, 0
        %v3084 = vsub.s32 0, %v3082
        %v3085 = vsel %vm3083, %v3084, %v3082
        %v3086 = vclz %v3085
        %v3087 = vsub.s32 %v3086, 2
        %vm3088 = vcmp.gt.s32.totalorder 0, %v3087
        %v3089 = vsel %vm3088, 0, %v3087
        %v3090 = vsub.s32 32, %v3089
        %v3091 = vshll.u32 %v3082, %v3089
        %v3092 = vshrl.u32 %v3074, %v3090
        %v3093 = vor.u32 %v3091, %v3092
        %v3094 = vsub.s32 4294967266, %v3089
        %v3095 = vadd.s32 %v3094, 127
        %v3096 = vshll.u32 %v3095, 23
        %v3097 = vor.u32 4788187, %v3096
        %v3098 = vand.u32 2147483647, %v3097
        %v3100 = vcvt.s32.f32 %v3093
        %v3101 = vmul.f32 %v3100, %v3098
        %v3102 = vxor.u32 %v3101, 2147483648
        %v3103 = vsel %vm3020, %v3102, %v3101
        %v3104 = vsub.s32 4, %v3080
        %v3105 = vsel %vm3020, %v3104, %v3080
        %v3106 = vsel %vm3019, %v530, %v3103
        %v3107 = vsel %vm3019, 0, %v3105
        %v3108 = vcosq.f32.pop %v3106
        %v3109 = vsinq.f32.pop %v3106
        %vm3110 = vweird.f32 %v530
        %v3111 = vadd.s32 %v3107, 3
        %v3112 = vand.u32 %v3111, 3
        %vm3113 = vcmp.lt.s32.totalorder %v3112, 2
        %vm3114 = vcmp.eq.s32.totalorder %v3112, 0
        %v3115 = vxor.u32 %v3109, 2147483648
        %v3116 = vsel %vm3114, %v3108, %v3115
        %vm3117 = vcmp.eq.s32.totalorder %v3112, 2
        %v3118 = vxor.u32 %v3108, 2147483648
        %v3119 = vsel %vm3117, %v3118, %v3109
        %v3120 = vsel %vm3113, %v3116, %v3119
        %v3121 = vsel %vm3110, nan, %v3120
        %v3122 = vand.u32 2147483647, %v531
        %vm3123 = vcmp.le.f32.partialorder %v3122, 0.7853982
        %vm3124 = vcmp.lt.s32.totalorder %v531, 0
        %v3125 = vand.u32 %v531, 2139095040
        %v3126 = vshrl.u32 %v3125, 23
        %v3127 = vsub.s32 %v3126, 127
        %v3128 = vand.u32 2147483647, %v531
        %v3129 = vand.u32 %v3128, 8388607
        %v3130 = vor.u32 %v3129, 8388608
        %v3131 = vsub.s32 0, %v3130
        %v3132 = vadd.s32 %v3127, 1
        %vm3133 = vcmp.gt.s32.totalorder %v3132, 0
        %v3134 = vsel %vm3133, %v3132, 0
        %v3135 = vshrl.u32 %v3134, 5
        %v3136 = vand.u32 %v3134, 31
        %v3137 = vsub.s32 32, %v3136
        %v3138 = vshrl.u32 683565275, %v3137
        %v3139 = vshll.u32 683565275, %v3136
        %v3140 = vshrl.u32 2475754826, %v3137
        %v3141 = vor.u32 %v3139, %v3140
        %v3142 = vshll.u32 2475754826, %v3136
        %v3143 = vshrl.u32 2131351028, %v3137
        %v3144 = vor.u32 %v3142, %v3143
        %v3145 = vshll.u32 2131351028, %v3136
        %v3146 = vshrl.u32 2102212464, %v3137
        %v3147 = vor.u32 %v3145, %v3146
        %v3148 = vshll.u32 2102212464, %v3136
        %v3149 = vshrl.u32 920167782, %v3137
        %v3150 = vor.u32 %v3148, %v3149
        %v3151 = vshll.u32 920167782, %v3136
        %v3152 = vshrl.u32 1326507024, %v3137
        %v3153 = vor.u32 %v3151, %v3152
        %vm3154 = vcmp.lt.s32.totalorder %v3135, 1
        %vm3155 = vcmp.lt.s32.totalorder %v3135, 2
        %vm3156 = vcmp.lt.s32.totalorder %v3135, 3
        %vm3157 = vcmp.lt.s32.totalorder %v3135, 4
        %v3158 = vsel %vm3154, %v3138, %v3141
        %v3159 = vsel %vm3157, %v3147, 2102212464
        %v3160 = vsel %vm3156, %v3144, %v3159
        %v3161 = vsel %vm3155, %v3158, %v3160
        %v3162 = vsel %vm3154, %v3141, %v3144
        %v3163 = vsel %vm3157, %v3150, 920167782
        %v3164 = vsel %vm3156, %v3147, %v3163
        %v3165 = vsel %vm3155, %v3162, %v3164
        %v3166 = vsel %vm3154, %v3144, %v3147
        %v3167 = vsel %vm3157, %v3153, 1326507024
        %v3168 = vsel %vm3156, %v3150, %v3167
        %v3169 = vsel %vm3155, %v3166, %v3168
        %v3170 = vshll.u32 %v3130, 8
        %v3171 = vmul.u32.u64.compose %v3170, %v3169
        %v3172 = vextract.low.u32 %v3171
        %v3173 = vextract.high.u32 %v3171
        %v3174 = vmul.u32.u64.compose %v3170, %v3165
        %v3175 = vextract.low.u32 %v3174
        %v3176 = vextract.high.u32 %v3174
        %v3177 = vmul.u32 %v3170, %v3161
        %v3178 = vadd.s32 %v3173, %v3175
        %vm3179 = vc.u32 %v3173, %v3175
        %v3180 = vadd.s32 %v3176, 1
        %v3181 = vsel %vm3179, %v3180, %v3176
        %v3182 = vadd.s32 %v3177, %v3181
        %v3183 = vadd.s32 %v3182, 536870912
        %v3184 = vshrl.u32 %v3183, 30
        %v3185 = vshll.u32 %v3184, 30
        %v3186 = vsub.s32 %v3182, %v3185
        %vm3187 = vcmp.lt.s32.totalorder %v3186, 0
        %v3188 = vsub.s32 0, %v3186
        %v3189 = vsel %vm3187, %v3188, %v3186
        %v3190 = vclz %v3189
        %v3191 = vsub.s32 %v3190, 2
        %vm3192 = vcmp.gt.s32.totalorder 0, %v3191
        %v3193 = vsel %vm3192, 0, %v3191
        %v3194 = vsub.s32 32, %v3193
        %v3195 = vshll.u32 %v3186, %v3193
        %v3196 = vshrl.u32 %v3178, %v3194
        %v3197 = vor.u32 %v3195, %v3196
        %v3198 = vsub.s32 4294967266, %v3193
        %v3199 = vadd.s32 %v3198, 127
        %v3200 = vshll.u32 %v3199, 23
        %v3201 = vor.u32 4788187, %v3200
        %v3202 = vand.u32 2147483647, %v3201
        %v3204 = vcvt.s32.f32 %v3197
        %v3205 = vmul.f32 %v3204, %v3202
        %v3206 = vxor.u32 %v3205, 2147483648
        %v3207 = vsel %vm3124, %v3206, %v3205
        %v3208 = vsub.s32 4, %v3184
        %v3209 = vsel %vm3124, %v3208, %v3184
        %v3210 = vsel %vm3123, %v531, %v3207
        %v3211 = vsel %vm3123, 0, %v3209
        %v3212 = vcosq.f32.pop %v3210
        %v3213 = vsinq.f32.pop %v3210
        %vm3214 = vweird.f32 %v531
        %v3215 = vadd.s32 %v3211, 3
        %v3216 = vand.u32 %v3215, 3
        %vm3217 = vcmp.lt.s32.totalorder %v3216, 2
        %vm3218 = vcmp.eq.s32.totalorder %v3216, 0
        %v3219 = vxor.u32 %v3213, 2147483648
        %v3220 = vsel %vm3218, %v3212, %v3219
        %vm3221 = vcmp.eq.s32.totalorder %v3216, 2
        %v3222 = vxor.u32 %v3212, 2147483648
        %v3223 = vsel %vm3221, %v3222, %v3213
        %v3224 = vsel %vm3217, %v3220, %v3223
        %v3225 = vsel %vm3214, nan, %v3224
        %v3226 = vand.u32 2147483647, %v532
        %vm3227 = vcmp.le.f32.partialorder %v3226, 0.7853982
        %vm3228 = vcmp.lt.s32.totalorder %v532, 0
        %v3229 = vand.u32 %v532, 2139095040
        %v3230 = vshrl.u32 %v3229, 23
        %v3231 = vsub.s32 %v3230, 127
        %v3232 = vand.u32 2147483647, %v532
        %v3233 = vand.u32 %v3232, 8388607
        %v3234 = vor.u32 %v3233, 8388608
        %v3235 = vsub.s32 0, %v3234
        %v3236 = vadd.s32 %v3231, 1
        %vm3237 = vcmp.gt.s32.totalorder %v3236, 0
        %v3238 = vsel %vm3237, %v3236, 0
        %v3239 = vshrl.u32 %v3238, 5
        %v3240 = vand.u32 %v3238, 31
        %v3241 = vsub.s32 32, %v3240
        %v3242 = vshrl.u32 683565275, %v3241
        %v3243 = vshll.u32 683565275, %v3240
        %v3244 = vshrl.u32 2475754826, %v3241
        %v3245 = vor.u32 %v3243, %v3244
        %v3246 = vshll.u32 2475754826, %v3240
        %v3247 = vshrl.u32 2131351028, %v3241
        %v3248 = vor.u32 %v3246, %v3247
        %v3249 = vshll.u32 2131351028, %v3240
        %v3250 = vshrl.u32 2102212464, %v3241
        %v3251 = vor.u32 %v3249, %v3250
        %v3252 = vshll.u32 2102212464, %v3240
        %v3253 = vshrl.u32 920167782, %v3241
        %v3254 = vor.u32 %v3252, %v3253
        %v3255 = vshll.u32 920167782, %v3240
        %v3256 = vshrl.u32 1326507024, %v3241
        %v3257 = vor.u32 %v3255, %v3256
        %vm3258 = vcmp.lt.s32.totalorder %v3239, 1
        %vm3259 = vcmp.lt.s32.totalorder %v3239, 2
        %vm3260 = vcmp.lt.s32.totalorder %v3239, 3
        %vm3261 = vcmp.lt.s32.totalorder %v3239, 4
        %v3262 = vsel %vm3258, %v3242, %v3245
        %v3263 = vsel %vm3261, %v3251, 2102212464
        %v3264 = vsel %vm3260, %v3248, %v3263
        %v3265 = vsel %vm3259, %v3262, %v3264
        %v3266 = vsel %vm3258, %v3245, %v3248
        %v3267 = vsel %vm3261, %v3254, 920167782
        %v3268 = vsel %vm3260, %v3251, %v3267
        %v3269 = vsel %vm3259, %v3266, %v3268
        %v3270 = vsel %vm3258, %v3248, %v3251
        %v3271 = vsel %vm3261, %v3257, 1326507024
        %v3272 = vsel %vm3260, %v3254, %v3271
        %v3273 = vsel %vm3259, %v3270, %v3272
        %v3274 = vshll.u32 %v3234, 8
        %v3275 = vmul.u32.u64.compose %v3274, %v3273
        %v3276 = vextract.low.u32 %v3275
        %v3277 = vextract.high.u32 %v3275
        %v3278 = vmul.u32.u64.compose %v3274, %v3269
        %v3279 = vextract.low.u32 %v3278
        %v3280 = vextract.high.u32 %v3278
        %v3281 = vmul.u32 %v3274, %v3265
        %v3282 = vadd.s32 %v3277, %v3279
        %vm3283 = vc.u32 %v3277, %v3279
        %v3284 = vadd.s32 %v3280, 1
        %v3285 = vsel %vm3283, %v3284, %v3280
        %v3286 = vadd.s32 %v3281, %v3285
        %v3287 = vadd.s32 %v3286, 536870912
        %v3288 = vshrl.u32 %v3287, 30
        %v3289 = vshll.u32 %v3288, 30
        %v3290 = vsub.s32 %v3286, %v3289
        %vm3291 = vcmp.lt.s32.totalorder %v3290, 0
        %v3292 = vsub.s32 0, %v3290
        %v3293 = vsel %vm3291, %v3292, %v3290
        %v3294 = vclz %v3293
        %v3295 = vsub.s32 %v3294, 2
        %vm3296 = vcmp.gt.s32.totalorder 0, %v3295
        %v3297 = vsel %vm3296, 0, %v3295
        %v3298 = vsub.s32 32, %v3297
        %v3299 = vshll.u32 %v3290, %v3297
        %v3300 = vshrl.u32 %v3282, %v3298
        %v3301 = vor.u32 %v3299, %v3300
        %v3302 = vsub.s32 4294967266, %v3297
        %v3303 = vadd.s32 %v3302, 127
        %v3304 = vshll.u32 %v3303, 23
        %v3305 = vor.u32 4788187, %v3304
        %v3306 = vand.u32 2147483647, %v3305
        %v3308 = vcvt.s32.f32 %v3301
        %v3309 = vmul.f32 %v3308, %v3306
        %v3310 = vxor.u32 %v3309, 2147483648
        %v3311 = vsel %vm3228, %v3310, %v3309
        %v3312 = vsub.s32 4, %v3288
        %v3313 = vsel %vm3228, %v3312, %v3288
        %v3314 = vsel %vm3227, %v532, %v3311
        %v3315 = vsel %vm3227, 0, %v3313
        %v3316 = vcosq.f32.pop %v3314
        %v3317 = vsinq.f32.pop %v3314
        %vm3318 = vweird.f32 %v532
        %v3319 = vadd.s32 %v3315, 3
        %v3320 = vand.u32 %v3319, 3
        %vm3321 = vcmp.lt.s32.totalorder %v3320, 2
        %vm3322 = vcmp.eq.s32.totalorder %v3320, 0
        %v3323 = vxor.u32 %v3317, 2147483648
        %v3324 = vsel %vm3322, %v3316, %v3323
        %vm3325 = vcmp.eq.s32.totalorder %v3320, 2
        %v3326 = vxor.u32 %v3316, 2147483648
        %v3327 = vsel %vm3325, %v3326, %v3317
        %v3328 = vsel %vm3321, %v3324, %v3327
        %v3329 = vsel %vm3318, nan, %v3328
        %v3330 = vand.u32 2147483647, %v533
        %vm3331 = vcmp.le.f32.partialorder %v3330, 0.7853982
        %vm3332 = vcmp.lt.s32.totalorder %v533, 0
        %v3333 = vand.u32 %v533, 2139095040
        %v3334 = vshrl.u32 %v3333, 23
        %v3335 = vsub.s32 %v3334, 127
        %v3336 = vand.u32 2147483647, %v533
        %v3337 = vand.u32 %v3336, 8388607
        %v3338 = vor.u32 %v3337, 8388608
        %v3339 = vsub.s32 0, %v3338
        %v3340 = vadd.s32 %v3335, 1
        %vm3341 = vcmp.gt.s32.totalorder %v3340, 0
        %v3342 = vsel %vm3341, %v3340, 0
        %v3343 = vshrl.u32 %v3342, 5
        %v3344 = vand.u32 %v3342, 31
        %v3345 = vsub.s32 32, %v3344
        %v3346 = vshrl.u32 683565275, %v3345
        %v3347 = vshll.u32 683565275, %v3344
        %v3348 = vshrl.u32 2475754826, %v3345
        %v3349 = vor.u32 %v3347, %v3348
        %v3350 = vshll.u32 2475754826, %v3344
        %v3351 = vshrl.u32 2131351028, %v3345
        %v3352 = vor.u32 %v3350, %v3351
        %v3353 = vshll.u32 2131351028, %v3344
        %v3354 = vshrl.u32 2102212464, %v3345
        %v3355 = vor.u32 %v3353, %v3354
        %v3356 = vshll.u32 2102212464, %v3344
        %v3357 = vshrl.u32 920167782, %v3345
        %v3358 = vor.u32 %v3356, %v3357
        %v3359 = vshll.u32 920167782, %v3344
        %v3360 = vshrl.u32 1326507024, %v3345
        %v3361 = vor.u32 %v3359, %v3360
        %vm3362 = vcmp.lt.s32.totalorder %v3343, 1
        %vm3363 = vcmp.lt.s32.totalorder %v3343, 2
        %vm3364 = vcmp.lt.s32.totalorder %v3343, 3
        %vm3365 = vcmp.lt.s32.totalorder %v3343, 4
        %v3366 = vsel %vm3362, %v3346, %v3349
        %v3367 = vsel %vm3365, %v3355, 2102212464
        %v3368 = vsel %vm3364, %v3352, %v3367
        %v3369 = vsel %vm3363, %v3366, %v3368
        %v3370 = vsel %vm3362, %v3349, %v3352
        %v3371 = vsel %vm3365, %v3358, 920167782
        %v3372 = vsel %vm3364, %v3355, %v3371
        %v3373 = vsel %vm3363, %v3370, %v3372
        %v3374 = vsel %vm3362, %v3352, %v3355
        %v3375 = vsel %vm3365, %v3361, 1326507024
        %v3376 = vsel %vm3364, %v3358, %v3375
        %v3377 = vsel %vm3363, %v3374, %v3376
        %v3378 = vshll.u32 %v3338, 8
        %v3379 = vmul.u32.u64.compose %v3378, %v3377
        %v3380 = vextract.low.u32 %v3379
        %v3381 = vextract.high.u32 %v3379
        %v3382 = vmul.u32.u64.compose %v3378, %v3373
        %v3383 = vextract.low.u32 %v3382
        %v3384 = vextract.high.u32 %v3382
        %v3385 = vmul.u32 %v3378, %v3369
        %v3386 = vadd.s32 %v3381, %v3383
        %vm3387 = vc.u32 %v3381, %v3383
        %v3388 = vadd.s32 %v3384, 1
        %v3389 = vsel %vm3387, %v3388, %v3384
        %v3390 = vadd.s32 %v3385, %v3389
        %v3391 = vadd.s32 %v3390, 536870912
        %v3392 = vshrl.u32 %v3391, 30
        %v3393 = vshll.u32 %v3392, 30
        %v3394 = vsub.s32 %v3390, %v3393
        %vm3395 = vcmp.lt.s32.totalorder %v3394, 0
        %v3396 = vsub.s32 0, %v3394
        %v3397 = vsel %vm3395, %v3396, %v3394
        %v3398 = vclz %v3397
        %v3399 = vsub.s32 %v3398, 2
        %vm3400 = vcmp.gt.s32.totalorder 0, %v3399
        %v3401 = vsel %vm3400, 0, %v3399
        %v3402 = vsub.s32 32, %v3401
        %v3403 = vshll.u32 %v3394, %v3401
        %v3404 = vshrl.u32 %v3386, %v3402
        %v3405 = vor.u32 %v3403, %v3404
        %v3406 = vsub.s32 4294967266, %v3401
        %v3407 = vadd.s32 %v3406, 127
        %v3408 = vshll.u32 %v3407, 23
        %v3409 = vor.u32 4788187, %v3408
        %v3410 = vand.u32 2147483647, %v3409
        %v3412 = vcvt.s32.f32 %v3405
        %v3413 = vmul.f32 %v3412, %v3410
        %v3414 = vxor.u32 %v3413, 2147483648
        %v3415 = vsel %vm3332, %v3414, %v3413
        %v3416 = vsub.s32 4, %v3392
        %v3417 = vsel %vm3332, %v3416, %v3392
        %v3418 = vsel %vm3331, %v533, %v3415
        %v3419 = vsel %vm3331, 0, %v3417
        %v3420 = vcosq.f32.pop %v3418
        %v3421 = vsinq.f32.pop %v3418
        %vm3422 = vweird.f32 %v533
        %v3423 = vadd.s32 %v3419, 3
        %v3424 = vand.u32 %v3423, 3
        %vm3425 = vcmp.lt.s32.totalorder %v3424, 2
        %vm3426 = vcmp.eq.s32.totalorder %v3424, 0
        %v3427 = vxor.u32 %v3421, 2147483648
        %v3428 = vsel %vm3426, %v3420, %v3427
        %vm3429 = vcmp.eq.s32.totalorder %v3424, 2
        %v3430 = vxor.u32 %v3420, 2147483648
        %v3431 = vsel %vm3429, %v3430, %v3421
        %v3432 = vsel %vm3425, %v3428, %v3431
        %v3433 = vsel %vm3422, nan, %v3432
        %v3434 = vand.u32 2147483647, %v534
        %vm3435 = vcmp.le.f32.partialorder %v3434, 0.7853982
        %vm3436 = vcmp.lt.s32.totalorder %v534, 0
        %v3437 = vand.u32 %v534, 2139095040
        %v3438 = vshrl.u32 %v3437, 23
        %v3439 = vsub.s32 %v3438, 127
        %v3440 = vand.u32 2147483647, %v534
        %v3441 = vand.u32 %v3440, 8388607
        %v3442 = vor.u32 %v3441, 8388608
        %v3443 = vsub.s32 0, %v3442
        %v3444 = vadd.s32 %v3439, 1
        %vm3445 = vcmp.gt.s32.totalorder %v3444, 0
        %v3446 = vsel %vm3445, %v3444, 0
        %v3447 = vshrl.u32 %v3446, 5
        %v3448 = vand.u32 %v3446, 31
        %v3449 = vsub.s32 32, %v3448
        %v3450 = vshrl.u32 683565275, %v3449
        %v3451 = vshll.u32 683565275, %v3448
        %v3452 = vshrl.u32 2475754826, %v3449
        %v3453 = vor.u32 %v3451, %v3452
        %v3454 = vshll.u32 2475754826, %v3448
        %v3455 = vshrl.u32 2131351028, %v3449
        %v3456 = vor.u32 %v3454, %v3455
        %v3457 = vshll.u32 2131351028, %v3448
        %v3458 = vshrl.u32 2102212464, %v3449
        %v3459 = vor.u32 %v3457, %v3458
        %v3460 = vshll.u32 2102212464, %v3448
        %v3461 = vshrl.u32 920167782, %v3449
        %v3462 = vor.u32 %v3460, %v3461
        %v3463 = vshll.u32 920167782, %v3448
        %v3464 = vshrl.u32 1326507024, %v3449
        %v3465 = vor.u32 %v3463, %v3464
        %vm3466 = vcmp.lt.s32.totalorder %v3447, 1
        %vm3467 = vcmp.lt.s32.totalorder %v3447, 2
        %vm3468 = vcmp.lt.s32.totalorder %v3447, 3
        %vm3469 = vcmp.lt.s32.totalorder %v3447, 4
        %v3470 = vsel %vm3466, %v3450, %v3453
        %v3471 = vsel %vm3469, %v3459, 2102212464
        %v3472 = vsel %vm3468, %v3456, %v3471
        %v3473 = vsel %vm3467, %v3470, %v3472
        %v3474 = vsel %vm3466, %v3453, %v3456
        %v3475 = vsel %vm3469, %v3462, 920167782
        %v3476 = vsel %vm3468, %v3459, %v3475
        %v3477 = vsel %vm3467, %v3474, %v3476
        %v3478 = vsel %vm3466, %v3456, %v3459
        %v3479 = vsel %vm3469, %v3465, 1326507024
        %v3480 = vsel %vm3468, %v3462, %v3479
        %v3481 = vsel %vm3467, %v3478, %v3480
        %v3482 = vshll.u32 %v3442, 8
        %v3483 = vmul.u32.u64.compose %v3482, %v3481
        %v3484 = vextract.low.u32 %v3483
        %v3485 = vextract.high.u32 %v3483
        %v3486 = vmul.u32.u64.compose %v3482, %v3477
        %v3487 = vextract.low.u32 %v3486
        %v3488 = vextract.high.u32 %v3486
        %v3489 = vmul.u32 %v3482, %v3473
        %v3490 = vadd.s32 %v3485, %v3487
        %vm3491 = vc.u32 %v3485, %v3487
        %v3492 = vadd.s32 %v3488, 1
        %v3493 = vsel %vm3491, %v3492, %v3488
        %v3494 = vadd.s32 %v3489, %v3493
        %v3495 = vadd.s32 %v3494, 536870912
        %v3496 = vshrl.u32 %v3495, 30
        %v3497 = vshll.u32 %v3496, 30
        %v3498 = vsub.s32 %v3494, %v3497
        %vm3499 = vcmp.lt.s32.totalorder %v3498, 0
        %v3500 = vsub.s32 0, %v3498
        %v3501 = vsel %vm3499, %v3500, %v3498
        %v3502 = vclz %v3501
        %v3503 = vsub.s32 %v3502, 2
        %vm3504 = vcmp.gt.s32.totalorder 0, %v3503
        %v3505 = vsel %vm3504, 0, %v3503
        %v3506 = vsub.s32 32, %v3505
        %v3507 = vshll.u32 %v3498, %v3505
        %v3508 = vshrl.u32 %v3490, %v3506
        %v3509 = vor.u32 %v3507, %v3508
        %v3510 = vsub.s32 4294967266, %v3505
        %v3511 = vadd.s32 %v3510, 127
        %v3512 = vshll.u32 %v3511, 23
        %v3513 = vor.u32 4788187, %v3512
        %v3514 = vand.u32 2147483647, %v3513
        %v3516 = vcvt.s32.f32 %v3509
        %v3517 = vmul.f32 %v3516, %v3514
        %v3518 = vxor.u32 %v3517, 2147483648
        %v3519 = vsel %vm3436, %v3518, %v3517
        %v3520 = vsub.s32 4, %v3496
        %v3521 = vsel %vm3436, %v3520, %v3496
        %v3522 = vsel %vm3435, %v534, %v3519
        %v3523 = vsel %vm3435, 0, %v3521
        %v3524 = vcosq.f32.pop %v3522
        %v3525 = vsinq.f32.pop %v3522
        %vm3526 = vweird.f32 %v534
        %v3527 = vadd.s32 %v3523, 3
        %v3528 = vand.u32 %v3527, 3
        %vm3529 = vcmp.lt.s32.totalorder %v3528, 2
        %vm3530 = vcmp.eq.s32.totalorder %v3528, 0
        %v3531 = vxor.u32 %v3525, 2147483648
        %v3532 = vsel %vm3530, %v3524, %v3531
        %vm3533 = vcmp.eq.s32.totalorder %v3528, 2
        %v3534 = vxor.u32 %v3524, 2147483648
        %v3535 = vsel %vm3533, %v3534, %v3525
        %v3536 = vsel %vm3529, %v3532, %v3535
        %v3537 = vsel %vm3526, nan, %v3536
        %v3538 = vand.u32 2147483647, %v535
        %vm3539 = vcmp.le.f32.partialorder %v3538, 0.7853982
        %vm3540 = vcmp.lt.s32.totalorder %v535, 0
        %v3541 = vand.u32 %v535, 2139095040
        %v3542 = vshrl.u32 %v3541, 23
        %v3543 = vsub.s32 %v3542, 127
        %v3544 = vand.u32 2147483647, %v535
        %v3545 = vand.u32 %v3544, 8388607
        %v3546 = vor.u32 %v3545, 8388608
        %v3547 = vsub.s32 0, %v3546
        %v3548 = vadd.s32 %v3543, 1
        %vm3549 = vcmp.gt.s32.totalorder %v3548, 0
        %v3550 = vsel %vm3549, %v3548, 0
        %v3551 = vshrl.u32 %v3550, 5
        %v3552 = vand.u32 %v3550, 31
        %v3553 = vsub.s32 32, %v3552
        %v3554 = vshrl.u32 683565275, %v3553
        %v3555 = vshll.u32 683565275, %v3552
        %v3556 = vshrl.u32 2475754826, %v3553
        %v3557 = vor.u32 %v3555, %v3556
        %v3558 = vshll.u32 2475754826, %v3552
        %v3559 = vshrl.u32 2131351028, %v3553
        %v3560 = vor.u32 %v3558, %v3559
        %v3561 = vshll.u32 2131351028, %v3552
        %v3562 = vshrl.u32 2102212464, %v3553
        %v3563 = vor.u32 %v3561, %v3562
        %v3564 = vshll.u32 2102212464, %v3552
        %v3565 = vshrl.u32 920167782, %v3553
        %v3566 = vor.u32 %v3564, %v3565
        %v3567 = vshll.u32 920167782, %v3552
        %v3568 = vshrl.u32 1326507024, %v3553
        %v3569 = vor.u32 %v3567, %v3568
        %vm3570 = vcmp.lt.s32.totalorder %v3551, 1
        %vm3571 = vcmp.lt.s32.totalorder %v3551, 2
        %vm3572 = vcmp.lt.s32.totalorder %v3551, 3
        %vm3573 = vcmp.lt.s32.totalorder %v3551, 4
        %v3574 = vsel %vm3570, %v3554, %v3557
        %v3575 = vsel %vm3573, %v3563, 2102212464
        %v3576 = vsel %vm3572, %v3560, %v3575
        %v3577 = vsel %vm3571, %v3574, %v3576
        %v3578 = vsel %vm3570, %v3557, %v3560
        %v3579 = vsel %vm3573, %v3566, 920167782
        %v3580 = vsel %vm3572, %v3563, %v3579
        %v3581 = vsel %vm3571, %v3578, %v3580
        %v3582 = vsel %vm3570, %v3560, %v3563
        %v3583 = vsel %vm3573, %v3569, 1326507024
        %v3584 = vsel %vm3572, %v3566, %v3583
        %v3585 = vsel %vm3571, %v3582, %v3584
        %v3586 = vshll.u32 %v3546, 8
        %v3587 = vmul.u32.u64.compose %v3586, %v3585
        %v3588 = vextract.low.u32 %v3587
        %v3589 = vextract.high.u32 %v3587
        %v3590 = vmul.u32.u64.compose %v3586, %v3581
        %v3591 = vextract.low.u32 %v3590
        %v3592 = vextract.high.u32 %v3590
        %v3593 = vmul.u32 %v3586, %v3577
        %v3594 = vadd.s32 %v3589, %v3591
        %vm3595 = vc.u32 %v3589, %v3591
        %v3596 = vadd.s32 %v3592, 1
        %v3597 = vsel %vm3595, %v3596, %v3592
        %v3598 = vadd.s32 %v3593, %v3597
        %v3599 = vadd.s32 %v3598, 536870912
        %v3600 = vshrl.u32 %v3599, 30
        %v3601 = vshll.u32 %v3600, 30
        %v3602 = vsub.s32 %v3598, %v3601
        %vm3603 = vcmp.lt.s32.totalorder %v3602, 0
        %v3604 = vsub.s32 0, %v3602
        %v3605 = vsel %vm3603, %v3604, %v3602
        %v3606 = vclz %v3605
        %v3607 = vsub.s32 %v3606, 2
        %vm3608 = vcmp.gt.s32.totalorder 0, %v3607
        %v3609 = vsel %vm3608, 0, %v3607
        %v3610 = vsub.s32 32, %v3609
        %v3611 = vshll.u32 %v3602, %v3609
        %v3612 = vshrl.u32 %v3594, %v3610
        %v3613 = vor.u32 %v3611, %v3612
        %v3614 = vsub.s32 4294967266, %v3609
        %v3615 = vadd.s32 %v3614, 127
        %v3616 = vshll.u32 %v3615, 23
        %v3617 = vor.u32 4788187, %v3616
        %v3618 = vand.u32 2147483647, %v3617
        %v3620 = vcvt.s32.f32 %v3613
        %v3621 = vmul.f32 %v3620, %v3618
        %v3622 = vxor.u32 %v3621, 2147483648
        %v3623 = vsel %vm3540, %v3622, %v3621
        %v3624 = vsub.s32 4, %v3600
        %v3625 = vsel %vm3540, %v3624, %v3600
        %v3626 = vsel %vm3539, %v535, %v3623
        %v3627 = vsel %vm3539, 0, %v3625
        %v3628 = vcosq.f32.pop %v3626
        %v3629 = vsinq.f32.pop %v3626
        %vm3630 = vweird.f32 %v535
        %v3631 = vadd.s32 %v3627, 3
        %v3632 = vand.u32 %v3631, 3
        %vm3633 = vcmp.lt.s32.totalorder %v3632, 2
        %vm3634 = vcmp.eq.s32.totalorder %v3632, 0
        %v3635 = vxor.u32 %v3629, 2147483648
        %v3636 = vsel %vm3634, %v3628, %v3635
        %vm3637 = vcmp.eq.s32.totalorder %v3632, 2
        %v3638 = vxor.u32 %v3628, 2147483648
        %v3639 = vsel %vm3637, %v3638, %v3629
        %v3640 = vsel %vm3633, %v3636, %v3639
        %v3641 = vsel %vm3630, nan, %v3640
        %v3642 = vand.u32 2147483647, %v536
        %vm3643 = vcmp.le.f32.partialorder %v3642, 0.7853982
        %vm3644 = vcmp.lt.s32.totalorder %v536, 0
        %v3645 = vand.u32 %v536, 2139095040
        %v3646 = vshrl.u32 %v3645, 23
        %v3647 = vsub.s32 %v3646, 127
        %v3648 = vand.u32 2147483647, %v536
        %v3649 = vand.u32 %v3648, 8388607
        %v3650 = vor.u32 %v3649, 8388608
        %v3651 = vsub.s32 0, %v3650
        %v3652 = vadd.s32 %v3647, 1
        %vm3653 = vcmp.gt.s32.totalorder %v3652, 0
        %v3654 = vsel %vm3653, %v3652, 0
        %v3655 = vshrl.u32 %v3654, 5
        %v3656 = vand.u32 %v3654, 31
        %v3657 = vsub.s32 32, %v3656
        %v3658 = vshrl.u32 683565275, %v3657
        %v3659 = vshll.u32 683565275, %v3656
        %v3660 = vshrl.u32 2475754826, %v3657
        %v3661 = vor.u32 %v3659, %v3660
        %v3662 = vshll.u32 2475754826, %v3656
        %v3663 = vshrl.u32 2131351028, %v3657
        %v3664 = vor.u32 %v3662, %v3663
        %v3665 = vshll.u32 2131351028, %v3656
        %v3666 = vshrl.u32 2102212464, %v3657
        %v3667 = vor.u32 %v3665, %v3666
        %v3668 = vshll.u32 2102212464, %v3656
        %v3669 = vshrl.u32 920167782, %v3657
        %v3670 = vor.u32 %v3668, %v3669
        %v3671 = vshll.u32 920167782, %v3656
        %v3672 = vshrl.u32 1326507024, %v3657
        %v3673 = vor.u32 %v3671, %v3672
        %vm3674 = vcmp.lt.s32.totalorder %v3655, 1
        %vm3675 = vcmp.lt.s32.totalorder %v3655, 2
        %vm3676 = vcmp.lt.s32.totalorder %v3655, 3
        %vm3677 = vcmp.lt.s32.totalorder %v3655, 4
        %v3678 = vsel %vm3674, %v3658, %v3661
        %v3679 = vsel %vm3677, %v3667, 2102212464
        %v3680 = vsel %vm3676, %v3664, %v3679
        %v3681 = vsel %vm3675, %v3678, %v3680
        %v3682 = vsel %vm3674, %v3661, %v3664
        %v3683 = vsel %vm3677, %v3670, 920167782
        %v3684 = vsel %vm3676, %v3667, %v3683
        %v3685 = vsel %vm3675, %v3682, %v3684
        %v3686 = vsel %vm3674, %v3664, %v3667
        %v3687 = vsel %vm3677, %v3673, 1326507024
        %v3688 = vsel %vm3676, %v3670, %v3687
        %v3689 = vsel %vm3675, %v3686, %v3688
        %v3690 = vshll.u32 %v3650, 8
        %v3691 = vmul.u32.u64.compose %v3690, %v3689
        %v3692 = vextract.low.u32 %v3691
        %v3693 = vextract.high.u32 %v3691
        %v3694 = vmul.u32.u64.compose %v3690, %v3685
        %v3695 = vextract.low.u32 %v3694
        %v3696 = vextract.high.u32 %v3694
        %v3697 = vmul.u32 %v3690, %v3681
        %v3698 = vadd.s32 %v3693, %v3695
        %vm3699 = vc.u32 %v3693, %v3695
        %v3700 = vadd.s32 %v3696, 1
        %v3701 = vsel %vm3699, %v3700, %v3696
        %v3702 = vadd.s32 %v3697, %v3701
        %v3703 = vadd.s32 %v3702, 536870912
        %v3704 = vshrl.u32 %v3703, 30
        %v3705 = vshll.u32 %v3704, 30
        %v3706 = vsub.s32 %v3702, %v3705
        %vm3707 = vcmp.lt.s32.totalorder %v3706, 0
        %v3708 = vsub.s32 0, %v3706
        %v3709 = vsel %vm3707, %v3708, %v3706
        %v3710 = vclz %v3709
        %v3711 = vsub.s32 %v3710, 2
        %vm3712 = vcmp.gt.s32.totalorder 0, %v3711
        %v3713 = vsel %vm3712, 0, %v3711
        %v3714 = vsub.s32 32, %v3713
        %v3715 = vshll.u32 %v3706, %v3713
        %v3716 = vshrl.u32 %v3698, %v3714
        %v3717 = vor.u32 %v3715, %v3716
        %v3718 = vsub.s32 4294967266, %v3713
        %v3719 = vadd.s32 %v3718, 127
        %v3720 = vshll.u32 %v3719, 23
        %v3721 = vor.u32 4788187, %v3720
        %v3722 = vand.u32 2147483647, %v3721
        %v3724 = vcvt.s32.f32 %v3717
        %v3725 = vmul.f32 %v3724, %v3722
        %v3726 = vxor.u32 %v3725, 2147483648
        %v3727 = vsel %vm3644, %v3726, %v3725
        %v3728 = vsub.s32 4, %v3704
        %v3729 = vsel %vm3644, %v3728, %v3704
        %v3730 = vsel %vm3643, %v536, %v3727
        %v3731 = vsel %vm3643, 0, %v3729
        %v3732 = vcosq.f32.pop %v3730
        %v3733 = vsinq.f32.pop %v3730
        %vm3734 = vweird.f32 %v536
        %v3735 = vadd.s32 %v3731, 3
        %v3736 = vand.u32 %v3735, 3
        %vm3737 = vcmp.lt.s32.totalorder %v3736, 2
        %vm3738 = vcmp.eq.s32.totalorder %v3736, 0
        %v3739 = vxor.u32 %v3733, 2147483648
        %v3740 = vsel %vm3738, %v3732, %v3739
        %vm3741 = vcmp.eq.s32.totalorder %v3736, 2
        %v3742 = vxor.u32 %v3732, 2147483648
        %v3743 = vsel %vm3741, %v3742, %v3733
        %v3744 = vsel %vm3737, %v3740, %v3743
        %v3745 = vsel %vm3734, nan, %v3744
        %v3746 = vand.u32 2147483647, %v537
        %vm3747 = vcmp.le.f32.partialorder %v3746, 0.7853982
        %vm3748 = vcmp.lt.s32.totalorder %v537, 0
        %v3749 = vand.u32 %v537, 2139095040
        %v3750 = vshrl.u32 %v3749, 23
        %v3751 = vsub.s32 %v3750, 127
        %v3752 = vand.u32 2147483647, %v537
        %v3753 = vand.u32 %v3752, 8388607
        %v3754 = vor.u32 %v3753, 8388608
        %v3755 = vsub.s32 0, %v3754
        %v3756 = vadd.s32 %v3751, 1
        %vm3757 = vcmp.gt.s32.totalorder %v3756, 0
        %v3758 = vsel %vm3757, %v3756, 0
        %v3759 = vshrl.u32 %v3758, 5
        %v3760 = vand.u32 %v3758, 31
        %v3761 = vsub.s32 32, %v3760
        %v3762 = vshrl.u32 683565275, %v3761
        %v3763 = vshll.u32 683565275, %v3760
        %v3764 = vshrl.u32 2475754826, %v3761
        %v3765 = vor.u32 %v3763, %v3764
        %v3766 = vshll.u32 2475754826, %v3760
        %v3767 = vshrl.u32 2131351028, %v3761
        %v3768 = vor.u32 %v3766, %v3767
        %v3769 = vshll.u32 2131351028, %v3760
        %v3770 = vshrl.u32 2102212464, %v3761
        %v3771 = vor.u32 %v3769, %v3770
        %v3772 = vshll.u32 2102212464, %v3760
        %v3773 = vshrl.u32 920167782, %v3761
        %v3774 = vor.u32 %v3772, %v3773
        %v3775 = vshll.u32 920167782, %v3760
        %v3776 = vshrl.u32 1326507024, %v3761
        %v3777 = vor.u32 %v3775, %v3776
        %vm3778 = vcmp.lt.s32.totalorder %v3759, 1
        %vm3779 = vcmp.lt.s32.totalorder %v3759, 2
        %vm3780 = vcmp.lt.s32.totalorder %v3759, 3
        %vm3781 = vcmp.lt.s32.totalorder %v3759, 4
        %v3782 = vsel %vm3778, %v3762, %v3765
        %v3783 = vsel %vm3781, %v3771, 2102212464
        %v3784 = vsel %vm3780, %v3768, %v3783
        %v3785 = vsel %vm3779, %v3782, %v3784
        %v3786 = vsel %vm3778, %v3765, %v3768
        %v3787 = vsel %vm3781, %v3774, 920167782
        %v3788 = vsel %vm3780, %v3771, %v3787
        %v3789 = vsel %vm3779, %v3786, %v3788
        %v3790 = vsel %vm3778, %v3768, %v3771
        %v3791 = vsel %vm3781, %v3777, 1326507024
        %v3792 = vsel %vm3780, %v3774, %v3791
        %v3793 = vsel %vm3779, %v3790, %v3792
        %v3794 = vshll.u32 %v3754, 8
        %v3795 = vmul.u32.u64.compose %v3794, %v3793
        %v3796 = vextract.low.u32 %v3795
        %v3797 = vextract.high.u32 %v3795
        %v3798 = vmul.u32.u64.compose %v3794, %v3789
        %v3799 = vextract.low.u32 %v3798
        %v3800 = vextract.high.u32 %v3798
        %v3801 = vmul.u32 %v3794, %v3785
        %v3802 = vadd.s32 %v3797, %v3799
        %vm3803 = vc.u32 %v3797, %v3799
        %v3804 = vadd.s32 %v3800, 1
        %v3805 = vsel %vm3803, %v3804, %v3800
        %v3806 = vadd.s32 %v3801, %v3805
        %v3807 = vadd.s32 %v3806, 536870912
        %v3808 = vshrl.u32 %v3807, 30
        %v3809 = vshll.u32 %v3808, 30
        %v3810 = vsub.s32 %v3806, %v3809
        %vm3811 = vcmp.lt.s32.totalorder %v3810, 0
        %v3812 = vsub.s32 0, %v3810
        %v3813 = vsel %vm3811, %v3812, %v3810
        %v3814 = vclz %v3813
        %v3815 = vsub.s32 %v3814, 2
        %vm3816 = vcmp.gt.s32.totalorder 0, %v3815
        %v3817 = vsel %vm3816, 0, %v3815
        %v3818 = vsub.s32 32, %v3817
        %v3819 = vshll.u32 %v3810, %v3817
        %v3820 = vshrl.u32 %v3802, %v3818
        %v3821 = vor.u32 %v3819, %v3820
        %v3822 = vsub.s32 4294967266, %v3817
        %v3823 = vadd.s32 %v3822, 127
        %v3824 = vshll.u32 %v3823, 23
        %v3825 = vor.u32 4788187, %v3824
        %v3826 = vand.u32 2147483647, %v3825
        %v3828 = vcvt.s32.f32 %v3821
        %v3829 = vmul.f32 %v3828, %v3826
        %v3830 = vxor.u32 %v3829, 2147483648
        %v3831 = vsel %vm3748, %v3830, %v3829
        %v3832 = vsub.s32 4, %v3808
        %v3833 = vsel %vm3748, %v3832, %v3808
        %v3834 = vsel %vm3747, %v537, %v3831
        %v3835 = vsel %vm3747, 0, %v3833
        %v3836 = vcosq.f32.pop %v3834
        %v3837 = vsinq.f32.pop %v3834
        %vm3838 = vweird.f32 %v537
        %v3839 = vadd.s32 %v3835, 3
        %v3840 = vand.u32 %v3839, 3
        %vm3841 = vcmp.lt.s32.totalorder %v3840, 2
        %vm3842 = vcmp.eq.s32.totalorder %v3840, 0
        %v3843 = vxor.u32 %v3837, 2147483648
        %v3844 = vsel %vm3842, %v3836, %v3843
        %vm3845 = vcmp.eq.s32.totalorder %v3840, 2
        %v3846 = vxor.u32 %v3836, 2147483648
        %v3847 = vsel %vm3845, %v3846, %v3837
        %v3848 = vsel %vm3841, %v3844, %v3847
        %v3849 = vsel %vm3838, nan, %v3848
        %v3850 = vld [vmem:[%s364] sm:$0xff]
        %v3851 = vld [vmem:[%s364 + $0x8] sm:$0xff]
        %v3852 = vld [vmem:[%s364 + $0x10] sm:$0xff]
        %v3853 = vld [vmem:[%s364 + $0x18] sm:$0xff]
        %v3854 = vld [vmem:[%s364 + $0x20] sm:$0xff]
        %v3855 = vld [vmem:[%s364 + $0x28] sm:$0xff]
        %v3856 = vld [vmem:[%s364 + $0x30] sm:$0xff]
        %v3857 = vld [vmem:[%s364 + $0x38] sm:$0xff]
        %v3858 = vld [vmem:[%s364 + $0x40] sm:$0xff]
        %v3859 = vld [vmem:[%s364 + $0x48] sm:$0xff]
        %v3860 = vld [vmem:[%s364 + $0x50] sm:$0xff]
        %v3861 = vld [vmem:[%s364 + $0x58] sm:$0xff]
        %v3862 = vld [vmem:[%s364 + $0x60] sm:$0xff]
        %v3863 = vld [vmem:[%s364 + $0x68] sm:$0xff]
        %v3864 = vld [vmem:[%s364 + $0x70] sm:$0xff]
        %v3865 = vld [vmem:[%s364 + $0x78] sm:$0xff]
        %v3866 = vld [vmem:[%s291] sm:$0xff]
        %v3867 = vld [vmem:[%s291 + $0x8] sm:$0xff]
        %v3868 = vld [vmem:[%s291 + $0x10] sm:$0xff]
        %v3869 = vld [vmem:[%s291 + $0x18] sm:$0xff]
        %v3870 = vld [vmem:[%s291 + $0x20] sm:$0xff]
        %v3871 = vld [vmem:[%s291 + $0x28] sm:$0xff]
        %v3872 = vld [vmem:[%s291 + $0x30] sm:$0xff]
        %v3873 = vld [vmem:[%s291 + $0x38] sm:$0xff]
        %v3874 = vld [vmem:[%s291 + $0x40] sm:$0xff]
        %v3875 = vld [vmem:[%s291 + $0x48] sm:$0xff]
        %v3876 = vld [vmem:[%s291 + $0x50] sm:$0xff]
        %v3877 = vld [vmem:[%s291 + $0x58] sm:$0xff]
        %v3878 = vld [vmem:[%s291 + $0x60] sm:$0xff]
        %v3879 = vld [vmem:[%s291 + $0x68] sm:$0xff]
        %v3880 = vld [vmem:[%s291 + $0x70] sm:$0xff]
        %v3881 = vld [vmem:[%s291 + $0x78] sm:$0xff]
        %vm3882 = vcmask 130048
        %v3884 = vsel %vm3882, %v2289, 0
        %v3887 = vsel %vm3882, %v2393, 0
        %3889 = vmatprep.subr.mxu0 0.0
        %3890 = vmatpush1.msra.mxu0 0.0
        %3891 = vmatprep.subr.mxu0 0.0
        %3892 = vmatpush1.msra.mxu0 0.0
        %3893 = vmatprep.subr.mxu0 0.0
        %3894 = vmatpush1.msra.mxu0 0.0
        %3895 = vmatprep.subr.mxu0 0.0
        %3896 = vmatpush1.msra.mxu0 0.0
        %3897 = vmatprep.subr.mxu0 0.0
        %3898 = vmatpush1.msra.mxu0 0.0
        %3899 = vmatprep.subr.mxu0 0.0
        %3900 = vmatpush1.msra.mxu0 0.0
        %3901 = vmatprep.subr.mxu0 0.0
        %3902 = vmatpush1.msra.mxu0 0.0
        %3903 = vmatprep.subr.mxu0 0.0
        %3904 = vmatpush1.msra.mxu0 0.0
        %3905 = vmatprep.subr.mxu0 0.0
        %3906 = vmatpush1.msra.mxu0 0.0
        %3907 = vmatprep.subr.mxu0 0.0
        %3908 = vmatpush1.msra.mxu0 0.0
        %3909 = vmatprep.subr.mxu0 0.0
        %3910 = vmatpush1.msra.mxu0 0.0
        %3911 = vmatprep.subr.mxu0 0.0
        %3912 = vmatpush1.msra.mxu0 0.0
        %3913 = vmatprep.subr.mxu0 0.0
        %3914 = vmatpush1.msra.mxu0 0.0
        %3915 = vmatprep.subr.mxu0 0.0
        %3916 = vmatpush1.msra.mxu0 0.0
        %3917 = vmatprep.subr.mxu0 0.0
        %3918 = vmatpush1.msra.mxu0 %v3867
        %3919 = vmatprep.subr.mxu0 0.0
        %3920 = vmatpush1.msra.mxu0 %v3866
        %3921 = vmatprep.subr.mxu0 0.0
        %3922 = vmatpush2.msra.mxu0 0.0
        %3923 = vmatprep.subr.mxu0 0.0
        %3924 = vmatpush2.msra.mxu0 0.0
        %3925 = vmatprep.subr.mxu0 0.0
        %3926 = vmatpush2.msra.mxu0 0.0
        %3927 = vmatprep.subr.mxu0 0.0
        %3928 = vmatpush2.msra.mxu0 0.0
        %3929 = vmatprep.subr.mxu0 0.0
        %3930 = vmatpush2.msra.mxu0 0.0
        %3931 = vmatprep.subr.mxu0 0.0
        %3932 = vmatpush2.msra.mxu0 0.0
        %3933 = vmatprep.subr.mxu0 0.0
        %3934 = vmatpush2.msra.mxu0 0.0
        %3935 = vmatprep.subr.mxu0 0.0
        %3936 = vmatpush2.msra.mxu0 0.0
        %3937 = vmatprep.subr.mxu0 0.0
        %3938 = vmatpush2.msra.mxu0 0.0
        %3939 = vmatprep.subr.mxu0 0.0
        %3940 = vmatpush2.msra.mxu0 0.0
        %3941 = vmatprep.subr.mxu0 0.0
        %3942 = vmatpush2.msra.mxu0 0.0
        %3943 = vmatprep.subr.mxu0 0.0
        %3944 = vmatpush2.msra.mxu0 0.0
        %3945 = vmatprep.subr.mxu0 0.0
        %3946 = vmatpush2.msra.mxu0 0.0
        %3947 = vmatprep.subr.mxu0 0.0
        %3948 = vmatpush2.msra.mxu0 0.0
        %3949 = vmatprep.subr.mxu0 0.0
        %3950 = vmatpush2.msra.mxu0 0.0
        %3951 = vmatprep.subr.mxu0 0.0
        %3952 = vmatpush2.msra.mxu0 0.0
        %3953 = vmatprep.mubr.f32.mxu0 0.0
        %3954 = vmatmul.mubr.f32.gmra.mxu0 %v3884
        %v3955 = vpop.f32.mrf.mxu0
        %v3956 = vadd.f32 0.0, %v3955
        %v3957 = vpop.f32.mrf.mxu0
        %3958 = vmatprep.mubr.f32.mxu0 0.0
        %3959 = vmatmul.mubr.f32.gmra.mxu0 %v3887
        %v3960 = vpop.f32.mrf.mxu0
        %v3961 = vadd.f32 0.0, %v3960
        %v3962 = vpop.f32.mrf.mxu0
        %3963 = vdwg.mxu0
        %v3965 = vsel %vm3882, %v2497, 0
        %v3968 = vsel %vm3882, %v2601, 0
        %3970 = vmatprep.subr.mxu0 0.0
        %3971 = vmatpush1.msra.mxu0 0.0
        %3972 = vmatprep.subr.mxu0 0.0
        %3973 = vmatpush1.msra.mxu0 0.0
        %3974 = vmatprep.subr.mxu0 0.0
        %3975 = vmatpush1.msra.mxu0 0.0
        %3976 = vmatprep.subr.mxu0 0.0
        %3977 = vmatpush1.msra.mxu0 0.0
        %3978 = vmatprep.subr.mxu0 0.0
        %3979 = vmatpush1.msra.mxu0 0.0
        %3980 = vmatprep.subr.mxu0 0.0
        %3981 = vmatpush1.msra.mxu0 0.0
        %3982 = vmatprep.subr.mxu0 0.0
        %3983 = vmatpush1.msra.mxu0 0.0
        %3984 = vmatprep.subr.mxu0 0.0
        %3985 = vmatpush1.msra.mxu0 0.0
        %3986 = vmatprep.subr.mxu0 0.0
        %3987 = vmatpush1.msra.mxu0 0.0
        %3988 = vmatprep.subr.mxu0 0.0
        %3989 = vmatpush1.msra.mxu0 0.0
        %3990 = vmatprep.subr.mxu0 0.0
        %3991 = vmatpush1.msra.mxu0 0.0
        %3992 = vmatprep.subr.mxu0 0.0
        %3993 = vmatpush1.msra.mxu0 0.0
        %3994 = vmatprep.subr.mxu0 0.0
        %3995 = vmatpush1.msra.mxu0 0.0
        %3996 = vmatprep.subr.mxu0 0.0
        %3997 = vmatpush1.msra.mxu0 0.0
        %3998 = vmatprep.subr.mxu0 0.0
        %3999 = vmatpush1.msra.mxu0 %v3869
        %4000 = vmatprep.subr.mxu0 0.0
        %4001 = vmatpush1.msra.mxu0 %v3868
        %4002 = vmatprep.subr.mxu0 0.0
        %4003 = vmatpush2.msra.mxu0 0.0
        %4004 = vmatprep.subr.mxu0 0.0
        %4005 = vmatpush2.msra.mxu0 0.0
        %4006 = vmatprep.subr.mxu0 0.0
        %4007 = vmatpush2.msra.mxu0 0.0
        %4008 = vmatprep.subr.mxu0 0.0
        %4009 = vmatpush2.msra.mxu0 0.0
        %4010 = vmatprep.subr.mxu0 0.0
        %4011 = vmatpush2.msra.mxu0 0.0
        %4012 = vmatprep.subr.mxu0 0.0
        %4013 = vmatpush2.msra.mxu0 0.0
        %4014 = vmatprep.subr.mxu0 0.0
        %4015 = vmatpush2.msra.mxu0 0.0
        %4016 = vmatprep.subr.mxu0 0.0
        %4017 = vmatpush2.msra.mxu0 0.0
        %4018 = vmatprep.subr.mxu0 0.0
        %4019 = vmatpush2.msra.mxu0 0.0
        %4020 = vmatprep.subr.mxu0 0.0
        %4021 = vmatpush2.msra.mxu0 0.0
        %4022 = vmatprep.subr.mxu0 0.0
        %4023 = vmatpush2.msra.mxu0 0.0
        %4024 = vmatprep.subr.mxu0 0.0
        %4025 = vmatpush2.msra.mxu0 0.0
        %4026 = vmatprep.subr.mxu0 0.0
        %4027 = vmatpush2.msra.mxu0 0.0
        %4028 = vmatprep.subr.mxu0 0.0
        %4029 = vmatpush2.msra.mxu0 0.0
        %4030 = vmatprep.subr.mxu0 0.0
        %4031 = vmatpush2.msra.mxu0 0.0
        %4032 = vmatprep.subr.mxu0 0.0
        %4033 = vmatpush2.msra.mxu0 0.0
        %4034 = vmatprep.mubr.f32.mxu0 0.0
        %4035 = vmatmul.mubr.f32.gmra.mxu0 %v3965
        %v4036 = vpop.f32.mrf.mxu0
        %v4037 = vadd.f32 0.0, %v4036
        %v4038 = vpop.f32.mrf.mxu0
        %4039 = vmatprep.mubr.f32.mxu0 0.0
        %4040 = vmatmul.mubr.f32.gmra.mxu0 %v3968
        %v4041 = vpop.f32.mrf.mxu0
        %v4042 = vadd.f32 0.0, %v4041
        %v4043 = vpop.f32.mrf.mxu0
        %4044 = vdwg.mxu0
        %v4046 = vsel %vm3882, %v2705, 0
        %v4049 = vsel %vm3882, %v2809, 0
        %4051 = vmatprep.subr.mxu0 0.0
        %4052 = vmatpush1.msra.mxu0 0.0
        %4053 = vmatprep.subr.mxu0 0.0
        %4054 = vmatpush1.msra.mxu0 0.0
        %4055 = vmatprep.subr.mxu0 0.0
        %4056 = vmatpush1.msra.mxu0 0.0
        %4057 = vmatprep.subr.mxu0 0.0
        %4058 = vmatpush1.msra.mxu0 0.0
        %4059 = vmatprep.subr.mxu0 0.0
        %4060 = vmatpush1.msra.mxu0 0.0
        %4061 = vmatprep.subr.mxu0 0.0
        %4062 = vmatpush1.msra.mxu0 0.0
        %4063 = vmatprep.subr.mxu0 0.0
        %4064 = vmatpush1.msra.mxu0 0.0
        %4065 = vmatprep.subr.mxu0 0.0
        %4066 = vmatpush1.msra.mxu0 0.0
        %4067 = vmatprep.subr.mxu0 0.0
        %4068 = vmatpush1.msra.mxu0 0.0
        %4069 = vmatprep.subr.mxu0 0.0
        %4070 = vmatpush1.msra.mxu0 0.0
        %4071 = vmatprep.subr.mxu0 0.0
        %4072 = vmatpush1.msra.mxu0 0.0
        %4073 = vmatprep.subr.mxu0 0.0
        %4074 = vmatpush1.msra.mxu0 0.0
        %4075 = vmatprep.subr.mxu0 0.0
        %4076 = vmatpush1.msra.mxu0 0.0
        %4077 = vmatprep.subr.mxu0 0.0
        %4078 = vmatpush1.msra.mxu0 0.0
        %4079 = vmatprep.subr.mxu0 0.0
        %4080 = vmatpush1.msra.mxu0 %v3871
        %4081 = vmatprep.subr.mxu0 0.0
        %4082 = vmatpush1.msra.mxu0 %v3870
        %4083 = vmatprep.subr.mxu0 0.0
        %4084 = vmatpush2.msra.mxu0 0.0
        %4085 = vmatprep.subr.mxu0 0.0
        %4086 = vmatpush2.msra.mxu0 0.0
        %4087 = vmatprep.subr.mxu0 0.0
        %4088 = vmatpush2.msra.mxu0 0.0
        %4089 = vmatprep.subr.mxu0 0.0
        %4090 = vmatpush2.msra.mxu0 0.0
        %4091 = vmatprep.subr.mxu0 0.0
        %4092 = vmatpush2.msra.mxu0 0.0
        %4093 = vmatprep.subr.mxu0 0.0
        %4094 = vmatpush2.msra.mxu0 0.0
        %4095 = vmatprep.subr.mxu0 0.0
        %4096 = vmatpush2.msra.mxu0 0.0
        %4097 = vmatprep.subr.mxu0 0.0
        %4098 = vmatpush2.msra.mxu0 0.0
        %4099 = vmatprep.subr.mxu0 0.0
        %4100 = vmatpush2.msra.mxu0 0.0
        %4101 = vmatprep.subr.mxu0 0.0
        %4102 = vmatpush2.msra.mxu0 0.0
        %4103 = vmatprep.subr.mxu0 0.0
        %4104 = vmatpush2.msra.mxu0 0.0
        %4105 = vmatprep.subr.mxu0 0.0
        %4106 = vmatpush2.msra.mxu0 0.0
        %4107 = vmatprep.subr.mxu0 0.0
        %4108 = vmatpush2.msra.mxu0 0.0
        %4109 = vmatprep.subr.mxu0 0.0
        %4110 = vmatpush2.msra.mxu0 0.0
        %4111 = vmatprep.subr.mxu0 0.0
        %4112 = vmatpush2.msra.mxu0 0.0
        %4113 = vmatprep.subr.mxu0 0.0
        %4114 = vmatpush2.msra.mxu0 0.0
        %4115 = vmatprep.mubr.f32.mxu0 0.0
        %4116 = vmatmul.mubr.f32.gmra.mxu0 %v4046
        %v4117 = vpop.f32.mrf.mxu0
        %v4118 = vadd.f32 0.0, %v4117
        %v4119 = vpop.f32.mrf.mxu0
        %4120 = vmatprep.mubr.f32.mxu0 0.0
        %4121 = vmatmul.mubr.f32.gmra.mxu0 %v4049
        %v4122 = vpop.f32.mrf.mxu0
        %v4123 = vadd.f32 0.0, %v4122
        %v4124 = vpop.f32.mrf.mxu0
        %4125 = vdwg.mxu0
        %v4127 = vsel %vm3882, %v2913, 0
        %v4130 = vsel %vm3882, %v3017, 0
        %4132 = vmatprep.subr.mxu0 0.0
        %4133 = vmatpush1.msra.mxu0 0.0
        %4134 = vmatprep.subr.mxu0 0.0
        %4135 = vmatpush1.msra.mxu0 0.0
        %4136 = vmatprep.subr.mxu0 0.0
        %4137 = vmatpush1.msra.mxu0 0.0
        %4138 = vmatprep.subr.mxu0 0.0
        %4139 = vmatpush1.msra.mxu0 0.0
        %4140 = vmatprep.subr.mxu0 0.0
        %4141 = vmatpush1.msra.mxu0 0.0
        %4142 = vmatprep.subr.mxu0 0.0
        %4143 = vmatpush1.msra.mxu0 0.0
        %4144 = vmatprep.subr.mxu0 0.0
        %4145 = vmatpush1.msra.mxu0 0.0
        %4146 = vmatprep.subr.mxu0 0.0
        %4147 = vmatpush1.msra.mxu0 0.0
        %4148 = vmatprep.subr.mxu0 0.0
        %4149 = vmatpush1.msra.mxu0 0.0
        %4150 = vmatprep.subr.mxu0 0.0
        %4151 = vmatpush1.msra.mxu0 0.0
        %4152 = vmatprep.subr.mxu0 0.0
        %4153 = vmatpush1.msra.mxu0 0.0
        %4154 = vmatprep.subr.mxu0 0.0
        %4155 = vmatpush1.msra.mxu0 0.0
        %4156 = vmatprep.subr.mxu0 0.0
        %4157 = vmatpush1.msra.mxu0 0.0
        %4158 = vmatprep.subr.mxu0 0.0
        %4159 = vmatpush1.msra.mxu0 0.0
        %4160 = vmatprep.subr.mxu0 0.0
        %4161 = vmatpush1.msra.mxu0 %v3873
        %4162 = vmatprep.subr.mxu0 0.0
        %4163 = vmatpush1.msra.mxu0 %v3872
        %4164 = vmatprep.subr.mxu0 0.0
        %4165 = vmatpush2.msra.mxu0 0.0
        %4166 = vmatprep.subr.mxu0 0.0
        %4167 = vmatpush2.msra.mxu0 0.0
        %4168 = vmatprep.subr.mxu0 0.0
        %4169 = vmatpush2.msra.mxu0 0.0
        %4170 = vmatprep.subr.mxu0 0.0
        %4171 = vmatpush2.msra.mxu0 0.0
        %4172 = vmatprep.subr.mxu0 0.0
        %4173 = vmatpush2.msra.mxu0 0.0
        %4174 = vmatprep.subr.mxu0 0.0
        %4175 = vmatpush2.msra.mxu0 0.0
        %4176 = vmatprep.subr.mxu0 0.0
        %4177 = vmatpush2.msra.mxu0 0.0
        %4178 = vmatprep.subr.mxu0 0.0
        %4179 = vmatpush2.msra.mxu0 0.0
        %4180 = vmatprep.subr.mxu0 0.0
        %4181 = vmatpush2.msra.mxu0 0.0
        %4182 = vmatprep.subr.mxu0 0.0
        %4183 = vmatpush2.msra.mxu0 0.0
        %4184 = vmatprep.subr.mxu0 0.0
        %4185 = vmatpush2.msra.mxu0 0.0
        %4186 = vmatprep.subr.mxu0 0.0
        %4187 = vmatpush2.msra.mxu0 0.0
        %4188 = vmatprep.subr.mxu0 0.0
        %4189 = vmatpush2.msra.mxu0 0.0
        %4190 = vmatprep.subr.mxu0 0.0
        %4191 = vmatpush2.msra.mxu0 0.0
        %4192 = vmatprep.subr.mxu0 0.0
        %4193 = vmatpush2.msra.mxu0 0.0
        %4194 = vmatprep.subr.mxu0 0.0
        %4195 = vmatpush2.msra.mxu0 0.0
        %4196 = vmatprep.mubr.f32.mxu0 0.0
        %4197 = vmatmul.mubr.f32.gmra.mxu0 %v4127
        %v4198 = vpop.f32.mrf.mxu0
        %v4199 = vadd.f32 0.0, %v4198
        %v4200 = vpop.f32.mrf.mxu0
        %4201 = vmatprep.mubr.f32.mxu0 0.0
        %4202 = vmatmul.mubr.f32.gmra.mxu0 %v4130
        %v4203 = vpop.f32.mrf.mxu0
        %v4204 = vadd.f32 0.0, %v4203
        %v4205 = vpop.f32.mrf.mxu0
        %4206 = vdwg.mxu0
        %v4208 = vsel %vm3882, %v3121, 0
        %v4211 = vsel %vm3882, %v3225, 0
        %4213 = vmatprep.subr.mxu0 0.0
        %4214 = vmatpush1.msra.mxu0 0.0
        %4215 = vmatprep.subr.mxu0 0.0
        %4216 = vmatpush1.msra.mxu0 0.0
        %4217 = vmatprep.subr.mxu0 0.0
        %4218 = vmatpush1.msra.mxu0 0.0
        %4219 = vmatprep.subr.mxu0 0.0
        %4220 = vmatpush1.msra.mxu0 0.0
        %4221 = vmatprep.subr.mxu0 0.0
        %4222 = vmatpush1.msra.mxu0 0.0
        %4223 = vmatprep.subr.mxu0 0.0
        %4224 = vmatpush1.msra.mxu0 0.0
        %4225 = vmatprep.subr.mxu0 0.0
        %4226 = vmatpush1.msra.mxu0 0.0
        %4227 = vmatprep.subr.mxu0 0.0
        %4228 = vmatpush1.msra.mxu0 0.0
        %4229 = vmatprep.subr.mxu0 0.0
        %4230 = vmatpush1.msra.mxu0 0.0
        %4231 = vmatprep.subr.mxu0 0.0
        %4232 = vmatpush1.msra.mxu0 0.0
        %4233 = vmatprep.subr.mxu0 0.0
        %4234 = vmatpush1.msra.mxu0 0.0
        %4235 = vmatprep.subr.mxu0 0.0
        %4236 = vmatpush1.msra.mxu0 0.0
        %4237 = vmatprep.subr.mxu0 0.0
        %4238 = vmatpush1.msra.mxu0 0.0
        %4239 = vmatprep.subr.mxu0 0.0
        %4240 = vmatpush1.msra.mxu0 0.0
        %4241 = vmatprep.subr.mxu0 0.0
        %4242 = vmatpush1.msra.mxu0 %v3875
        %4243 = vmatprep.subr.mxu0 0.0
        %4244 = vmatpush1.msra.mxu0 %v3874
        %4245 = vmatprep.subr.mxu0 0.0
        %4246 = vmatpush2.msra.mxu0 0.0
        %4247 = vmatprep.subr.mxu0 0.0
        %4248 = vmatpush2.msra.mxu0 0.0
        %4249 = vmatprep.subr.mxu0 0.0
        %4250 = vmatpush2.msra.mxu0 0.0
        %4251 = vmatprep.subr.mxu0 0.0
        %4252 = vmatpush2.msra.mxu0 0.0
        %4253 = vmatprep.subr.mxu0 0.0
        %4254 = vmatpush2.msra.mxu0 0.0
        %4255 = vmatprep.subr.mxu0 0.0
        %4256 = vmatpush2.msra.mxu0 0.0
        %4257 = vmatprep.subr.mxu0 0.0
        %4258 = vmatpush2.msra.mxu0 0.0
        %4259 = vmatprep.subr.mxu0 0.0
        %4260 = vmatpush2.msra.mxu0 0.0
        %4261 = vmatprep.subr.mxu0 0.0
        %4262 = vmatpush2.msra.mxu0 0.0
        %4263 = vmatprep.subr.mxu0 0.0
        %4264 = vmatpush2.msra.mxu0 0.0
        %4265 = vmatprep.subr.mxu0 0.0
        %4266 = vmatpush2.msra.mxu0 0.0
        %4267 = vmatprep.subr.mxu0 0.0
        %4268 = vmatpush2.msra.mxu0 0.0
        %4269 = vmatprep.subr.mxu0 0.0
        %4270 = vmatpush2.msra.mxu0 0.0
        %4271 = vmatprep.subr.mxu0 0.0
        %4272 = vmatpush2.msra.mxu0 0.0
        %4273 = vmatprep.subr.mxu0 0.0
        %4274 = vmatpush2.msra.mxu0 0.0
        %4275 = vmatprep.subr.mxu0 0.0
        %4276 = vmatpush2.msra.mxu0 0.0
        %4277 = vmatprep.mubr.f32.mxu0 0.0
        %4278 = vmatmul.mubr.f32.gmra.mxu0 %v4208
        %v4279 = vpop.f32.mrf.mxu0
        %v4280 = vadd.f32 0.0, %v4279
        %v4281 = vpop.f32.mrf.mxu0
        %4282 = vmatprep.mubr.f32.mxu0 0.0
        %4283 = vmatmul.mubr.f32.gmra.mxu0 %v4211
        %v4284 = vpop.f32.mrf.mxu0
        %v4285 = vadd.f32 0.0, %v4284
        %v4286 = vpop.f32.mrf.mxu0
        %4287 = vdwg.mxu0
        %v4289 = vsel %vm3882, %v3329, 0
        %v4292 = vsel %vm3882, %v3433, 0
        %4294 = vmatprep.subr.mxu0 0.0
        %4295 = vmatpush1.msra.mxu0 0.0
        %4296 = vmatprep.subr.mxu0 0.0
        %4297 = vmatpush1.msra.mxu0 0.0
        %4298 = vmatprep.subr.mxu0 0.0
        %4299 = vmatpush1.msra.mxu0 0.0
        %4300 = vmatprep.subr.mxu0 0.0
        %4301 = vmatpush1.msra.mxu0 0.0
        %4302 = vmatprep.subr.mxu0 0.0
        %4303 = vmatpush1.msra.mxu0 0.0
        %4304 = vmatprep.subr.mxu0 0.0
        %4305 = vmatpush1.msra.mxu0 0.0
        %4306 = vmatprep.subr.mxu0 0.0
        %4307 = vmatpush1.msra.mxu0 0.0
        %4308 = vmatprep.subr.mxu0 0.0
        %4309 = vmatpush1.msra.mxu0 0.0
        %4310 = vmatprep.subr.mxu0 0.0
        %4311 = vmatpush1.msra.mxu0 0.0
        %4312 = vmatprep.subr.mxu0 0.0
        %4313 = vmatpush1.msra.mxu0 0.0
        %4314 = vmatprep.subr.mxu0 0.0
        %4315 = vmatpush1.msra.mxu0 0.0
        %4316 = vmatprep.subr.mxu0 0.0
        %4317 = vmatpush1.msra.mxu0 0.0
        %4318 = vmatprep.subr.mxu0 0.0
        %4319 = vmatpush1.msra.mxu0 0.0
        %4320 = vmatprep.subr.mxu0 0.0
        %4321 = vmatpush1.msra.mxu0 0.0
        %4322 = vmatprep.subr.mxu0 0.0
        %4323 = vmatpush1.msra.mxu0 %v3877
        %4324 = vmatprep.subr.mxu0 0.0
        %4325 = vmatpush1.msra.mxu0 %v3876
        %4326 = vmatprep.subr.mxu0 0.0
        %4327 = vmatpush2.msra.mxu0 0.0
        %4328 = vmatprep.subr.mxu0 0.0
        %4329 = vmatpush2.msra.mxu0 0.0
        %4330 = vmatprep.subr.mxu0 0.0
        %4331 = vmatpush2.msra.mxu0 0.0
        %4332 = vmatprep.subr.mxu0 0.0
        %4333 = vmatpush2.msra.mxu0 0.0
        %4334 = vmatprep.subr.mxu0 0.0
        %4335 = vmatpush2.msra.mxu0 0.0
        %4336 = vmatprep.subr.mxu0 0.0
        %4337 = vmatpush2.msra.mxu0 0.0
        %4338 = vmatprep.subr.mxu0 0.0
        %4339 = vmatpush2.msra.mxu0 0.0
        %4340 = vmatprep.subr.mxu0 0.0
        %4341 = vmatpush2.msra.mxu0 0.0
        %4342 = vmatprep.subr.mxu0 0.0
        %4343 = vmatpush2.msra.mxu0 0.0
        %4344 = vmatprep.subr.mxu0 0.0
        %4345 = vmatpush2.msra.mxu0 0.0
        %4346 = vmatprep.subr.mxu0 0.0
        %4347 = vmatpush2.msra.mxu0 0.0
        %4348 = vmatprep.subr.mxu0 0.0
        %4349 = vmatpush2.msra.mxu0 0.0
        %4350 = vmatprep.subr.mxu0 0.0
        %4351 = vmatpush2.msra.mxu0 0.0
        %4352 = vmatprep.subr.mxu0 0.0
        %4353 = vmatpush2.msra.mxu0 0.0
        %4354 = vmatprep.subr.mxu0 0.0
        %4355 = vmatpush2.msra.mxu0 0.0
        %4356 = vmatprep.subr.mxu0 0.0
        %4357 = vmatpush2.msra.mxu0 0.0
        %4358 = vmatprep.mubr.f32.mxu0 0.0
        %4359 = vmatmul.mubr.f32.gmra.mxu0 %v4289
        %v4360 = vpop.f32.mrf.mxu0
        %v4361 = vadd.f32 0.0, %v4360
        %v4362 = vpop.f32.mrf.mxu0
        %4363 = vmatprep.mubr.f32.mxu0 0.0
        %4364 = vmatmul.mubr.f32.gmra.mxu0 %v4292
        %v4365 = vpop.f32.mrf.mxu0
        %v4366 = vadd.f32 0.0, %v4365
        %v4367 = vpop.f32.mrf.mxu0
        %4368 = vdwg.mxu0
        %v4370 = vsel %vm3882, %v3537, 0
        %v4373 = vsel %vm3882, %v3641, 0
        %4375 = vmatprep.subr.mxu0 0.0
        %4376 = vmatpush1.msra.mxu0 0.0
        %4377 = vmatprep.subr.mxu0 0.0
        %4378 = vmatpush1.msra.mxu0 0.0
        %4379 = vmatprep.subr.mxu0 0.0
        %4380 = vmatpush1.msra.mxu0 0.0
        %4381 = vmatprep.subr.mxu0 0.0
        %4382 = vmatpush1.msra.mxu0 0.0
        %4383 = vmatprep.subr.mxu0 0.0
        %4384 = vmatpush1.msra.mxu0 0.0
        %4385 = vmatprep.subr.mxu0 0.0
        %4386 = vmatpush1.msra.mxu0 0.0
        %4387 = vmatprep.subr.mxu0 0.0
        %4388 = vmatpush1.msra.mxu0 0.0
        %4389 = vmatprep.subr.mxu0 0.0
        %4390 = vmatpush1.msra.mxu0 0.0
        %4391 = vmatprep.subr.mxu0 0.0
        %4392 = vmatpush1.msra.mxu0 0.0
        %4393 = vmatprep.subr.mxu0 0.0
        %4394 = vmatpush1.msra.mxu0 0.0
        %4395 = vmatprep.subr.mxu0 0.0
        %4396 = vmatpush1.msra.mxu0 0.0
        %4397 = vmatprep.subr.mxu0 0.0
        %4398 = vmatpush1.msra.mxu0 0.0
        %4399 = vmatprep.subr.mxu0 0.0
        %4400 = vmatpush1.msra.mxu0 0.0
        %4401 = vmatprep.subr.mxu0 0.0
        %4402 = vmatpush1.msra.mxu0 0.0
        %4403 = vmatprep.subr.mxu0 0.0
        %4404 = vmatpush1.msra.mxu0 %v3879
        %4405 = vmatprep.subr.mxu0 0.0
        %4406 = vmatpush1.msra.mxu0 %v3878
        %4407 = vmatprep.subr.mxu0 0.0
        %4408 = vmatpush2.msra.mxu0 0.0
        %4409 = vmatprep.subr.mxu0 0.0
        %4410 = vmatpush2.msra.mxu0 0.0
        %4411 = vmatprep.subr.mxu0 0.0
        %4412 = vmatpush2.msra.mxu0 0.0
        %4413 = vmatprep.subr.mxu0 0.0
        %4414 = vmatpush2.msra.mxu0 0.0
        %4415 = vmatprep.subr.mxu0 0.0
        %4416 = vmatpush2.msra.mxu0 0.0
        %4417 = vmatprep.subr.mxu0 0.0
        %4418 = vmatpush2.msra.mxu0 0.0
        %4419 = vmatprep.subr.mxu0 0.0
        %4420 = vmatpush2.msra.mxu0 0.0
        %4421 = vmatprep.subr.mxu0 0.0
        %4422 = vmatpush2.msra.mxu0 0.0
        %4423 = vmatprep.subr.mxu0 0.0
        %4424 = vmatpush2.msra.mxu0 0.0
        %4425 = vmatprep.subr.mxu0 0.0
        %4426 = vmatpush2.msra.mxu0 0.0
        %4427 = vmatprep.subr.mxu0 0.0
        %4428 = vmatpush2.msra.mxu0 0.0
        %4429 = vmatprep.subr.mxu0 0.0
        %4430 = vmatpush2.msra.mxu0 0.0
        %4431 = vmatprep.subr.mxu0 0.0
        %4432 = vmatpush2.msra.mxu0 0.0
        %4433 = vmatprep.subr.mxu0 0.0
        %4434 = vmatpush2.msra.mxu0 0.0
        %4435 = vmatprep.subr.mxu0 0.0
        %4436 = vmatpush2.msra.mxu0 0.0
        %4437 = vmatprep.subr.mxu0 0.0
        %4438 = vmatpush2.msra.mxu0 0.0
        %4439 = vmatprep.mubr.f32.mxu0 0.0
        %4440 = vmatmul.mubr.f32.gmra.mxu0 %v4370
        %v4441 = vpop.f32.mrf.mxu0
        %v4442 = vadd.f32 0.0, %v4441
        %v4443 = vpop.f32.mrf.mxu0
        %4444 = vmatprep.mubr.f32.mxu0 0.0
        %4445 = vmatmul.mubr.f32.gmra.mxu0 %v4373
        %v4446 = vpop.f32.mrf.mxu0
        %v4447 = vadd.f32 0.0, %v4446
        %v4448 = vpop.f32.mrf.mxu0
        %4449 = vdwg.mxu0
        %v4451 = vsel %vm3882, %v3745, 0
        %v4454 = vsel %vm3882, %v3849, 0
        %4456 = vmatprep.subr.mxu0 0.0
        %4457 = vmatpush1.msra.mxu0 0.0
        %4458 = vmatprep.subr.mxu0 0.0
        %4459 = vmatpush1.msra.mxu0 0.0
        %4460 = vmatprep.subr.mxu0 0.0
        %4461 = vmatpush1.msra.mxu0 0.0
        %4462 = vmatprep.subr.mxu0 0.0
        %4463 = vmatpush1.msra.mxu0 0.0
        %4464 = vmatprep.subr.mxu0 0.0
        %4465 = vmatpush1.msra.mxu0 0.0
        %4466 = vmatprep.subr.mxu0 0.0
        %4467 = vmatpush1.msra.mxu0 0.0
        %4468 = vmatprep.subr.mxu0 0.0
        %4469 = vmatpush1.msra.mxu0 0.0
        %4470 = vmatprep.subr.mxu0 0.0
        %4471 = vmatpush1.msra.mxu0 0.0
        %4472 = vmatprep.subr.mxu0 0.0
        %4473 = vmatpush1.msra.mxu0 0.0
        %4474 = vmatprep.subr.mxu0 0.0
        %4475 = vmatpush1.msra.mxu0 0.0
        %4476 = vmatprep.subr.mxu0 0.0
        %4477 = vmatpush1.msra.mxu0 0.0
        %4478 = vmatprep.subr.mxu0 0.0
        %4479 = vmatpush1.msra.mxu0 0.0
        %4480 = vmatprep.subr.mxu0 0.0
        %4481 = vmatpush1.msra.mxu0 0.0
        %4482 = vmatprep.subr.mxu0 0.0
        %4483 = vmatpush1.msra.mxu0 0.0
        %4484 = vmatprep.subr.mxu0 0.0
        %4485 = vmatpush1.msra.mxu0 %v3881
        %4486 = vmatprep.subr.mxu0 0.0
        %4487 = vmatpush1.msra.mxu0 %v3880
        %4488 = vmatprep.subr.mxu0 0.0
        %4489 = vmatpush2.msra.mxu0 0.0
        %4490 = vmatprep.subr.mxu0 0.0
        %4491 = vmatpush2.msra.mxu0 0.0
        %4492 = vmatprep.subr.mxu0 0.0
        %4493 = vmatpush2.msra.mxu0 0.0
        %4494 = vmatprep.subr.mxu0 0.0
        %4495 = vmatpush2.msra.mxu0 0.0
        %4496 = vmatprep.subr.mxu0 0.0
        %4497 = vmatpush2.msra.mxu0 0.0
        %4498 = vmatprep.subr.mxu0 0.0
        %4499 = vmatpush2.msra.mxu0 0.0
        %4500 = vmatprep.subr.mxu0 0.0
        %4501 = vmatpush2.msra.mxu0 0.0
        %4502 = vmatprep.subr.mxu0 0.0
        %4503 = vmatpush2.msra.mxu0 0.0
        %4504 = vmatprep.subr.mxu0 0.0
        %4505 = vmatpush2.msra.mxu0 0.0
        %4506 = vmatprep.subr.mxu0 0.0
        %4507 = vmatpush2.msra.mxu0 0.0
        %4508 = vmatprep.subr.mxu0 0.0
        %4509 = vmatpush2.msra.mxu0 0.0
        %4510 = vmatprep.subr.mxu0 0.0
        %4511 = vmatpush2.msra.mxu0 0.0
        %4512 = vmatprep.subr.mxu0 0.0
        %4513 = vmatpush2.msra.mxu0 0.0
        %4514 = vmatprep.subr.mxu0 0.0
        %4515 = vmatpush2.msra.mxu0 0.0
        %4516 = vmatprep.subr.mxu0 0.0
        %4517 = vmatpush2.msra.mxu0 0.0
        %4518 = vmatprep.subr.mxu0 0.0
        %4519 = vmatpush2.msra.mxu0 0.0
        %4520 = vmatprep.mubr.f32.mxu0 0.0
        %4521 = vmatmul.mubr.f32.gmra.mxu0 %v4451
        %v4522 = vpop.f32.mrf.mxu0
        %v4523 = vadd.f32 0.0, %v4522
        %v4524 = vpop.f32.mrf.mxu0
        %4525 = vmatprep.mubr.f32.mxu0 0.0
        %4526 = vmatmul.mubr.f32.gmra.mxu0 %v4454
        %v4527 = vpop.f32.mrf.mxu0
        %v4528 = vadd.f32 0.0, %v4527
        %v4529 = vpop.f32.mrf.mxu0
        %4530 = vdwg.mxu0
        %v4532 = vsel %vm3882, %v640, 0
        %v4535 = vsel %vm3882, %v743, 0
        %4537 = vmatprep.subr.mxu0 0.0
        %4538 = vmatpush1.msra.mxu0 0.0
        %4539 = vmatprep.subr.mxu0 0.0
        %4540 = vmatpush1.msra.mxu0 0.0
        %4541 = vmatprep.subr.mxu0 0.0
        %4542 = vmatpush1.msra.mxu0 0.0
        %4543 = vmatprep.subr.mxu0 0.0
        %4544 = vmatpush1.msra.mxu0 0.0
        %4545 = vmatprep.subr.mxu0 0.0
        %4546 = vmatpush1.msra.mxu0 0.0
        %4547 = vmatprep.subr.mxu0 0.0
        %4548 = vmatpush1.msra.mxu0 0.0
        %4549 = vmatprep.subr.mxu0 0.0
        %4550 = vmatpush1.msra.mxu0 0.0
        %4551 = vmatprep.subr.mxu0 0.0
        %4552 = vmatpush1.msra.mxu0 0.0
        %4553 = vmatprep.subr.mxu0 0.0
        %4554 = vmatpush1.msra.mxu0 0.0
        %4555 = vmatprep.subr.mxu0 0.0
        %4556 = vmatpush1.msra.mxu0 0.0
        %4557 = vmatprep.subr.mxu0 0.0
        %4558 = vmatpush1.msra.mxu0 0.0
        %4559 = vmatprep.subr.mxu0 0.0
        %4560 = vmatpush1.msra.mxu0 0.0
        %4561 = vmatprep.subr.mxu0 0.0
        %4562 = vmatpush1.msra.mxu0 0.0
        %4563 = vmatprep.subr.mxu0 0.0
        %4564 = vmatpush1.msra.mxu0 0.0
        %4565 = vmatprep.subr.mxu0 0.0
        %4566 = vmatpush1.msra.mxu0 %v3851
        %4567 = vmatprep.subr.mxu0 0.0
        %4568 = vmatpush1.msra.mxu0 %v3850
        %4569 = vmatprep.subr.mxu0 0.0
        %4570 = vmatpush2.msra.mxu0 0.0
        %4571 = vmatprep.subr.mxu0 0.0
        %4572 = vmatpush2.msra.mxu0 0.0
        %4573 = vmatprep.subr.mxu0 0.0
        %4574 = vmatpush2.msra.mxu0 0.0
        %4575 = vmatprep.subr.mxu0 0.0
        %4576 = vmatpush2.msra.mxu0 0.0
        %4577 = vmatprep.subr.mxu0 0.0
        %4578 = vmatpush2.msra.mxu0 0.0
        %4579 = vmatprep.subr.mxu0 0.0
        %4580 = vmatpush2.msra.mxu0 0.0
        %4581 = vmatprep.subr.mxu0 0.0
        %4582 = vmatpush2.msra.mxu0 0.0
        %4583 = vmatprep.subr.mxu0 0.0
        %4584 = vmatpush2.msra.mxu0 0.0
        %4585 = vmatprep.subr.mxu0 0.0
        %4586 = vmatpush2.msra.mxu0 0.0
        %4587 = vmatprep.subr.mxu0 0.0
        %4588 = vmatpush2.msra.mxu0 0.0
        %4589 = vmatprep.subr.mxu0 0.0
        %4590 = vmatpush2.msra.mxu0 0.0
        %4591 = vmatprep.subr.mxu0 0.0
        %4592 = vmatpush2.msra.mxu0 0.0
        %4593 = vmatprep.subr.mxu0 0.0
        %4594 = vmatpush2.msra.mxu0 0.0
        %4595 = vmatprep.subr.mxu0 0.0
        %4596 = vmatpush2.msra.mxu0 0.0
        %4597 = vmatprep.subr.mxu0 0.0
        %4598 = vmatpush2.msra.mxu0 0.0
        %4599 = vmatprep.subr.mxu0 0.0
        %4600 = vmatpush2.msra.mxu0 0.0
        %4601 = vmatprep.mubr.f32.mxu0 0.0
        %4602 = vmatmul.mubr.f32.gmra.mxu0 %v4532
        %v4603 = vpop.f32.mrf.mxu0
        %v4604 = vadd.f32 %v3956, %v4603
        %v4605 = vpop.f32.mrf.mxu0
        %4606 = vmatprep.mubr.f32.mxu0 0.0
        %4607 = vmatmul.mubr.f32.gmra.mxu0 %v4535
        %v4608 = vpop.f32.mrf.mxu0
        %v4609 = vadd.f32 %v3961, %v4608
        %v4610 = vpop.f32.mrf.mxu0
        %4611 = vdwg.mxu0
        %v4613 = vsel %vm3882, %v846, 0
        %v4616 = vsel %vm3882, %v949, 0
        %4618 = vmatprep.subr.mxu0 0.0
        %4619 = vmatpush1.msra.mxu0 0.0
        %4620 = vmatprep.subr.mxu0 0.0
        %4621 = vmatpush1.msra.mxu0 0.0
        %4622 = vmatprep.subr.mxu0 0.0
        %4623 = vmatpush1.msra.mxu0 0.0
        %4624 = vmatprep.subr.mxu0 0.0
        %4625 = vmatpush1.msra.mxu0 0.0
        %4626 = vmatprep.subr.mxu0 0.0
        %4627 = vmatpush1.msra.mxu0 0.0
        %4628 = vmatprep.subr.mxu0 0.0
        %4629 = vmatpush1.msra.mxu0 0.0
        %4630 = vmatprep.subr.mxu0 0.0
        %4631 = vmatpush1.msra.mxu0 0.0
        %4632 = vmatprep.subr.mxu0 0.0
        %4633 = vmatpush1.msra.mxu0 0.0
        %4634 = vmatprep.subr.mxu0 0.0
        %4635 = vmatpush1.msra.mxu0 0.0
        %4636 = vmatprep.subr.mxu0 0.0
        %4637 = vmatpush1.msra.mxu0 0.0
        %4638 = vmatprep.subr.mxu0 0.0
        %4639 = vmatpush1.msra.mxu0 0.0
        %4640 = vmatprep.subr.mxu0 0.0
        %4641 = vmatpush1.msra.mxu0 0.0
        %4642 = vmatprep.subr.mxu0 0.0
        %4643 = vmatpush1.msra.mxu0 0.0
        %4644 = vmatprep.subr.mxu0 0.0
        %4645 = vmatpush1.msra.mxu0 0.0
        %4646 = vmatprep.subr.mxu0 0.0
        %4647 = vmatpush1.msra.mxu0 %v3853
        %4648 = vmatprep.subr.mxu0 0.0
        %4649 = vmatpush1.msra.mxu0 %v3852
        %4650 = vmatprep.subr.mxu0 0.0
        %4651 = vmatpush2.msra.mxu0 0.0
        %4652 = vmatprep.subr.mxu0 0.0
        %4653 = vmatpush2.msra.mxu0 0.0
        %4654 = vmatprep.subr.mxu0 0.0
        %4655 = vmatpush2.msra.mxu0 0.0
        %4656 = vmatprep.subr.mxu0 0.0
        %4657 = vmatpush2.msra.mxu0 0.0
        %4658 = vmatprep.subr.mxu0 0.0
        %4659 = vmatpush2.msra.mxu0 0.0
        %4660 = vmatprep.subr.mxu0 0.0
        %4661 = vmatpush2.msra.mxu0 0.0
        %4662 = vmatprep.subr.mxu0 0.0
        %4663 = vmatpush2.msra.mxu0 0.0
        %4664 = vmatprep.subr.mxu0 0.0
        %4665 = vmatpush2.msra.mxu0 0.0
        %4666 = vmatprep.subr.mxu0 0.0
        %4667 = vmatpush2.msra.mxu0 0.0
        %4668 = vmatprep.subr.mxu0 0.0
        %4669 = vmatpush2.msra.mxu0 0.0
        %4670 = vmatprep.subr.mxu0 0.0
        %4671 = vmatpush2.msra.mxu0 0.0
        %4672 = vmatprep.subr.mxu0 0.0
        %4673 = vmatpush2.msra.mxu0 0.0
        %4674 = vmatprep.subr.mxu0 0.0
        %4675 = vmatpush2.msra.mxu0 0.0
        %4676 = vmatprep.subr.mxu0 0.0
        %4677 = vmatpush2.msra.mxu0 0.0
        %4678 = vmatprep.subr.mxu0 0.0
        %4679 = vmatpush2.msra.mxu0 0.0
        %4680 = vmatprep.subr.mxu0 0.0
        %4681 = vmatpush2.msra.mxu0 0.0
        %4682 = vmatprep.mubr.f32.mxu0 0.0
        %4683 = vmatmul.mubr.f32.gmra.mxu0 %v4613
        %v4684 = vpop.f32.mrf.mxu0
        %v4685 = vadd.f32 %v4037, %v4684
        %v4686 = vpop.f32.mrf.mxu0
        %4687 = vmatprep.mubr.f32.mxu0 0.0
        %4688 = vmatmul.mubr.f32.gmra.mxu0 %v4616
        %v4689 = vpop.f32.mrf.mxu0
        %v4690 = vadd.f32 %v4042, %v4689
        %v4691 = vpop.f32.mrf.mxu0
        %4692 = vdwg.mxu0
        %v4694 = vsel %vm3882, %v1052, 0
        %v4697 = vsel %vm3882, %v1155, 0
        %4699 = vmatprep.subr.mxu0 0.0
        %4700 = vmatpush1.msra.mxu0 0.0
        %4701 = vmatprep.subr.mxu0 0.0
        %4702 = vmatpush1.msra.mxu0 0.0
        %4703 = vmatprep.subr.mxu0 0.0
        %4704 = vmatpush1.msra.mxu0 0.0
        %4705 = vmatprep.subr.mxu0 0.0
        %4706 = vmatpush1.msra.mxu0 0.0
        %4707 = vmatprep.subr.mxu0 0.0
        %4708 = vmatpush1.msra.mxu0 0.0
        %4709 = vmatprep.subr.mxu0 0.0
        %4710 = vmatpush1.msra.mxu0 0.0
        %4711 = vmatprep.subr.mxu0 0.0
        %4712 = vmatpush1.msra.mxu0 0.0
        %4713 = vmatprep.subr.mxu0 0.0
        %4714 = vmatpush1.msra.mxu0 0.0
        %4715 = vmatprep.subr.mxu0 0.0
        %4716 = vmatpush1.msra.mxu0 0.0
        %4717 = vmatprep.subr.mxu0 0.0
        %4718 = vmatpush1.msra.mxu0 0.0
        %4719 = vmatprep.subr.mxu0 0.0
        %4720 = vmatpush1.msra.mxu0 0.0
        %4721 = vmatprep.subr.mxu0 0.0
        %4722 = vmatpush1.msra.mxu0 0.0
        %4723 = vmatprep.subr.mxu0 0.0
        %4724 = vmatpush1.msra.mxu0 0.0
        %4725 = vmatprep.subr.mxu0 0.0
        %4726 = vmatpush1.msra.mxu0 0.0
        %4727 = vmatprep.subr.mxu0 0.0
        %4728 = vmatpush1.msra.mxu0 %v3855
        %4729 = vmatprep.subr.mxu0 0.0
        %4730 = vmatpush1.msra.mxu0 %v3854
        %4731 = vmatprep.subr.mxu0 0.0
        %4732 = vmatpush2.msra.mxu0 0.0
        %4733 = vmatprep.subr.mxu0 0.0
        %4734 = vmatpush2.msra.mxu0 0.0
        %4735 = vmatprep.subr.mxu0 0.0
        %4736 = vmatpush2.msra.mxu0 0.0
        %4737 = vmatprep.subr.mxu0 0.0
        %4738 = vmatpush2.msra.mxu0 0.0
        %4739 = vmatprep.subr.mxu0 0.0
        %4740 = vmatpush2.msra.mxu0 0.0
        %4741 = vmatprep.subr.mxu0 0.0
        %4742 = vmatpush2.msra.mxu0 0.0
        %4743 = vmatprep.subr.mxu0 0.0
        %4744 = vmatpush2.msra.mxu0 0.0
        %4745 = vmatprep.subr.mxu0 0.0
        %4746 = vmatpush2.msra.mxu0 0.0
        %4747 = vmatprep.subr.mxu0 0.0
        %4748 = vmatpush2.msra.mxu0 0.0
        %4749 = vmatprep.subr.mxu0 0.0
        %4750 = vmatpush2.msra.mxu0 0.0
        %4751 = vmatprep.subr.mxu0 0.0
        %4752 = vmatpush2.msra.mxu0 0.0
        %4753 = vmatprep.subr.mxu0 0.0
        %4754 = vmatpush2.msra.mxu0 0.0
        %4755 = vmatprep.subr.mxu0 0.0
        %4756 = vmatpush2.msra.mxu0 0.0
        %4757 = vmatprep.subr.mxu0 0.0
        %4758 = vmatpush2.msra.mxu0 0.0
        %4759 = vmatprep.subr.mxu0 0.0
        %4760 = vmatpush2.msra.mxu0 0.0
        %4761 = vmatprep.subr.mxu0 0.0
        %4762 = vmatpush2.msra.mxu0 0.0
        %4763 = vmatprep.mubr.f32.mxu0 0.0
        %4764 = vmatmul.mubr.f32.gmra.mxu0 %v4694
        %v4765 = vpop.f32.mrf.mxu0
        %v4766 = vadd.f32 %v4118, %v4765
        %v4767 = vpop.f32.mrf.mxu0
        %4768 = vmatprep.mubr.f32.mxu0 0.0
        %4769 = vmatmul.mubr.f32.gmra.mxu0 %v4697
        %v4770 = vpop.f32.mrf.mxu0
        %v4771 = vadd.f32 %v4123, %v4770
        %v4772 = vpop.f32.mrf.mxu0
        %4773 = vdwg.mxu0
        %v4775 = vsel %vm3882, %v1258, 0
        %v4778 = vsel %vm3882, %v1361, 0
        %4780 = vmatprep.subr.mxu0 0.0
        %4781 = vmatpush1.msra.mxu0 0.0
        %4782 = vmatprep.subr.mxu0 0.0
        %4783 = vmatpush1.msra.mxu0 0.0
        %4784 = vmatprep.subr.mxu0 0.0
        %4785 = vmatpush1.msra.mxu0 0.0
        %4786 = vmatprep.subr.mxu0 0.0
        %4787 = vmatpush1.msra.mxu0 0.0
        %4788 = vmatprep.subr.mxu0 0.0
        %4789 = vmatpush1.msra.mxu0 0.0
        %4790 = vmatprep.subr.mxu0 0.0
        %4791 = vmatpush1.msra.mxu0 0.0
        %4792 = vmatprep.subr.mxu0 0.0
        %4793 = vmatpush1.msra.mxu0 0.0
        %4794 = vmatprep.subr.mxu0 0.0
        %4795 = vmatpush1.msra.mxu0 0.0
        %4796 = vmatprep.subr.mxu0 0.0
        %4797 = vmatpush1.msra.mxu0 0.0
        %4798 = vmatprep.subr.mxu0 0.0
        %4799 = vmatpush1.msra.mxu0 0.0
        %4800 = vmatprep.subr.mxu0 0.0
        %4801 = vmatpush1.msra.mxu0 0.0
        %4802 = vmatprep.subr.mxu0 0.0
        %4803 = vmatpush1.msra.mxu0 0.0
        %4804 = vmatprep.subr.mxu0 0.0
        %4805 = vmatpush1.msra.mxu0 0.0
        %4806 = vmatprep.subr.mxu0 0.0
        %4807 = vmatpush1.msra.mxu0 0.0
        %4808 = vmatprep.subr.mxu0 0.0
        %4809 = vmatpush1.msra.mxu0 %v3857
        %4810 = vmatprep.subr.mxu0 0.0
        %4811 = vmatpush1.msra.mxu0 %v3856
        %4812 = vmatprep.subr.mxu0 0.0
        %4813 = vmatpush2.msra.mxu0 0.0
        %4814 = vmatprep.subr.mxu0 0.0
        %4815 = vmatpush2.msra.mxu0 0.0
        %4816 = vmatprep.subr.mxu0 0.0
        %4817 = vmatpush2.msra.mxu0 0.0
        %4818 = vmatprep.subr.mxu0 0.0
        %4819 = vmatpush2.msra.mxu0 0.0
        %4820 = vmatprep.subr.mxu0 0.0
        %4821 = vmatpush2.msra.mxu0 0.0
        %4822 = vmatprep.subr.mxu0 0.0
        %4823 = vmatpush2.msra.mxu0 0.0
        %4824 = vmatprep.subr.mxu0 0.0
        %4825 = vmatpush2.msra.mxu0 0.0
        %4826 = vmatprep.subr.mxu0 0.0
        %4827 = vmatpush2.msra.mxu0 0.0
        %4828 = vmatprep.subr.mxu0 0.0
        %4829 = vmatpush2.msra.mxu0 0.0
        %4830 = vmatprep.subr.mxu0 0.0
        %4831 = vmatpush2.msra.mxu0 0.0
        %4832 = vmatprep.subr.mxu0 0.0
        %4833 = vmatpush2.msra.mxu0 0.0
        %4834 = vmatprep.subr.mxu0 0.0
        %4835 = vmatpush2.msra.mxu0 0.0
        %4836 = vmatprep.subr.mxu0 0.0
        %4837 = vmatpush2.msra.mxu0 0.0
        %4838 = vmatprep.subr.mxu0 0.0
        %4839 = vmatpush2.msra.mxu0 0.0
        %4840 = vmatprep.subr.mxu0 0.0
        %4841 = vmatpush2.msra.mxu0 0.0
        %4842 = vmatprep.subr.mxu0 0.0
        %4843 = vmatpush2.msra.mxu0 0.0
        %4844 = vmatprep.mubr.f32.mxu0 0.0
        %4845 = vmatmul.mubr.f32.gmra.mxu0 %v4775
        %v4846 = vpop.f32.mrf.mxu0
        %v4847 = vadd.f32 %v4199, %v4846
        %v4848 = vpop.f32.mrf.mxu0
        %4849 = vmatprep.mubr.f32.mxu0 0.0
        %4850 = vmatmul.mubr.f32.gmra.mxu0 %v4778
        %v4851 = vpop.f32.mrf.mxu0
        %v4852 = vadd.f32 %v4204, %v4851
        %v4853 = vpop.f32.mrf.mxu0
        %4854 = vdwg.mxu0
        %v4856 = vsel %vm3882, %v1464, 0
        %v4859 = vsel %vm3882, %v1567, 0
        %4861 = vmatprep.subr.mxu0 0.0
        %4862 = vmatpush1.msra.mxu0 0.0
        %4863 = vmatprep.subr.mxu0 0.0
        %4864 = vmatpush1.msra.mxu0 0.0
        %4865 = vmatprep.subr.mxu0 0.0
        %4866 = vmatpush1.msra.mxu0 0.0
        %4867 = vmatprep.subr.mxu0 0.0
        %4868 = vmatpush1.msra.mxu0 0.0
        %4869 = vmatprep.subr.mxu0 0.0
        %4870 = vmatpush1.msra.mxu0 0.0
        %4871 = vmatprep.subr.mxu0 0.0
        %4872 = vmatpush1.msra.mxu0 0.0
        %4873 = vmatprep.subr.mxu0 0.0
        %4874 = vmatpush1.msra.mxu0 0.0
        %4875 = vmatprep.subr.mxu0 0.0
        %4876 = vmatpush1.msra.mxu0 0.0
        %4877 = vmatprep.subr.mxu0 0.0
        %4878 = vmatpush1.msra.mxu0 0.0
        %4879 = vmatprep.subr.mxu0 0.0
        %4880 = vmatpush1.msra.mxu0 0.0
        %4881 = vmatprep.subr.mxu0 0.0
        %4882 = vmatpush1.msra.mxu0 0.0
        %4883 = vmatprep.subr.mxu0 0.0
        %4884 = vmatpush1.msra.mxu0 0.0
        %4885 = vmatprep.subr.mxu0 0.0
        %4886 = vmatpush1.msra.mxu0 0.0
        %4887 = vmatprep.subr.mxu0 0.0
        %4888 = vmatpush1.msra.mxu0 0.0
        %4889 = vmatprep.subr.mxu0 0.0
        %4890 = vmatpush1.msra.mxu0 %v3859
        %4891 = vmatprep.subr.mxu0 0.0
        %4892 = vmatpush1.msra.mxu0 %v3858
        %4893 = vmatprep.subr.mxu0 0.0
        %4894 = vmatpush2.msra.mxu0 0.0
        %4895 = vmatprep.subr.mxu0 0.0
        %4896 = vmatpush2.msra.mxu0 0.0
        %4897 = vmatprep.subr.mxu0 0.0
        %4898 = vmatpush2.msra.mxu0 0.0
        %4899 = vmatprep.subr.mxu0 0.0
        %4900 = vmatpush2.msra.mxu0 0.0
        %4901 = vmatprep.subr.mxu0 0.0
        %4902 = vmatpush2.msra.mxu0 0.0
        %4903 = vmatprep.subr.mxu0 0.0
        %4904 = vmatpush2.msra.mxu0 0.0
        %4905 = vmatprep.subr.mxu0 0.0
        %4906 = vmatpush2.msra.mxu0 0.0
        %4907 = vmatprep.subr.mxu0 0.0
        %4908 = vmatpush2.msra.mxu0 0.0
        %4909 = vmatprep.subr.mxu0 0.0
        %4910 = vmatpush2.msra.mxu0 0.0
        %4911 = vmatprep.subr.mxu0 0.0
        %4912 = vmatpush2.msra.mxu0 0.0
        %4913 = vmatprep.subr.mxu0 0.0
        %4914 = vmatpush2.msra.mxu0 0.0
        %4915 = vmatprep.subr.mxu0 0.0
        %4916 = vmatpush2.msra.mxu0 0.0
        %4917 = vmatprep.subr.mxu0 0.0
        %4918 = vmatpush2.msra.mxu0 0.0
        %4919 = vmatprep.subr.mxu0 0.0
        %4920 = vmatpush2.msra.mxu0 0.0
        %4921 = vmatprep.subr.mxu0 0.0
        %4922 = vmatpush2.msra.mxu0 0.0
        %4923 = vmatprep.subr.mxu0 0.0
        %4924 = vmatpush2.msra.mxu0 0.0
        %4925 = vmatprep.mubr.f32.mxu0 0.0
        %4926 = vmatmul.mubr.f32.gmra.mxu0 %v4856
        %v4927 = vpop.f32.mrf.mxu0
        %v4928 = vadd.f32 %v4280, %v4927
        %v4929 = vpop.f32.mrf.mxu0
        %4930 = vmatprep.mubr.f32.mxu0 0.0
        %4931 = vmatmul.mubr.f32.gmra.mxu0 %v4859
        %v4932 = vpop.f32.mrf.mxu0
        %v4933 = vadd.f32 %v4285, %v4932
        %v4934 = vpop.f32.mrf.mxu0
        %4935 = vdwg.mxu0
        %v4937 = vsel %vm3882, %v1670, 0
        %v4940 = vsel %vm3882, %v1773, 0
        %4942 = vmatprep.subr.mxu0 0.0
        %4943 = vmatpush1.msra.mxu0 0.0
        %4944 = vmatprep.subr.mxu0 0.0
        %4945 = vmatpush1.msra.mxu0 0.0
        %4946 = vmatprep.subr.mxu0 0.0
        %4947 = vmatpush1.msra.mxu0 0.0
        %4948 = vmatprep.subr.mxu0 0.0
        %4949 = vmatpush1.msra.mxu0 0.0
        %4950 = vmatprep.subr.mxu0 0.0
        %4951 = vmatpush1.msra.mxu0 0.0
        %4952 = vmatprep.subr.mxu0 0.0
        %4953 = vmatpush1.msra.mxu0 0.0
        %4954 = vmatprep.subr.mxu0 0.0
        %4955 = vmatpush1.msra.mxu0 0.0
        %4956 = vmatprep.subr.mxu0 0.0
        %4957 = vmatpush1.msra.mxu0 0.0
        %4958 = vmatprep.subr.mxu0 0.0
        %4959 = vmatpush1.msra.mxu0 0.0
        %4960 = vmatprep.subr.mxu0 0.0
        %4961 = vmatpush1.msra.mxu0 0.0
        %4962 = vmatprep.subr.mxu0 0.0
        %4963 = vmatpush1.msra.mxu0 0.0
        %4964 = vmatprep.subr.mxu0 0.0
        %4965 = vmatpush1.msra.mxu0 0.0
        %4966 = vmatprep.subr.mxu0 0.0
        %4967 = vmatpush1.msra.mxu0 0.0
        %4968 = vmatprep.subr.mxu0 0.0
        %4969 = vmatpush1.msra.mxu0 0.0
        %4970 = vmatprep.subr.mxu0 0.0
        %4971 = vmatpush1.msra.mxu0 %v3861
        %4972 = vmatprep.subr.mxu0 0.0
        %4973 = vmatpush1.msra.mxu0 %v3860
        %4974 = vmatprep.subr.mxu0 0.0
        %4975 = vmatpush2.msra.mxu0 0.0
        %4976 = vmatprep.subr.mxu0 0.0
        %4977 = vmatpush2.msra.mxu0 0.0
        %4978 = vmatprep.subr.mxu0 0.0
        %4979 = vmatpush2.msra.mxu0 0.0
        %4980 = vmatprep.subr.mxu0 0.0
        %4981 = vmatpush2.msra.mxu0 0.0
        %4982 = vmatprep.subr.mxu0 0.0
        %4983 = vmatpush2.msra.mxu0 0.0
        %4984 = vmatprep.subr.mxu0 0.0
        %4985 = vmatpush2.msra.mxu0 0.0
        %4986 = vmatprep.subr.mxu0 0.0
        %4987 = vmatpush2.msra.mxu0 0.0
        %4988 = vmatprep.subr.mxu0 0.0
        %4989 = vmatpush2.msra.mxu0 0.0
        %4990 = vmatprep.subr.mxu0 0.0
        %4991 = vmatpush2.msra.mxu0 0.0
        %4992 = vmatprep.subr.mxu0 0.0
        %4993 = vmatpush2.msra.mxu0 0.0
        %4994 = vmatprep.subr.mxu0 0.0
        %4995 = vmatpush2.msra.mxu0 0.0
        %4996 = vmatprep.subr.mxu0 0.0
        %4997 = vmatpush2.msra.mxu0 0.0
        %4998 = vmatprep.subr.mxu0 0.0
        %4999 = vmatpush2.msra.mxu0 0.0
        %5000 = vmatprep.subr.mxu0 0.0
        %5001 = vmatpush2.msra.mxu0 0.0
        %5002 = vmatprep.subr.mxu0 0.0
        %5003 = vmatpush2.msra.mxu0 0.0
        %5004 = vmatprep.subr.mxu0 0.0
        %5005 = vmatpush2.msra.mxu0 0.0
        %5006 = vmatprep.mubr.f32.mxu0 0.0
        %5007 = vmatmul.mubr.f32.gmra.mxu0 %v4937
        %v5008 = vpop.f32.mrf.mxu0
        %v5009 = vadd.f32 %v4361, %v5008
        %v5010 = vpop.f32.mrf.mxu0
        %5011 = vmatprep.mubr.f32.mxu0 0.0
        %5012 = vmatmul.mubr.f32.gmra.mxu0 %v4940
        %v5013 = vpop.f32.mrf.mxu0
        %v5014 = vadd.f32 %v4366, %v5013
        %v5015 = vpop.f32.mrf.mxu0
        %5016 = vdwg.mxu0
        %v5018 = vsel %vm3882, %v1876, 0
        %v5021 = vsel %vm3882, %v1979, 0
        %5023 = vmatprep.subr.mxu0 0.0
        %5024 = vmatpush1.msra.mxu0 0.0
        %5025 = vmatprep.subr.mxu0 0.0
        %5026 = vmatpush1.msra.mxu0 0.0
        %5027 = vmatprep.subr.mxu0 0.0
        %5028 = vmatpush1.msra.mxu0 0.0
        %5029 = vmatprep.subr.mxu0 0.0
        %5030 = vmatpush1.msra.mxu0 0.0
        %5031 = vmatprep.subr.mxu0 0.0
        %5032 = vmatpush1.msra.mxu0 0.0
        %5033 = vmatprep.subr.mxu0 0.0
        %5034 = vmatpush1.msra.mxu0 0.0
        %5035 = vmatprep.subr.mxu0 0.0
        %5036 = vmatpush1.msra.mxu0 0.0
        %5037 = vmatprep.subr.mxu0 0.0
        %5038 = vmatpush1.msra.mxu0 0.0
        %5039 = vmatprep.subr.mxu0 0.0
        %5040 = vmatpush1.msra.mxu0 0.0
        %5041 = vmatprep.subr.mxu0 0.0
        %5042 = vmatpush1.msra.mxu0 0.0
        %5043 = vmatprep.subr.mxu0 0.0
        %5044 = vmatpush1.msra.mxu0 0.0
        %5045 = vmatprep.subr.mxu0 0.0
        %5046 = vmatpush1.msra.mxu0 0.0
        %5047 = vmatprep.subr.mxu0 0.0
        %5048 = vmatpush1.msra.mxu0 0.0
        %5049 = vmatprep.subr.mxu0 0.0
        %5050 = vmatpush1.msra.mxu0 0.0
        %5051 = vmatprep.subr.mxu0 0.0
        %5052 = vmatpush1.msra.mxu0 %v3863
        %5053 = vmatprep.subr.mxu0 0.0
        %5054 = vmatpush1.msra.mxu0 %v3862
        %5055 = vmatprep.subr.mxu0 0.0
        %5056 = vmatpush2.msra.mxu0 0.0
        %5057 = vmatprep.subr.mxu0 0.0
        %5058 = vmatpush2.msra.mxu0 0.0
        %5059 = vmatprep.subr.mxu0 0.0
        %5060 = vmatpush2.msra.mxu0 0.0
        %5061 = vmatprep.subr.mxu0 0.0
        %5062 = vmatpush2.msra.mxu0 0.0
        %5063 = vmatprep.subr.mxu0 0.0
        %5064 = vmatpush2.msra.mxu0 0.0
        %5065 = vmatprep.subr.mxu0 0.0
        %5066 = vmatpush2.msra.mxu0 0.0
        %5067 = vmatprep.subr.mxu0 0.0
        %5068 = vmatpush2.msra.mxu0 0.0
        %5069 = vmatprep.subr.mxu0 0.0
        %5070 = vmatpush2.msra.mxu0 0.0
        %5071 = vmatprep.subr.mxu0 0.0
        %5072 = vmatpush2.msra.mxu0 0.0
        %5073 = vmatprep.subr.mxu0 0.0
        %5074 = vmatpush2.msra.mxu0 0.0
        %5075 = vmatprep.subr.mxu0 0.0
        %5076 = vmatpush2.msra.mxu0 0.0
        %5077 = vmatprep.subr.mxu0 0.0
        %5078 = vmatpush2.msra.mxu0 0.0
        %5079 = vmatprep.subr.mxu0 0.0
        %5080 = vmatpush2.msra.mxu0 0.0
        %5081 = vmatprep.subr.mxu0 0.0
        %5082 = vmatpush2.msra.mxu0 0.0
        %5083 = vmatprep.subr.mxu0 0.0
        %5084 = vmatpush2.msra.mxu0 0.0
        %5085 = vmatprep.subr.mxu0 0.0
        %5086 = vmatpush2.msra.mxu0 0.0
        %5087 = vmatprep.mubr.f32.mxu0 0.0
        %5088 = vmatmul.mubr.f32.gmra.mxu0 %v5018
        %v5089 = vpop.f32.mrf.mxu0
        %v5090 = vadd.f32 %v4442, %v5089
        %v5091 = vpop.f32.mrf.mxu0
        %5092 = vmatprep.mubr.f32.mxu0 0.0
        %5093 = vmatmul.mubr.f32.gmra.mxu0 %v5021
        %v5094 = vpop.f32.mrf.mxu0
        %v5095 = vadd.f32 %v4447, %v5094
        %v5096 = vpop.f32.mrf.mxu0
        %5097 = vdwg.mxu0
        %v5099 = vsel %vm3882, %v2082, 0
        %v5102 = vsel %vm3882, %v2185, 0
        %5104 = vmatprep.subr.mxu0 0.0
        %5105 = vmatpush1.msra.mxu0 0.0
        %5106 = vmatprep.subr.mxu0 0.0
        %5107 = vmatpush1.msra.mxu0 0.0
        %5108 = vmatprep.subr.mxu0 0.0
        %5109 = vmatpush1.msra.mxu0 0.0
        %5110 = vmatprep.subr.mxu0 0.0
        %5111 = vmatpush1.msra.mxu0 0.0
        %5112 = vmatprep.subr.mxu0 0.0
        %5113 = vmatpush1.msra.mxu0 0.0
        %5114 = vmatprep.subr.mxu0 0.0
        %5115 = vmatpush1.msra.mxu0 0.0
        %5116 = vmatprep.subr.mxu0 0.0
        %5117 = vmatpush1.msra.mxu0 0.0
        %5118 = vmatprep.subr.mxu0 0.0
        %5119 = vmatpush1.msra.mxu0 0.0
        %5120 = vmatprep.subr.mxu0 0.0
        %5121 = vmatpush1.msra.mxu0 0.0
        %5122 = vmatprep.subr.mxu0 0.0
        %5123 = vmatpush1.msra.mxu0 0.0
        %5124 = vmatprep.subr.mxu0 0.0
        %5125 = vmatpush1.msra.mxu0 0.0
        %5126 = vmatprep.subr.mxu0 0.0
        %5127 = vmatpush1.msra.mxu0 0.0
        %5128 = vmatprep.subr.mxu0 0.0
        %5129 = vmatpush1.msra.mxu0 0.0
        %5130 = vmatprep.subr.mxu0 0.0
        %5131 = vmatpush1.msra.mxu0 0.0
        %5132 = vmatprep.subr.mxu0 0.0
        %5133 = vmatpush1.msra.mxu0 %v3865
        %5134 = vmatprep.subr.mxu0 0.0
        %5135 = vmatpush1.msra.mxu0 %v3864
        %5136 = vmatprep.subr.mxu0 0.0
        %5137 = vmatpush2.msra.mxu0 0.0
        %5138 = vmatprep.subr.mxu0 0.0
        %5139 = vmatpush2.msra.mxu0 0.0
        %5140 = vmatprep.subr.mxu0 0.0
        %5141 = vmatpush2.msra.mxu0 0.0
        %5142 = vmatprep.subr.mxu0 0.0
        %5143 = vmatpush2.msra.mxu0 0.0
        %5144 = vmatprep.subr.mxu0 0.0
        %5145 = vmatpush2.msra.mxu0 0.0
        %5146 = vmatprep.subr.mxu0 0.0
        %5147 = vmatpush2.msra.mxu0 0.0
        %5148 = vmatprep.subr.mxu0 0.0
        %5149 = vmatpush2.msra.mxu0 0.0
        %5150 = vmatprep.subr.mxu0 0.0
        %5151 = vmatpush2.msra.mxu0 0.0
        %5152 = vmatprep.subr.mxu0 0.0
        %5153 = vmatpush2.msra.mxu0 0.0
        %5154 = vmatprep.subr.mxu0 0.0
        %5155 = vmatpush2.msra.mxu0 0.0
        %5156 = vmatprep.subr.mxu0 0.0
        %5157 = vmatpush2.msra.mxu0 0.0
        %5158 = vmatprep.subr.mxu0 0.0
        %5159 = vmatpush2.msra.mxu0 0.0
        %5160 = vmatprep.subr.mxu0 0.0
        %5161 = vmatpush2.msra.mxu0 0.0
        %5162 = vmatprep.subr.mxu0 0.0
        %5163 = vmatpush2.msra.mxu0 0.0
        %5164 = vmatprep.subr.mxu0 0.0
        %5165 = vmatpush2.msra.mxu0 0.0
        %5166 = vmatprep.subr.mxu0 0.0
        %5167 = vmatpush2.msra.mxu0 0.0
        %5168 = vmatprep.mubr.f32.mxu0 0.0
        %5169 = vmatmul.mubr.f32.gmra.mxu0 %v5099
        %v5170 = vpop.f32.mrf.mxu0
        %v5171 = vadd.f32 %v4523, %v5170
        %v5172 = vpop.f32.mrf.mxu0
        %5173 = vmatprep.mubr.f32.mxu0 0.0
        %5174 = vmatmul.mubr.f32.gmra.mxu0 %v5102
        %v5175 = vpop.f32.mrf.mxu0
        %v5176 = vadd.f32 %v4528, %v5175
        %v5177 = vpop.f32.mrf.mxu0
        %5178 = vdwg.mxu0
        %v5179 = vld [vmem:[#allocation5] sm:$0xff]
        %v5180 = vld [vmem:[#allocation5 + $0x8] sm:$0xff]
        %v5181 = vadd.f32 %v4604, %v5179
        %v5182 = vadd.f32 %v4609, %v5180
        %v5183 = vadd.f32 %v4685, %v5179
        %v5184 = vadd.f32 %v4690, %v5180
        %v5185 = vadd.f32 %v4766, %v5179
        %v5186 = vadd.f32 %v4771, %v5180
        %v5187 = vadd.f32 %v4847, %v5179
        %v5188 = vadd.f32 %v4852, %v5180
        %v5189 = vadd.f32 %v4928, %v5179
        %v5190 = vadd.f32 %v4933, %v5180
        %v5191 = vadd.f32 %v5009, %v5179
        %v5192 = vadd.f32 %v5014, %v5180
        %v5193 = vadd.f32 %v5090, %v5179
        %v5194 = vadd.f32 %v5095, %v5180
        %v5195 = vadd.f32 %v5171, %v5179
        %v5196 = vadd.f32 %v5176, %v5180
        %v5197 = vmax.f32 %v5181, 0.0
        %v5198 = vmax.f32 %v5182, 0.0
        %v5199 = vmax.f32 %v5183, 0.0
        %v5200 = vmax.f32 %v5184, 0.0
        %v5201 = vmax.f32 %v5185, 0.0
        %v5202 = vmax.f32 %v5186, 0.0
        %v5203 = vmax.f32 %v5187, 0.0
        %v5204 = vmax.f32 %v5188, 0.0
        %v5205 = vmax.f32 %v5189, 0.0
        %v5206 = vmax.f32 %v5190, 0.0
        %v5207 = vmax.f32 %v5191, 0.0
        %v5208 = vmax.f32 %v5192, 0.0
        %v5209 = vmax.f32 %v5193, 0.0
        %v5210 = vmax.f32 %v5194, 0.0
        %v5211 = vmax.f32 %v5195, 0.0
        %v5212 = vmax.f32 %v5196, 0.0
        %vm5213 = vcmask 195584
        %5214 = vst.msk [vmem:[%s341] sm:$0xff] %vm5213, %v5197
        %5215 = vst.msk [vmem:[%s341 + $0x8] sm:$0xff] %vm5213, %v5198
        %5216 = vst.msk [vmem:[%s341 + $0x10] sm:$0xff] %vm5213, %v5199
        %5217 = vst.msk [vmem:[%s341 + $0x18] sm:$0xff] %vm5213, %v5200
        %5218 = vst.msk [vmem:[%s341 + $0x20] sm:$0xff] %vm5213, %v5201
        %5219 = vst.msk [vmem:[%s341 + $0x28] sm:$0xff] %vm5213, %v5202
        %5220 = vst.msk [vmem:[%s341 + $0x30] sm:$0xff] %vm5213, %v5203
        %5221 = vst.msk [vmem:[%s341 + $0x38] sm:$0xff] %vm5213, %v5204
        %5222 = vst.msk [vmem:[%s341 + $0x40] sm:$0xff] %vm5213, %v5205
        %5223 = vst.msk [vmem:[%s341 + $0x48] sm:$0xff] %vm5213, %v5206
        %5224 = vst.msk [vmem:[%s341 + $0x50] sm:$0xff] %vm5213, %v5207
        %5225 = vst.msk [vmem:[%s341 + $0x58] sm:$0xff] %vm5213, %v5208
        %5226 = vst.msk [vmem:[%s341 + $0x60] sm:$0xff] %vm5213, %v5209
        %5227 = vst.msk [vmem:[%s341 + $0x68] sm:$0xff] %vm5213, %v5210
        %5228 = vst.msk [vmem:[%s341 + $0x70] sm:$0xff] %vm5213, %v5211
        %5229 = vst.msk [vmem:[%s341 + $0x78] sm:$0xff] %vm5213, %v5212
        %s5230 = sand.u32 %s177, 1
        %s5231 = scalar_lea.sflag [#allocation4], %s5230
        %s5232 = sand.u32 %s177, 1
        %s5233 = smul.addr %s5232, 128
        %s5234 = scalar_lea.vmem [#allocation7], %s5233
        // Predicated region
        $region49: #{tpu_custom_call.1} parent=39 // pred_check
          %p5235 = pneg %p187
        $region50: #{tpu_custom_call.1} parent=39 // pred_check_branch
          %5237 = sbr.rel (%p5235) target = $region52
        $region51: #{tpu_custom_call.1} parent=39 // pred_region
          %s5238 = smul.u32 8, %s27
          %s5239 = smul.u32 2, %s28
          %s5241 = ssub.s32 2048, 2048
          %5242 = vsyncadd %s5231, %s5241
          %s5243 = smul.addr %s5238, 2
          %s5244 = sadd.s32 %s5239, %s5243
          %s5245 = smul.addr %s5244, 128
          %s5246 = scalar_lea.hbm %s5, %s5245
          %s5247 = sshll.u32 %s5234, 4
          %s5248 = int_to_ptr.vmem [resolvable:$true] %s5247
          %5253 = dma.vmem_to_hbm [thread:$0]  %s5248, 2048, %s5246, %s5231, 128, 128, 8
        $region52: #{tpu_custom_call.1} parent=39 // pred_fallthru
          _
      $region40: #{tpu_custom_call.1} parent=5 // pred_fallthru
        _
      %p5254 = scmp.le.s32.totalorder 2, %s18
      // Predicated region
      $region53: #{tpu_custom_call.1} parent=5 // pred_check
        %p5255 = pneg %p5254
      $region54: #{tpu_custom_call.1} parent=5 // pred_check_branch
        %5257 = sbr.rel (%p5255) target = $region56
      $region55: #{tpu_custom_call.1} parent=5 // pred_region
        %s5258 = ssub.s32 %s18, 2
        // Predicated region
        $region57: #{tpu_custom_call.1} parent=55 // pred_check
          %p5259 = pneg %p193
        $region58: #{tpu_custom_call.1} parent=55 // pred_check_branch
          %5261 = sbr.rel (%p5259) target = $region60
        $region59: #{tpu_custom_call.1} parent=55 // pred_region
          %s5262 = sand.u32 %s178, 1
          %s5263 = scalar_lea.sflag [#allocation4], %s5262
          %s5264 = sand.u32 %s178, 1
          %s5265 = smul.addr %s5264, 128
          %s5266 = scalar_lea.vmem [#allocation7], %s5265
          %5267 = dma.done %s5263, 2048
        $region60: #{tpu_custom_call.1} parent=55 // pred_fallthru
          _
      $region56: #{tpu_custom_call.1} parent=5 // pred_fallthru
        _
    $region6: #{tpu_custom_call.1} parent=1 // loop_footer
      %s22 = sadd.s32 1, %s18
    $region7: #{tpu_custom_call.1} parent=1 // loop_footer_branch
      %17 = sbr.rel target = $region3
    $region8: #{tpu_custom_call.1} parent=1 // loop_exit
      _
    %5268 = vsyncpa [#allocation3], 1
    %s5269 = scalar_lea.sflag [#allocation3], 1
    %5270 = vsyncpa %s5269, 1
    %5271 = vsyncpa [#allocation6], 1
    %5272 = vsyncpa [#allocation4], 1
    %s5273 = scalar_lea.sflag [#allocation4], 1
    %5274 = vsyncpa %s5273, 1

</llo_original>
